<compile_context>
chip_gen: v7x
topology: tpu7x:2x2x1
jax: 0.10.0
libtpu: 0.0.40
codegen_flags: <defaults>
</compile_context>

<pallas_src>
import math

import jax
import jax.numpy as jnp
import numpy as np
from jax import lax
from jax.experimental import pallas as pl
from jax.experimental.pallas import tpu as pltpu

EPS = 1e-5


# --------------------------- in-kernel helpers ----------------------------
def _gn_relu(xflat, gamma, beta, group_mat, inv_count, eps):
    """GroupNorm + ReLU on a flat (H*W, C) single-sample activation (f32).

    group_mat is the (C, C) same-group indicator; two-pass variance.
    """
    s = jnp.sum(xflat, axis=0, keepdims=True)                              # (1, C)
    mean = jnp.dot(s, group_mat, preferred_element_type=jnp.float32) * inv_count
    d = xflat - mean                                                        # (HW, C)
    ss = jnp.sum(d * d, axis=0, keepdims=True)                              # (1, C)
    var = jnp.dot(ss, group_mat, preferred_element_type=jnp.float32) * inv_count
    y = d * lax.rsqrt(var + eps) * gamma + beta
    return jnp.maximum(y, 0.0)


def _conv3x3_matmul(hflat, pad_ref, w_ref, H, W, Cin):
    """3x3 / stride-1 / pad-1 conv as a single K-folded MXU matmul.

    hflat:   (H*W, Cin) f32 activation (one sample)
    pad_ref: (H+2, W+2, Cin) f32 VMEM scratch (zero-padded copy)
    w_ref:   (9*Cin, Cout) bf16 weights, tap-major (kh, kw, cin) order
    returns: (H*W, Cout) f32
    """
    HW = H * W
    pad_ref[...] = jnp.zeros(pad_ref.shape, pad_ref.dtype)
    pad_ref[1:1 + H, 1:1 + W, :] = hflat.reshape(H, W, Cin)
    taps = []
    for kh in range(3):
        for kw in range(3):
            taps.append(pad_ref[kh:kh + H, kw:kw + W, :].reshape(HW, Cin))
    patches = jnp.concatenate(taps, axis=1).astype(jnp.bfloat16)            # (HW, 9*Cin)
    return jnp.dot(patches, w_ref[...], preferred_element_type=jnp.float32)


def make_resblock_kernel(H, W, Cin, Cout, G1, G2, eps):
    HW = H * W
    inv_cnt1 = 1.0 / float((Cin // G1) * HW)
    inv_cnt2 = 1.0 / float((Cout // G2) * HW)

    def kernel(x_ref, g1_ref, b1_ref, a1_ref, w1_ref,
               g2_ref, b2_ref, a2_ref, w2_ref,
               o_ref, pad1_ref, pad2_ref):
        # One batch sample per grid step; everything below stays in VMEM.
        xflat = x_ref[...].reshape(HW, Cin)                                 # (HW, Cin) f32

        h1 = _gn_relu(xflat, g1_ref[...], b1_ref[...], a1_ref[...], inv_cnt1, eps)
        c1 = _conv3x3_matmul(h1, pad1_ref, w1_ref, H, W, Cin)               # (HW, Cout)
        h2 = _gn_relu(c1, g2_ref[...], b2_ref[...], a2_ref[...], inv_cnt2, eps)
        c2 = _conv3x3_matmul(h2, pad2_ref, w2_ref, H, W, Cout)              # (HW, Cout)

        # downsample is None -> identity residual (requires Cin == Cout).
        o_ref[...] = (c2 + xflat).reshape(1, H, W, Cout)

    return kernel


# ------------------------------- wrapper ----------------------------------
def _group_indicator(C, G):
    gsize = C // G
    ch = jnp.arange(C) // gsize
    return (ch[:, None] == ch[None, :]).astype(jnp.float32)                 # (C, C)


def resblock_forward(x_nchw, params, eps=EPS):
    """ResBlock forward (stride=1, downsample=None). x_nchw: (N, C, H, W)."""
    x = jnp.transpose(x_nchw, (0, 2, 3, 1)).astype(jnp.float32)             # NHWC
    N, H, W, Cin = x.shape
    Cout = params['w1'].shape[-1]
    assert Cin == Cout, "identity residual requires inplanes == planes"
    G1 = min(32, Cin)
    G2 = min(32, Cout)

    A1 = _group_indicator(Cin, G1)
    A2 = _group_indicator(Cout, G2)
    w1 = params['w1'].reshape(9 * Cin, Cout).astype(jnp.bfloat16)           # (kh,kw,ci) major
    w2 = params['w2'].reshape(9 * Cout, Cout).astype(jnp.bfloat16)
    g1 = params['g1'].reshape(1, Cin).astype(jnp.float32)
    b1 = params['be1'].reshape(1, Cin).astype(jnp.float32)
    g2 = params['g2'].reshape(1, Cout).astype(jnp.float32)
    b2 = params['be2'].reshape(1, Cout).astype(jnp.float32)

    kernel = make_resblock_kernel(H, W, Cin, Cout, G1, G2, eps)

    out = pl.pallas_call(
        kernel,
        out_shape=jax.ShapeDtypeStruct((N, H, W, Cout), jnp.float32),
        grid=(N,),
        in_specs=[
            pl.BlockSpec((1, H, W, Cin), lambda n: (n, 0, 0, 0)),           # x (per sample)
            pl.BlockSpec((1, Cin), lambda n: (0, 0)),                       # gamma1
            pl.BlockSpec((1, Cin), lambda n: (0, 0)),                       # beta1
            pl.BlockSpec((Cin, Cin), lambda n: (0, 0)),                     # group indicator 1
            pl.BlockSpec((9 * Cin, Cout), lambda n: (0, 0)),                # conv1 weight (bf16)
            pl.BlockSpec((1, Cout), lambda n: (0, 0)),                      # gamma2
            pl.BlockSpec((1, Cout), lambda n: (0, 0)),                      # beta2
            pl.BlockSpec((Cout, Cout), lambda n: (0, 0)),                   # group indicator 2
            pl.BlockSpec((9 * Cout, Cout), lambda n: (0, 0)),               # conv2 weight (bf16)
        ],
        out_specs=pl.BlockSpec((1, H, W, Cout), lambda n: (n, 0, 0, 0)),
        scratch_shapes=[
            pltpu.VMEM((H + 2, W + 2, Cin), jnp.float32),                   # conv1 padded input
            pltpu.VMEM((H + 2, W + 2, Cout), jnp.float32),                  # conv2 padded input
        ],
        compiler_params=pltpu.CompilerParams(
            dimension_semantics=("parallel",)),
    )(x, g1, b1, A1, w1, g2, b2, A2, w2)

    return jnp.transpose(out, (0, 3, 1, 2))                                 # back to NCHW


# --------------------------- parameter helpers -----------------------------
def init_params(key, inplanes=64, planes=64):
    ks = jax.random.split(key, 6)
    s1 = 1.0 / math.sqrt(9 * inplanes)
    s2 = 1.0 / math.sqrt(9 * planes)

    def nrm(k, shape, s):
        return jax.random.normal(k, shape, jnp.float32) * s

    return {
        'g1': 1.0 + nrm(ks[0], (inplanes,), 0.1),
        'be1': nrm(ks[1], (inplanes,), 0.1),
        'w1': nrm(ks[2], (3, 3, inplanes, planes), s1),   # HWIO, bias=False
        'g2': 1.0 + nrm(ks[3], (planes,), 0.1),
        'be2': nrm(ks[4], (planes,), 0.1),
        'w2': nrm(ks[5], (3, 3, planes, planes), s2),     # HWIO, bias=False
    }


# --------------------------- pure-JAX reference ----------------------------
def _ref_forward(x_nchw, params, eps=EPS):
    x = jnp.transpose(x_nchw, (0, 2, 3, 1)).astype(jnp.float32)
    N, H, W, _ = x.shape

    def gn(y, gamma, beta):
        C = y.shape[-1]
        G = min(32, C)
        yg = y.reshape(N, H, W, G, C // G)
        m = yg.mean(axis=(1, 2, 4), keepdims=True)
        v = ((yg - m) ** 2).mean(axis=(1, 2, 4), keepdims=True)
        out = ((yg - m) / jnp.sqrt(v + eps)).reshape(N, H, W, C)
        return out * gamma.reshape(1, 1, 1, C) + beta.reshape(1, 1, 1, C)

    def conv(y, w):
        return lax.conv_general_dilated(
            y, w, (1, 1), [(1, 1), (1, 1)],
            dimension_numbers=('NHWC', 'HWIO', 'NHWC'))

    residual = x
    out = jnp.maximum(gn(x, params['g1'], params['be1']), 0.0)
    out = conv(out, params['w1'])
    out = jnp.maximum(gn(out, params['g2'], params['be2']), 0.0)
    out = conv(out, params['w2'])
    out = out + residual
    return jnp.transpose(out, (0, 3, 1, 2))


if __name__ == "__main__":
    key = jax.random.PRNGKey(0)
    kx, kp = jax.random.split(key)

    # PyTorch-style NCHW input: batch=2, inplanes=planes=64, spatial=16.
    x = jax.random.normal(kx, (2, 64, 16, 16), jnp.float32)
    params = init_params(kp, inplanes=64, planes=64)

    out = jax.jit(resblock_forward)(x, params)
    out = jax.block_until_ready(out)

    ref = jax.block_until_ready(_ref_forward(x, params))
    assert out.shape == x.shape, out.shape
    if not np.allclose(np.asarray(out), np.asarray(ref), rtol=2e-2, atol=2e-2):
        err = float(np.max(np.abs(np.asarray(out) - np.asarray(ref))))
        raise AssertionError(f"Pallas output does not match reference (max abs err={err})")
    print("KERNEL_OK")
</pallas_src>

<mosaic_0001>
module attributes {stable_mosaic.version = 11 : i64} {
  func.func @kernel(%arg0: i32, %arg1: memref<1x16x16x64xf32, #tpu.memory_space<vmem>>, %arg2: memref<1x64xf32, #tpu.memory_space<vmem>>, %arg3: memref<1x64xf32, #tpu.memory_space<vmem>>, %arg4: memref<64x64xf32, #tpu.memory_space<vmem>>, %arg5: memref<576x64xbf16, #tpu.memory_space<vmem>>, %arg6: memref<1x64xf32, #tpu.memory_space<vmem>>, %arg7: memref<1x64xf32, #tpu.memory_space<vmem>>, %arg8: memref<64x64xf32, #tpu.memory_space<vmem>>, %arg9: memref<576x64xbf16, #tpu.memory_space<vmem>>, %arg10: memref<1x16x16x64xf32, #tpu.memory_space<vmem>>, %arg11: memref<18x18x64xf32, #tpu.memory_space<vmem>>, %arg12: memref<18x18x64xf32, #tpu.memory_space<vmem>>) attributes {dimension_semantics = [#tpu.dimension_semantics<parallel>], iteration_bounds = array<i64: 2>, scalar_prefetch = 0 : i64, scratch_operands = 2 : i64, tpu.core_type = #tpu.core_type<tc>, window_params = [{transform_indices = @transform_0, window_bounds = array<i64: 1, 16, 16, 64>}, {pipeline_mode = #tpu.pipeline_mode<synchronous>, transform_indices = @transform_1, window_bounds = array<i64: 1, 64>}, {pipeline_mode = #tpu.pipeline_mode<synchronous>, transform_indices = @transform_2, window_bounds = array<i64: 1, 64>}, {pipeline_mode = #tpu.pipeline_mode<synchronous>, transform_indices = @transform_3, window_bounds = array<i64: 64, 64>}, {pipeline_mode = #tpu.pipeline_mode<synchronous>, transform_indices = @transform_4, window_bounds = array<i64: 576, 64>}, {pipeline_mode = #tpu.pipeline_mode<synchronous>, transform_indices = @transform_5, window_bounds = array<i64: 1, 64>}, {pipeline_mode = #tpu.pipeline_mode<synchronous>, transform_indices = @transform_6, window_bounds = array<i64: 1, 64>}, {pipeline_mode = #tpu.pipeline_mode<synchronous>, transform_indices = @transform_7, window_bounds = array<i64: 64, 64>}, {pipeline_mode = #tpu.pipeline_mode<synchronous>, transform_indices = @transform_8, window_bounds = array<i64: 576, 64>}, {transform_indices = @transform_9, window_bounds = array<i64: 1, 16, 16, 64>}]} {
    %c0 = arith.constant 0 : index
    %c0_0 = arith.constant 0 : index
    %c0_1 = arith.constant 0 : index
    %c0_2 = arith.constant 0 : index
    %0 = vector.load %arg1[%c0, %c0_0, %c0_1, %c0_2] : memref<1x16x16x64xf32, #tpu.memory_space<vmem>>, vector<1x16x16x64xf32>
    %1 = vector.shape_cast %0 : vector<1x16x16x64xf32> to vector<256x64xf32>
    %c0_3 = arith.constant 0 : index
    %c0_4 = arith.constant 0 : index
    %2 = vector.load %arg2[%c0_3, %c0_4] : memref<1x64xf32, #tpu.memory_space<vmem>>, vector<1x64xf32>
    %c0_5 = arith.constant 0 : index
    %c0_6 = arith.constant 0 : index
    %3 = vector.load %arg3[%c0_5, %c0_6] : memref<1x64xf32, #tpu.memory_space<vmem>>, vector<1x64xf32>
    %c0_7 = arith.constant 0 : index
    %c0_8 = arith.constant 0 : index
    %4 = vector.load %arg4[%c0_7, %c0_8] : memref<64x64xf32, #tpu.memory_space<vmem>>, vector<64x64xf32>
    %cst = arith.constant dense<0.000000e+00> : vector<64xf32>
    %5 = vector.multi_reduction <add>, %1, %cst [0] : vector<256x64xf32> to vector<64xf32>
    %6 = vector.shape_cast %5 : vector<64xf32> to vector<1x64xf32>
    %cst_9 = arith.constant dense<0.000000e+00> : vector<1x64xf32>
    %7 = tpu.matmul %6, %4, %cst_9 {dimension_numbers = #tpu.dot_dimension_numbers<[1], [0], [0], [1], [0, 0, 1, 1], [], []>} : vector<1x64xf32>, vector<64x64xf32>, vector<1x64xf32> -> vector<1x64xf32>
    %cst_10 = arith.constant 0.001953125 : f32
    %8 = vector.broadcast %cst_10 : f32 to vector<1x64xf32>
    %9 = arith.mulf %7, %8 : vector<1x64xf32>
    %10 = vector.broadcast %9 : vector<1x64xf32> to vector<256x64xf32>
    %11 = arith.subf %1, %10 : vector<256x64xf32>
    %12 = arith.mulf %11, %11 : vector<256x64xf32>
    %cst_11 = arith.constant dense<0.000000e+00> : vector<64xf32>
    %13 = vector.multi_reduction <add>, %12, %cst_11 [0] : vector<256x64xf32> to vector<64xf32>
    %14 = vector.shape_cast %13 : vector<64xf32> to vector<1x64xf32>
    %cst_12 = arith.constant dense<0.000000e+00> : vector<1x64xf32>
    %15 = tpu.matmul %14, %4, %cst_12 {dimension_numbers = #tpu.dot_dimension_numbers<[1], [0], [0], [1], [0, 0, 1, 1], [], []>} : vector<1x64xf32>, vector<64x64xf32>, vector<1x64xf32> -> vector<1x64xf32>
    %cst_13 = arith.constant 0.001953125 : f32
    %16 = vector.broadcast %cst_13 : f32 to vector<1x64xf32>
    %17 = arith.mulf %15, %16 : vector<1x64xf32>
    %cst_14 = arith.constant 9.99999974E-6 : f32
    %18 = vector.broadcast %cst_14 : f32 to vector<1x64xf32>
    %19 = arith.addf %17, %18 : vector<1x64xf32>
    %20 = math.rsqrt %19 : vector<1x64xf32>
    %21 = vector.broadcast %20 : vector<1x64xf32> to vector<256x64xf32>
    %22 = arith.mulf %11, %21 : vector<256x64xf32>
    %23 = vector.broadcast %2 : vector<1x64xf32> to vector<256x64xf32>
    %24 = arith.mulf %22, %23 : vector<256x64xf32>
    %25 = vector.broadcast %3 : vector<1x64xf32> to vector<256x64xf32>
    %26 = arith.addf %24, %25 : vector<256x64xf32>
    %cst_15 = arith.constant 0.000000e+00 : f32
    %27 = vector.broadcast %cst_15 : f32 to vector<256x64xf32>
    %28 = arith.maximumf %26, %27 : vector<256x64xf32>
    %cst_16 = arith.constant 0.000000e+00 : f32
    %29 = vector.broadcast %cst_16 : f32 to vector<18x18x64xf32>
    %c0_17 = arith.constant 0 : index
    %c0_18 = arith.constant 0 : index
    %c0_19 = arith.constant 0 : index
    %30 = vector.load %arg11[%c0_17, %c0_18, %c0_19] : memref<18x18x64xf32, #tpu.memory_space<vmem>>, vector<18x18x64xf32>
    tpu.vector_store %arg11[%c0_17, %c0_18, %c0_19], %29 {strides = array<i32>} : memref<18x18x64xf32, #tpu.memory_space<vmem>>, vector<18x18x64xf32>,
    %31 = vector.shape_cast %28 : vector<256x64xf32> to vector<16x16x64xf32>
    %c1 = arith.constant 1 : index
    %c1_20 = arith.constant 1 : index
    %c0_21 = arith.constant 0 : index
    %32 = vector.load %arg11[%c1, %c1_20, %c0_21] : memref<18x18x64xf32, #tpu.memory_space<vmem>>, vector<16x16x64xf32>
    tpu.vector_store %arg11[%c1, %c1_20, %c0_21], %31 {strides = array<i32>} : memref<18x18x64xf32, #tpu.memory_space<vmem>>, vector<16x16x64xf32>,
    %c0_22 = arith.constant 0 : index
    %c0_23 = arith.constant 0 : index
    %c0_24 = arith.constant 0 : index
    %33 = vector.load %arg11[%c0_22, %c0_23, %c0_24] : memref<18x18x64xf32, #tpu.memory_space<vmem>>, vector<16x16x64xf32>
    %34 = vector.shape_cast %33 : vector<16x16x64xf32> to vector<256x64xf32>
    %c0_25 = arith.constant 0 : index
    %c1_26 = arith.constant 1 : index
    %c0_27 = arith.constant 0 : index
    %35 = vector.load %arg11[%c0_25, %c1_26, %c0_27] : memref<18x18x64xf32, #tpu.memory_space<vmem>>, vector<16x16x64xf32>
    %36 = vector.shape_cast %35 : vector<16x16x64xf32> to vector<256x64xf32>
    %c0_28 = arith.constant 0 : index
    %c2 = arith.constant 2 : index
    %c0_29 = arith.constant 0 : index
    %37 = vector.load %arg11[%c0_28, %c2, %c0_29] : memref<18x18x64xf32, #tpu.memory_space<vmem>>, vector<16x16x64xf32>
    %38 = vector.shape_cast %37 : vector<16x16x64xf32> to vector<256x64xf32>
    %c1_30 = arith.constant 1 : index
    %c0_31 = arith.constant 0 : index
    %c0_32 = arith.constant 0 : index
    %39 = vector.load %arg11[%c1_30, %c0_31, %c0_32] : memref<18x18x64xf32, #tpu.memory_space<vmem>>, vector<16x16x64xf32>
    %40 = vector.shape_cast %39 : vector<16x16x64xf32> to vector<256x64xf32>
    %c1_33 = arith.constant 1 : index
    %c1_34 = arith.constant 1 : index
    %c0_35 = arith.constant 0 : index
    %41 = vector.load %arg11[%c1_33, %c1_34, %c0_35] : memref<18x18x64xf32, #tpu.memory_space<vmem>>, vector<16x16x64xf32>
    %42 = vector.shape_cast %41 : vector<16x16x64xf32> to vector<256x64xf32>
    %c1_36 = arith.constant 1 : index
    %c2_37 = arith.constant 2 : index
    %c0_38 = arith.constant 0 : index
    %43 = vector.load %arg11[%c1_36, %c2_37, %c0_38] : memref<18x18x64xf32, #tpu.memory_space<vmem>>, vector<16x16x64xf32>
    %44 = vector.shape_cast %43 : vector<16x16x64xf32> to vector<256x64xf32>
    %c2_39 = arith.constant 2 : index
    %c0_40 = arith.constant 0 : index
    %c0_41 = arith.constant 0 : index
    %45 = vector.load %arg11[%c2_39, %c0_40, %c0_41] : memref<18x18x64xf32, #tpu.memory_space<vmem>>, vector<16x16x64xf32>
    %46 = vector.shape_cast %45 : vector<16x16x64xf32> to vector<256x64xf32>
    %c2_42 = arith.constant 2 : index
    %c1_43 = arith.constant 1 : index
    %c0_44 = arith.constant 0 : index
    %47 = vector.load %arg11[%c2_42, %c1_43, %c0_44] : memref<18x18x64xf32, #tpu.memory_space<vmem>>, vector<16x16x64xf32>
    %48 = vector.shape_cast %47 : vector<16x16x64xf32> to vector<256x64xf32>
    %c2_45 = arith.constant 2 : index
    %c2_46 = arith.constant 2 : index
    %c0_47 = arith.constant 0 : index
    %49 = vector.load %arg11[%c2_45, %c2_46, %c0_47] : memref<18x18x64xf32, #tpu.memory_space<vmem>>, vector<16x16x64xf32>
    %50 = vector.shape_cast %49 : vector<16x16x64xf32> to vector<256x64xf32>
    %51 = tpu.concatenate %34, %36, %38, %40, %42, %44, %46, %48, %50 in 1 : vector<256x64xf32>, vector<256x64xf32>, vector<256x64xf32>, vector<256x64xf32>, vector<256x64xf32>, vector<256x64xf32>, vector<256x64xf32>, vector<256x64xf32>, vector<256x64xf32> -> vector<256x576xf32>
    %52 = arith.truncf %51 : vector<256x576xf32> to vector<256x576xbf16>
    %c0_48 = arith.constant 0 : index
    %c0_49 = arith.constant 0 : index
    %53 = vector.load %arg5[%c0_48, %c0_49] : memref<576x64xbf16, #tpu.memory_space<vmem>>, vector<576x64xbf16>
    %cst_50 = arith.constant dense<0.000000e+00> : vector<256x64xf32>
    %54 = tpu.matmul %52, %53, %cst_50 {dimension_numbers = #tpu.dot_dimension_numbers<[1], [0], [0], [1], [0, 0, 1, 1], [], []>} : vector<256x576xbf16>, vector<576x64xbf16>, vector<256x64xf32> -> vector<256x64xf32>
    %c0_51 = arith.constant 0 : index
    %c0_52 = arith.constant 0 : index
    %55 = vector.load %arg6[%c0_51, %c0_52] : memref<1x64xf32, #tpu.memory_space<vmem>>, vector<1x64xf32>
    %c0_53 = arith.constant 0 : index
    %c0_54 = arith.constant 0 : index
    %56 = vector.load %arg7[%c0_53, %c0_54] : memref<1x64xf32, #tpu.memory_space<vmem>>, vector<1x64xf32>
    %c0_55 = arith.constant 0 : index
    %c0_56 = arith.constant 0 : index
    %57 = vector.load %arg8[%c0_55, %c0_56] : memref<64x64xf32, #tpu.memory_space<vmem>>, vector<64x64xf32>
    %cst_57 = arith.constant dense<0.000000e+00> : vector<64xf32>
    %58 = vector.multi_reduction <add>, %54, %cst_57 [0] : vector<256x64xf32> to vector<64xf32>
    %59 = vector.shape_cast %58 : vector<64xf32> to vector<1x64xf32>
    %cst_58 = arith.constant dense<0.000000e+00> : vector<1x64xf32>
    %60 = tpu.matmul %59, %57, %cst_58 {dimension_numbers = #tpu.dot_dimension_numbers<[1], [0], [0], [1], [0, 0, 1, 1], [], []>} : vector<1x64xf32>, vector<64x64xf32>, vector<1x64xf32> -> vector<1x64xf32>
    %cst_59 = arith.constant 0.001953125 : f32
    %61 = vector.broadcast %cst_59 : f32 to vector<1x64xf32>
    %62 = arith.mulf %60, %61 : vector<1x64xf32>
    %63 = vector.broadcast %62 : vector<1x64xf32> to vector<256x64xf32>
    %64 = arith.subf %54, %63 : vector<256x64xf32>
    %65 = arith.mulf %64, %64 : vector<256x64xf32>
    %cst_60 = arith.constant dense<0.000000e+00> : vector<64xf32>
    %66 = vector.multi_reduction <add>, %65, %cst_60 [0] : vector<256x64xf32> to vector<64xf32>
    %67 = vector.shape_cast %66 : vector<64xf32> to vector<1x64xf32>
    %cst_61 = arith.constant dense<0.000000e+00> : vector<1x64xf32>
    %68 = tpu.matmul %67, %57, %cst_61 {dimension_numbers = #tpu.dot_dimension_numbers<[1], [0], [0], [1], [0, 0, 1, 1], [], []>} : vector<1x64xf32>, vector<64x64xf32>, vector<1x64xf32> -> vector<1x64xf32>
    %cst_62 = arith.constant 0.001953125 : f32
    %69 = vector.broadcast %cst_62 : f32 to vector<1x64xf32>
    %70 = arith.mulf %68, %69 : vector<1x64xf32>
    %cst_63 = arith.constant 9.99999974E-6 : f32
    %71 = vector.broadcast %cst_63 : f32 to vector<1x64xf32>
    %72 = arith.addf %70, %71 : vector<1x64xf32>
    %73 = math.rsqrt %72 : vector<1x64xf32>
    %74 = vector.broadcast %73 : vector<1x64xf32> to vector<256x64xf32>
    %75 = arith.mulf %64, %74 : vector<256x64xf32>
    %76 = vector.broadcast %55 : vector<1x64xf32> to vector<256x64xf32>
    %77 = arith.mulf %75, %76 : vector<256x64xf32>
    %78 = vector.broadcast %56 : vector<1x64xf32> to vector<256x64xf32>
    %79 = arith.addf %77, %78 : vector<256x64xf32>
    %cst_64 = arith.constant 0.000000e+00 : f32
    %80 = vector.broadcast %cst_64 : f32 to vector<256x64xf32>
    %81 = arith.maximumf %79, %80 : vector<256x64xf32>
    %cst_65 = arith.constant 0.000000e+00 : f32
    %82 = vector.broadcast %cst_65 : f32 to vector<18x18x64xf32>
    %c0_66 = arith.constant 0 : index
    %c0_67 = arith.constant 0 : index
    %c0_68 = arith.constant 0 : index
    %83 = vector.load %arg12[%c0_66, %c0_67, %c0_68] : memref<18x18x64xf32, #tpu.memory_space<vmem>>, vector<18x18x64xf32>
    tpu.vector_store %arg12[%c0_66, %c0_67, %c0_68], %82 {strides = array<i32>} : memref<18x18x64xf32, #tpu.memory_space<vmem>>, vector<18x18x64xf32>,
    %84 = vector.shape_cast %81 : vector<256x64xf32> to vector<16x16x64xf32>
    %c1_69 = arith.constant 1 : index
    %c1_70 = arith.constant 1 : index
    %c0_71 = arith.constant 0 : index
    %85 = vector.load %arg12[%c1_69, %c1_70, %c0_71] : memref<18x18x64xf32, #tpu.memory_space<vmem>>, vector<16x16x64xf32>
    tpu.vector_store %arg12[%c1_69, %c1_70, %c0_71], %84 {strides = array<i32>} : memref<18x18x64xf32, #tpu.memory_space<vmem>>, vector<16x16x64xf32>,
    %c0_72 = arith.constant 0 : index
    %c0_73 = arith.constant 0 : index
    %c0_74 = arith.constant 0 : index
    %86 = vector.load %arg12[%c0_72, %c0_73, %c0_74] : memref<18x18x64xf32, #tpu.memory_space<vmem>>, vector<16x16x64xf32>
    %87 = vector.shape_cast %86 : vector<16x16x64xf32> to vector<256x64xf32>
    %c0_75 = arith.constant 0 : index
    %c1_76 = arith.constant 1 : index
    %c0_77 = arith.constant 0 : index
    %88 = vector.load %arg12[%c0_75, %c1_76, %c0_77] : memref<18x18x64xf32, #tpu.memory_space<vmem>>, vector<16x16x64xf32>
    %89 = vector.shape_cast %88 : vector<16x16x64xf32> to vector<256x64xf32>
    %c0_78 = arith.constant 0 : index
    %c2_79 = arith.constant 2 : index
    %c0_80 = arith.constant 0 : index
    %90 = vector.load %arg12[%c0_78, %c2_79, %c0_80] : memref<18x18x64xf32, #tpu.memory_space<vmem>>, vector<16x16x64xf32>
    %91 = vector.shape_cast %90 : vector<16x16x64xf32> to vector<256x64xf32>
    %c1_81 = arith.constant 1 : index
    %c0_82 = arith.constant 0 : index
    %c0_83 = arith.constant 0 : index
    %92 = vector.load %arg12[%c1_81, %c0_82, %c0_83] : memref<18x18x64xf32, #tpu.memory_space<vmem>>, vector<16x16x64xf32>
    %93 = vector.shape_cast %92 : vector<16x16x64xf32> to vector<256x64xf32>
    %c1_84 = arith.constant 1 : index
    %c1_85 = arith.constant 1 : index
    %c0_86 = arith.constant 0 : index
    %94 = vector.load %arg12[%c1_84, %c1_85, %c0_86] : memref<18x18x64xf32, #tpu.memory_space<vmem>>, vector<16x16x64xf32>
    %95 = vector.shape_cast %94 : vector<16x16x64xf32> to vector<256x64xf32>
    %c1_87 = arith.constant 1 : index
    %c2_88 = arith.constant 2 : index
    %c0_89 = arith.constant 0 : index
    %96 = vector.load %arg12[%c1_87, %c2_88, %c0_89] : memref<18x18x64xf32, #tpu.memory_space<vmem>>, vector<16x16x64xf32>
    %97 = vector.shape_cast %96 : vector<16x16x64xf32> to vector<256x64xf32>
    %c2_90 = arith.constant 2 : index
    %c0_91 = arith.constant 0 : index
    %c0_92 = arith.constant 0 : index
    %98 = vector.load %arg12[%c2_90, %c0_91, %c0_92] : memref<18x18x64xf32, #tpu.memory_space<vmem>>, vector<16x16x64xf32>
    %99 = vector.shape_cast %98 : vector<16x16x64xf32> to vector<256x64xf32>
    %c2_93 = arith.constant 2 : index
    %c1_94 = arith.constant 1 : index
    %c0_95 = arith.constant 0 : index
    %100 = vector.load %arg12[%c2_93, %c1_94, %c0_95] : memref<18x18x64xf32, #tpu.memory_space<vmem>>, vector<16x16x64xf32>
    %101 = vector.shape_cast %100 : vector<16x16x64xf32> to vector<256x64xf32>
    %c2_96 = arith.constant 2 : index
    %c2_97 = arith.constant 2 : index
    %c0_98 = arith.constant 0 : index
    %102 = vector.load %arg12[%c2_96, %c2_97, %c0_98] : memref<18x18x64xf32, #tpu.memory_space<vmem>>, vector<16x16x64xf32>
    %103 = vector.shape_cast %102 : vector<16x16x64xf32> to vector<256x64xf32>
    %104 = tpu.concatenate %87, %89, %91, %93, %95, %97, %99, %101, %103 in 1 : vector<256x64xf32>, vector<256x64xf32>, vector<256x64xf32>, vector<256x64xf32>, vector<256x64xf32>, vector<256x64xf32>, vector<256x64xf32>, vector<256x64xf32>, vector<256x64xf32> -> vector<256x576xf32>
    %105 = arith.truncf %104 : vector<256x576xf32> to vector<256x576xbf16>
    %c0_99 = arith.constant 0 : index
    %c0_100 = arith.constant 0 : index
    %106 = vector.load %arg9[%c0_99, %c0_100] : memref<576x64xbf16, #tpu.memory_space<vmem>>, vector<576x64xbf16>
    %cst_101 = arith.constant dense<0.000000e+00> : vector<256x64xf32>
    %107 = tpu.matmul %105, %106, %cst_101 {dimension_numbers = #tpu.dot_dimension_numbers<[1], [0], [0], [1], [0, 0, 1, 1], [], []>} : vector<256x576xbf16>, vector<576x64xbf16>, vector<256x64xf32> -> vector<256x64xf32>
    %108 = arith.addf %107, %1 : vector<256x64xf32>
    %109 = vector.shape_cast %108 : vector<256x64xf32> to vector<1x16x16x64xf32>
    %c0_102 = arith.constant 0 : index
    %c0_103 = arith.constant 0 : index
    %c0_104 = arith.constant 0 : index
    %c0_105 = arith.constant 0 : index
    %110 = vector.load %arg10[%c0_102, %c0_103, %c0_104, %c0_105] : memref<1x16x16x64xf32, #tpu.memory_space<vmem>>, vector<1x16x16x64xf32>
    tpu.vector_store %arg10[%c0_102, %c0_103, %c0_104, %c0_105], %109 {strides = array<i32>} : memref<1x16x16x64xf32, #tpu.memory_space<vmem>>, vector<1x16x16x64xf32>,
    return
  }
  func.func @transform_0(%arg0: i32) -> (i32, i32, i32, i32) {
    %c0_i32 = arith.constant 0 : i32
    %c0_i32_0 = arith.constant 0 : i32
    %c0_i32_1 = arith.constant 0 : i32
    %c0_i32_2 = arith.constant 0 : i32
    return %arg0, %c0_i32, %c0_i32_0, %c0_i32_1 : i32, i32, i32, i32
  }
  func.func @transform_1(%arg0: i32) -> (i32, i32) {
    %c0_i32 = arith.constant 0 : i32
    %c0_i32_0 = arith.constant 0 : i32
    %c0_i32_1 = arith.constant 0 : i32
    return %c0_i32, %c0_i32_0 : i32, i32
  }
  func.func @transform_2(%arg0: i32) -> (i32, i32) {
    %c0_i32 = arith.constant 0 : i32
    %c0_i32_0 = arith.constant 0 : i32
    %c0_i32_1 = arith.constant 0 : i32
    return %c0_i32, %c0_i32_0 : i32, i32
  }
  func.func @transform_3(%arg0: i32) -> (i32, i32) {
    %c0_i32 = arith.constant 0 : i32
    %c0_i32_0 = arith.constant 0 : i32
    %c0_i32_1 = arith.constant 0 : i32
    return %c0_i32, %c0_i32_0 : i32, i32
  }
  func.func @transform_4(%arg0: i32) -> (i32, i32) {
    %c0_i32 = arith.constant 0 : i32
    %c0_i32_0 = arith.constant 0 : i32
    %c0_i32_1 = arith.constant 0 : i32
    return %c0_i32, %c0_i32_0 : i32, i32
  }
  func.func @transform_5(%arg0: i32) -> (i32, i32) {
    %c0_i32 = arith.constant 0 : i32
    %c0_i32_0 = arith.constant 0 : i32
    %c0_i32_1 = arith.constant 0 : i32
    return %c0_i32, %c0_i32_0 : i32, i32
  }
  func.func @transform_6(%arg0: i32) -> (i32, i32) {
    %c0_i32 = arith.constant 0 : i32
    %c0_i32_0 = arith.constant 0 : i32
    %c0_i32_1 = arith.constant 0 : i32
    return %c0_i32, %c0_i32_0 : i32, i32
  }
  func.func @transform_7(%arg0: i32) -> (i32, i32) {
    %c0_i32 = arith.constant 0 : i32
    %c0_i32_0 = arith.constant 0 : i32
    %c0_i32_1 = arith.constant 0 : i32
    return %c0_i32, %c0_i32_0 : i32, i32
  }
  func.func @transform_8(%arg0: i32) -> (i32, i32) {
    %c0_i32 = arith.constant 0 : i32
    %c0_i32_0 = arith.constant 0 : i32
    %c0_i32_1 = arith.constant 0 : i32
    return %c0_i32, %c0_i32_0 : i32, i32
  }
  func.func @transform_9(%arg0: i32) -> (i32, i32, i32, i32) {
    %c0_i32 = arith.constant 0 : i32
    %c0_i32_0 = arith.constant 0 : i32
    %c0_i32_1 = arith.constant 0 : i32
    %c0_i32_2 = arith.constant 0 : i32
    return %arg0, %c0_i32, %c0_i32_0, %c0_i32_1 : i32, i32, i32, i32
  }
}

</mosaic_0001>

<llo_original>
// kernel: resblock_forward.1
$region0: #{resblock_forward.1}
  #allocation0 [shape = 'u32[]', space=smem, size = 0x4, offset = 0x4, fixed_abs, tag = 'smem constant byte address 0x4 - core index']
  #allocation1 [shape = 'u32[144,128]{1,0:T(1,128)}', space=vmem, size = 0x12000, scoped, tag = 'internal scratch']
  #allocation2 [shape = 'f32[18,18,64]{2,1,0:T(8,128)}', space=vmem, size = 0x36000, scoped, tag = 'scratch operand']
  #allocation3 [shape = 'f32[18,18,64]{2,1,0:T(8,128)}', space=vmem, size = 0x36000, scoped, tag = 'scratch operand']
  %s0 = inlined_call_operand.vmem [shape: f32[2,16,16,64], index: 0, kind: input, shape index: {}]
  %s1 = inlined_call_operand.vmem [shape: f32[1,64], index: 1, kind: input, shape index: {}]
  %s2 = inlined_call_operand.vmem [shape: f32[1,64], index: 2, kind: input, shape index: {}]
  %s3 = inlined_call_operand.vmem [shape: f32[64,64], index: 3, kind: input, shape index: {}, may-alias: {3,7}]
  %s4 = inlined_call_operand.vmem [shape: bf16[576,64], index: 4, kind: input, shape index: {}]
  %s5 = inlined_call_operand.vmem [shape: f32[1,64], index: 5, kind: input, shape index: {}]
  %s6 = inlined_call_operand.vmem [shape: f32[1,64], index: 6, kind: input, shape index: {}]
  %s7 = inlined_call_operand.vmem [shape: f32[64,64], index: 7, kind: input, shape index: {}, may-alias: {3,7}]
  %s8 = inlined_call_operand.vmem [shape: bf16[576,64], index: 8, kind: input, shape index: {}]
  %s9 = inlined_call_operand.hbm [shape: f32[2,16,16,64], index: 9, kind: output, shape index: {}]
  %s10 = sld [smem:[#allocation0]]
  $region69: #{resblock_forward.1} parent=0
    _
  %s12 = ssub.s32 1, %s10
  %s13 = scalar_select 0, %s12, %s10
  $region1: #{resblock_forward.1} parent=0
    #allocation4 [shape = 'u8[262144]{0}', space=vmem, size = 0x40000, scoped, tag = 'output window, operand 0']
    #allocation5 [shape = 's32[2]{0}', space=sflag, size = 0x8, scoped, tag = 'scoped memory for resblock_forward.1']
    %14 = vsyncpa [#allocation5], 0
    %s15 = scalar_lea.sflag [#allocation5], 1
    %16 = vsyncpa %s15, 0
    loop: start=0, step=1, limit=4
    $region2: #{resblock_forward.1} parent=1 // loop_pre_header
      _
    $region3: #{resblock_forward.1} parent=1 // loop_header
      %s18 = sphi 0, %s22
      %p19 = scmp.ge.s32.totalorder %s18, 4
      %s28 = sphi 0, %s30
      %s31 = sphi 0, %s28
      %s32 = sphi 0, %s31
      %s48 = sphi 0, %s32
      %s52 = sphi 0, %s52
      %s54 = sphi 0, %s52
      %s55 = sphi 0, %s54
      %s69 = sphi 0, %s55
      %s73 = sphi 0, %s73
      %s75 = sphi 0, %s73
      %s76 = sphi 0, %s75
      %s90 = sphi 0, %s76
      %s94 = sphi 0, %s94
      %s96 = sphi 0, %s94
      %s97 = sphi 0, %s96
      %s111 = sphi 0, %s97
      %s115 = sphi 0, %s115
      %s117 = sphi 0, %s115
      %s118 = sphi 0, %s117
      %s132 = sphi 0, %s118
      %s136 = sphi 0, %s136
      %s138 = sphi 0, %s136
      %s139 = sphi 0, %s138
      %s153 = sphi 0, %s139
      %s157 = sphi 0, %s157
      %s159 = sphi 0, %s157
      %s160 = sphi 0, %s159
      %s174 = sphi 0, %s160
      %s178 = sphi 0, %s178
      %s180 = sphi 0, %s178
      %s181 = sphi 0, %s180
      %s195 = sphi 0, %s181
      %s199 = sphi 0, %s199
      %s201 = sphi 0, %s199
      %s202 = sphi 0, %s201
      %s216 = sphi 0, %s202
      %s222 = sphi 0, %s224
      %s225 = sphi 0, %s222
      %s226 = sphi 0, %s225
      %s242 = sphi 0, %s226
    $region4: #{resblock_forward.1} parent=1 // loop_header_branch
      %21 = sbr.rel (%p19) target = $region8
    $region5: #{resblock_forward.1} parent=1 // loop_body
      %s23 = ssub.s32 %s18, 1
      %s24 = ssub.s32 %s18, 2
      %s25 = sadd.s32 %s18, 1
      %s26 = ssub.s32 %s18, %s25
      %p27 = scmp.eq.s32.totalorder %s26, 0
      %s29 = sadd.s32 %s28, 1
      %s30 = scalar_select %p27, %s28, %s29
      %p33 = pneg %p27
      %p34 = scmp.eq.s32.totalorder %s18, 1
      %p35 = por %p33, %p34
      %p36 = scmp.ne.s32.totalorder %s28, %s31
      %p37 = scmp.eq.s32.totalorder %s18, 0
      %p38 = por %p36, %p37
      %p39 = scmp.ne.s32.totalorder %s28, %s31
      %p40 = scmp.eq.s32.totalorder %s23, 1
      %p41 = por %p39, %p40
      %p42 = scmp.ne.s32.totalorder %s31, %s32
      %p43 = scmp.eq.s32.totalorder %s23, 0
      %p44 = por %p42, %p43
      %p45 = scmp.ne.s32.totalorder %s31, %s32
      %p46 = scmp.eq.s32.totalorder %s24, 1
      %p47 = por %p45, %p46
      %p49 = scmp.ne.s32.totalorder %s32, %s48
      %p50 = scmp.eq.s32.totalorder %s24, 0
      %p51 = por %p49, %p50
      %s53 = sadd.s32 %s52, 1
      %p56 = scmp.eq.s32.totalorder %s18, 1
      %p57 = scmp.ne.s32.totalorder %s52, %s54
      %p58 = scmp.eq.s32.totalorder %s18, 0
      %p59 = por %p57, %p58
      %p60 = scmp.ne.s32.totalorder %s52, %s54
      %p61 = scmp.eq.s32.totalorder %s23, 1
      %p62 = por %p60, %p61
      %p63 = scmp.ne.s32.totalorder %s54, %s55
      %p64 = scmp.eq.s32.totalorder %s23, 0
      %p65 = por %p63, %p64
      %p66 = scmp.ne.s32.totalorder %s54, %s55
      %p67 = scmp.eq.s32.totalorder %s24, 1
      %p68 = por %p66, %p67
      %p70 = scmp.ne.s32.totalorder %s55, %s69
      %p71 = scmp.eq.s32.totalorder %s24, 0
      %p72 = por %p70, %p71
      %s74 = sadd.s32 %s73, 1
      %p77 = scmp.eq.s32.totalorder %s18, 1
      %p78 = scmp.ne.s32.totalorder %s73, %s75
      %p79 = scmp.eq.s32.totalorder %s18, 0
      %p80 = por %p78, %p79
      %p81 = scmp.ne.s32.totalorder %s73, %s75
      %p82 = scmp.eq.s32.totalorder %s23, 1
      %p83 = por %p81, %p82
      %p84 = scmp.ne.s32.totalorder %s75, %s76
      %p85 = scmp.eq.s32.totalorder %s23, 0
      %p86 = por %p84, %p85
      %p87 = scmp.ne.s32.totalorder %s75, %s76
      %p88 = scmp.eq.s32.totalorder %s24, 1
      %p89 = por %p87, %p88
      %p91 = scmp.ne.s32.totalorder %s76, %s90
      %p92 = scmp.eq.s32.totalorder %s24, 0
      %p93 = por %p91, %p92
      %s95 = sadd.s32 %s94, 1
      %p98 = scmp.eq.s32.totalorder %s18, 1
      %p99 = scmp.ne.s32.totalorder %s94, %s96
      %p100 = scmp.eq.s32.totalorder %s18, 0
      %p101 = por %p99, %p100
      %p102 = scmp.ne.s32.totalorder %s94, %s96
      %p103 = scmp.eq.s32.totalorder %s23, 1
      %p104 = por %p102, %p103
      %p105 = scmp.ne.s32.totalorder %s96, %s97
      %p106 = scmp.eq.s32.totalorder %s23, 0
      %p107 = por %p105, %p106
      %p108 = scmp.ne.s32.totalorder %s96, %s97
      %p109 = scmp.eq.s32.totalorder %s24, 1
      %p110 = por %p108, %p109
      %p112 = scmp.ne.s32.totalorder %s97, %s111
      %p113 = scmp.eq.s32.totalorder %s24, 0
      %p114 = por %p112, %p113
      %s116 = sadd.s32 %s115, 1
      %p119 = scmp.eq.s32.totalorder %s18, 1
      %p120 = scmp.ne.s32.totalorder %s115, %s117
      %p121 = scmp.eq.s32.totalorder %s18, 0
      %p122 = por %p120, %p121
      %p123 = scmp.ne.s32.totalorder %s115, %s117
      %p124 = scmp.eq.s32.totalorder %s23, 1
      %p125 = por %p123, %p124
      %p126 = scmp.ne.s32.totalorder %s117, %s118
      %p127 = scmp.eq.s32.totalorder %s23, 0
      %p128 = por %p126, %p127
      %p129 = scmp.ne.s32.totalorder %s117, %s118
      %p130 = scmp.eq.s32.totalorder %s24, 1
      %p131 = por %p129, %p130
      %p133 = scmp.ne.s32.totalorder %s118, %s132
      %p134 = scmp.eq.s32.totalorder %s24, 0
      %p135 = por %p133, %p134
      %s137 = sadd.s32 %s136, 1
      %p140 = scmp.eq.s32.totalorder %s18, 1
      %p141 = scmp.ne.s32.totalorder %s136, %s138
      %p142 = scmp.eq.s32.totalorder %s18, 0
      %p143 = por %p141, %p142
      %p144 = scmp.ne.s32.totalorder %s136, %s138
      %p145 = scmp.eq.s32.totalorder %s23, 1
      %p146 = por %p144, %p145
      %p147 = scmp.ne.s32.totalorder %s138, %s139
      %p148 = scmp.eq.s32.totalorder %s23, 0
      %p149 = por %p147, %p148
      %p150 = scmp.ne.s32.totalorder %s138, %s139
      %p151 = scmp.eq.s32.totalorder %s24, 1
      %p152 = por %p150, %p151
      %p154 = scmp.ne.s32.totalorder %s139, %s153
      %p155 = scmp.eq.s32.totalorder %s24, 0
      %p156 = por %p154, %p155
      %s158 = sadd.s32 %s157, 1
      %p161 = scmp.eq.s32.totalorder %s18, 1
      %p162 = scmp.ne.s32.totalorder %s157, %s159
      %p163 = scmp.eq.s32.totalorder %s18, 0
      %p164 = por %p162, %p163
      %p165 = scmp.ne.s32.totalorder %s157, %s159
      %p166 = scmp.eq.s32.totalorder %s23, 1
      %p167 = por %p165, %p166
      %p168 = scmp.ne.s32.totalorder %s159, %s160
      %p169 = scmp.eq.s32.totalorder %s23, 0
      %p170 = por %p168, %p169
      %p171 = scmp.ne.s32.totalorder %s159, %s160
      %p172 = scmp.eq.s32.totalorder %s24, 1
      %p173 = por %p171, %p172
      %p175 = scmp.ne.s32.totalorder %s160, %s174
      %p176 = scmp.eq.s32.totalorder %s24, 0
      %p177 = por %p175, %p176
      %s179 = sadd.s32 %s178, 1
      %p182 = scmp.eq.s32.totalorder %s18, 1
      %p183 = scmp.ne.s32.totalorder %s178, %s180
      %p184 = scmp.eq.s32.totalorder %s18, 0
      %p185 = por %p183, %p184
      %p186 = scmp.ne.s32.totalorder %s178, %s180
      %p187 = scmp.eq.s32.totalorder %s23, 1
      %p188 = por %p186, %p187
      %p189 = scmp.ne.s32.totalorder %s180, %s181
      %p190 = scmp.eq.s32.totalorder %s23, 0
      %p191 = por %p189, %p190
      %p192 = scmp.ne.s32.totalorder %s180, %s181
      %p193 = scmp.eq.s32.totalorder %s24, 1
      %p194 = por %p192, %p193
      %p196 = scmp.ne.s32.totalorder %s181, %s195
      %p197 = scmp.eq.s32.totalorder %s24, 0
      %p198 = por %p196, %p197
      %s200 = sadd.s32 %s199, 1
      %p203 = scmp.eq.s32.totalorder %s18, 1
      %p204 = scmp.ne.s32.totalorder %s199, %s201
      %p205 = scmp.eq.s32.totalorder %s18, 0
      %p206 = por %p204, %p205
      %p207 = scmp.ne.s32.totalorder %s199, %s201
      %p208 = scmp.eq.s32.totalorder %s23, 1
      %p209 = por %p207, %p208
      %p210 = scmp.ne.s32.totalorder %s201, %s202
      %p211 = scmp.eq.s32.totalorder %s23, 0
      %p212 = por %p210, %p211
      %p213 = scmp.ne.s32.totalorder %s201, %s202
      %p214 = scmp.eq.s32.totalorder %s24, 1
      %p215 = por %p213, %p214
      %p217 = scmp.ne.s32.totalorder %s202, %s216
      %p218 = scmp.eq.s32.totalorder %s24, 0
      %p219 = por %p217, %p218
      %s220 = ssub.s32 %s18, %s25
      %p221 = scmp.eq.s32.totalorder %s220, 0
      %s223 = sadd.s32 %s222, 1
      %s224 = scalar_select %p221, %s222, %s223
      %p227 = pneg %p221
      %p228 = scmp.eq.s32.totalorder %s18, 1
      %p229 = por %p227, %p228
      %p230 = scmp.ne.s32.totalorder %s222, %s225
      %p231 = scmp.eq.s32.totalorder %s18, 0
      %p232 = por %p230, %p231
      %p233 = scmp.ne.s32.totalorder %s222, %s225
      %p234 = scmp.eq.s32.totalorder %s23, 1
      %p235 = por %p233, %p234
      %p236 = scmp.ne.s32.totalorder %s225, %s226
      %p237 = scmp.eq.s32.totalorder %s23, 0
      %p238 = por %p236, %p237
      %p239 = scmp.ne.s32.totalorder %s225, %s226
      %p240 = scmp.eq.s32.totalorder %s24, 1
      %p241 = por %p239, %p240
      %p243 = scmp.ne.s32.totalorder %s226, %s242
      %p244 = scmp.eq.s32.totalorder %s24, 0
      %p245 = por %p243, %p244
      %p246 = scmp.le.s32.totalorder 1, %s18
      %p247 = scmp.lt.s32.totalorder %s18, 3
      %p248 = pnand %p246, %p247
      %p249 = pneg %p248
      // Predicated region
      $region9: #{resblock_forward.1} parent=5 // pred_check
        _
      $region10: #{resblock_forward.1} parent=5 // pred_check_branch
        %251 = sbr.rel (%p248) target = $region12
      $region11: #{resblock_forward.1} parent=5 // pred_region
        %s252 = ssub.s32 %s18, 1
        // Predicated region
        $region13: #{resblock_forward.1} parent=11 // pred_check
          %p253 = pneg %p65
        $region14: #{resblock_forward.1} parent=11 // pred_check_branch
          %255 = sbr.rel (%p253) target = $region16
        $region15: #{resblock_forward.1} parent=11 // pred_region
          _
        $region16: #{resblock_forward.1} parent=11 // pred_fallthru
          _
        // Predicated region
        $region17: #{resblock_forward.1} parent=11 // pred_check
          %p256 = pneg %p86
        $region18: #{resblock_forward.1} parent=11 // pred_check_branch
          %258 = sbr.rel (%p256) target = $region20
        $region19: #{resblock_forward.1} parent=11 // pred_region
          _
        $region20: #{resblock_forward.1} parent=11 // pred_fallthru
          _
        // Predicated region
        $region21: #{resblock_forward.1} parent=11 // pred_check
          %p259 = pneg %p107
        $region22: #{resblock_forward.1} parent=11 // pred_check_branch
          %261 = sbr.rel (%p259) target = $region24
        $region23: #{resblock_forward.1} parent=11 // pred_region
          _
        $region24: #{resblock_forward.1} parent=11 // pred_fallthru
          _
        // Predicated region
        $region25: #{resblock_forward.1} parent=11 // pred_check
          %p262 = pneg %p128
        $region26: #{resblock_forward.1} parent=11 // pred_check_branch
          %264 = sbr.rel (%p262) target = $region28
        $region27: #{resblock_forward.1} parent=11 // pred_region
          _
        $region28: #{resblock_forward.1} parent=11 // pred_fallthru
          _
        // Predicated region
        $region29: #{resblock_forward.1} parent=11 // pred_check
          %p265 = pneg %p149
        $region30: #{resblock_forward.1} parent=11 // pred_check_branch
          %267 = sbr.rel (%p265) target = $region32
        $region31: #{resblock_forward.1} parent=11 // pred_region
          _
        $region32: #{resblock_forward.1} parent=11 // pred_fallthru
          _
        // Predicated region
        $region33: #{resblock_forward.1} parent=11 // pred_check
          %p268 = pneg %p170
        $region34: #{resblock_forward.1} parent=11 // pred_check_branch
          %270 = sbr.rel (%p268) target = $region36
        $region35: #{resblock_forward.1} parent=11 // pred_region
          _
        $region36: #{resblock_forward.1} parent=11 // pred_fallthru
          _
        // Predicated region
        $region37: #{resblock_forward.1} parent=11 // pred_check
          %p271 = pneg %p191
        $region38: #{resblock_forward.1} parent=11 // pred_check_branch
          %273 = sbr.rel (%p271) target = $region40
        $region39: #{resblock_forward.1} parent=11 // pred_region
          _
        $region40: #{resblock_forward.1} parent=11 // pred_fallthru
          _
        // Predicated region
        $region41: #{resblock_forward.1} parent=11 // pred_check
          %p274 = pneg %p212
        $region42: #{resblock_forward.1} parent=11 // pred_check_branch
          %276 = sbr.rel (%p274) target = $region44
        $region43: #{resblock_forward.1} parent=11 // pred_region
          _
        $region44: #{resblock_forward.1} parent=11 // pred_fallthru
          _
      $region12: #{resblock_forward.1} parent=5 // pred_fallthru
        _
      %p277 = scmp.lt.s32.totalorder %s18, 2
      // Predicated region
      $region45: #{resblock_forward.1} parent=5 // pred_check
        %p278 = pneg %p277
      $region46: #{resblock_forward.1} parent=5 // pred_check_branch
        %280 = sbr.rel (%p278) target = $region48
      $region47: #{resblock_forward.1} parent=5 // pred_region
        // Predicated region
        $region49: #{resblock_forward.1} parent=47 // pred_check
          %p281 = pneg %p38
        $region50: #{resblock_forward.1} parent=47 // pred_check_branch
          %283 = sbr.rel (%p281) target = $region52
        $region51: #{resblock_forward.1} parent=47 // pred_region
          %p284 = scmp.lt.s32.totalorder %s18, 1
          %s285 = scalar_select %p284, %s18, 1
          %s286 = smul.addr %s285, 32
          %s287 = smul.addr %s286, 8
          %s288 = scalar_lea.vmem %s0, %s287
        $region52: #{resblock_forward.1} parent=47 // pred_fallthru
          _
      $region48: #{resblock_forward.1} parent=5 // pred_fallthru
        _
      %p289 = scmp.le.s32.totalorder 1, %s18
      %p290 = scmp.lt.s32.totalorder %s18, 3
      %p291 = pnand %p289, %p290
      %p292 = pneg %p291
      // Predicated region
      $region53: #{resblock_forward.1} parent=5 // pred_check
        _
      $region54: #{resblock_forward.1} parent=5 // pred_check_branch
        %294 = sbr.rel (%p291) target = $region56
      $region55: #{resblock_forward.1} parent=5 // pred_region
        %s295 = ssub.s32 %s18, 1
        %p296 = scmp.lt.s32.totalorder %s23, 1
        %s297 = scalar_select %p296, %s23, 1
        %s298 = smul.addr %s297, 32
        %s299 = smul.addr %s298, 8
        %s300 = scalar_lea.vmem %s0, %s299
        %p301 = pneg %p44
        %p302 = pneg %p41
        %p303 = pneg %p65
        %p304 = pneg %p62
        %p305 = pneg %p86
        %p306 = pneg %p83
        %p307 = pneg %p107
        %p308 = pneg %p104
        %p309 = pneg %p128
        %p310 = pneg %p125
        %p311 = pneg %p149
        %p312 = pneg %p146
        %p313 = pneg %p170
        %p314 = pneg %p167
        %p315 = pneg %p191
        %p316 = pneg %p188
        %p317 = pneg %p212
        %p318 = pneg %p209
        %p319 = pneg %p238
        %p320 = pneg %p235
        %s321 = sand.u32 %s225, 1
        %s322 = scalar_lea.sflag [#allocation5], %s321
        %s323 = sand.u32 %s225, 1
        %s324 = smul.addr %s323, 256
        %s325 = scalar_lea.vmem [#allocation4], %s324
        %p326 = scmp.lt.s32.totalorder %s23, 1
        %s327 = scalar_select %p326, %s23, 1
        %s328 = smul.addr %s327, 32
        %s329 = smul.addr %s328, 8
        %s330 = scalar_lea.vmem %s0, %s329
        %v332 = vld [vmem:[%s330] sm:$0xff]
        %v333 = vld [vmem:[%s330 + $0x8] sm:$0xff]
        %v334 = vld [vmem:[%s330 + $0x10] sm:$0xff]
        %v335 = vld [vmem:[%s330 + $0x18] sm:$0xff]
        %v336 = vld [vmem:[%s330 + $0x20] sm:$0xff]
        %v337 = vld [vmem:[%s330 + $0x28] sm:$0xff]
        %v338 = vld [vmem:[%s330 + $0x30] sm:$0xff]
        %v339 = vld [vmem:[%s330 + $0x38] sm:$0xff]
        %v340 = vld [vmem:[%s330 + $0x40] sm:$0xff]
        %v341 = vld [vmem:[%s330 + $0x48] sm:$0xff]
        %v342 = vld [vmem:[%s330 + $0x50] sm:$0xff]
        %v343 = vld [vmem:[%s330 + $0x58] sm:$0xff]
        %v344 = vld [vmem:[%s330 + $0x60] sm:$0xff]
        %v345 = vld [vmem:[%s330 + $0x68] sm:$0xff]
        %v346 = vld [vmem:[%s330 + $0x70] sm:$0xff]
        %v347 = vld [vmem:[%s330 + $0x78] sm:$0xff]
        %v348 = vld [vmem:[%s330 + $0x80] sm:$0xff]
        %v349 = vld [vmem:[%s330 + $0x88] sm:$0xff]
        %v350 = vld [vmem:[%s330 + $0x90] sm:$0xff]
        %v351 = vld [vmem:[%s330 + $0x98] sm:$0xff]
        %v352 = vld [vmem:[%s330 + $0xa0] sm:$0xff]
        %v353 = vld [vmem:[%s330 + $0xa8] sm:$0xff]
        %v354 = vld [vmem:[%s330 + $0xb0] sm:$0xff]
        %v355 = vld [vmem:[%s330 + $0xb8] sm:$0xff]
        %v356 = vld [vmem:[%s330 + $0xc0] sm:$0xff]
        %v357 = vld [vmem:[%s330 + $0xc8] sm:$0xff]
        %v358 = vld [vmem:[%s330 + $0xd0] sm:$0xff]
        %v359 = vld [vmem:[%s330 + $0xd8] sm:$0xff]
        %v360 = vld [vmem:[%s330 + $0xe0] sm:$0xff]
        %v361 = vld [vmem:[%s330 + $0xe8] sm:$0xff]
        %v362 = vld [vmem:[%s330 + $0xf0] sm:$0xff]
        %v363 = vld [vmem:[%s330 + $0xf8] sm:$0xff]
        %v364 = vld [vmem:[%s1] sm:$0x1]
        %v365 = vld [vmem:[%s2] sm:$0x1]
        %v366 = vld [vmem:[%s3] sm:$0xff]
        %v367 = vld [vmem:[%s3 + $0x8] sm:$0xff]
        %v368 = vld [vmem:[%s3 + $0x10] sm:$0xff]
        %v369 = vld [vmem:[%s3 + $0x18] sm:$0xff]
        %v370 = vld [vmem:[%s3 + $0x20] sm:$0xff]
        %v371 = vld [vmem:[%s3 + $0x28] sm:$0xff]
        %v372 = vld [vmem:[%s3 + $0x30] sm:$0xff]
        %v373 = vld [vmem:[%s3 + $0x38] sm:$0xff]
        %vm374 = vcmask 523264
        %v375 = vsel %vm374, %v332, 0.0
        %v376 = vsel %vm374, %v333, 0.0
        %v377 = vadd.f32 %v375, %v376
        %v378 = vsel %vm374, %v334, 0.0
        %v379 = vadd.f32 %v377, %v378
        %v380 = vsel %vm374, %v335, 0.0
        %v381 = vadd.f32 %v379, %v380
        %v382 = vsel %vm374, %v336, 0.0
        %v383 = vadd.f32 %v381, %v382
        %v384 = vsel %vm374, %v337, 0.0
        %v385 = vadd.f32 %v383, %v384
        %v386 = vsel %vm374, %v338, 0.0
        %v387 = vadd.f32 %v385, %v386
        %v388 = vsel %vm374, %v339, 0.0
        %v389 = vadd.f32 %v387, %v388
        %v390 = vsel %vm374, %v340, 0.0
        %v391 = vadd.f32 %v389, %v390
        %v392 = vsel %vm374, %v341, 0.0
        %v393 = vadd.f32 %v391, %v392
        %v394 = vsel %vm374, %v342, 0.0
        %v395 = vadd.f32 %v393, %v394
        %v396 = vsel %vm374, %v343, 0.0
        %v397 = vadd.f32 %v395, %v396
        %v398 = vsel %vm374, %v344, 0.0
        %v399 = vadd.f32 %v397, %v398
        %v400 = vsel %vm374, %v345, 0.0
        %v401 = vadd.f32 %v399, %v400
        %v402 = vsel %vm374, %v346, 0.0
        %v403 = vadd.f32 %v401, %v402
        %v404 = vsel %vm374, %v347, 0.0
        %v405 = vadd.f32 %v403, %v404
        %v406 = vsel %vm374, %v348, 0.0
        %v407 = vadd.f32 %v405, %v406
        %v408 = vsel %vm374, %v349, 0.0
        %v409 = vadd.f32 %v407, %v408
        %v410 = vsel %vm374, %v350, 0.0
        %v411 = vadd.f32 %v409, %v410
        %v412 = vsel %vm374, %v351, 0.0
        %v413 = vadd.f32 %v411, %v412
        %v414 = vsel %vm374, %v352, 0.0
        %v415 = vadd.f32 %v413, %v414
        %v416 = vsel %vm374, %v353, 0.0
        %v417 = vadd.f32 %v415, %v416
        %v418 = vsel %vm374, %v354, 0.0
        %v419 = vadd.f32 %v417, %v418
        %v420 = vsel %vm374, %v355, 0.0
        %v421 = vadd.f32 %v419, %v420
        %v422 = vsel %vm374, %v356, 0.0
        %v423 = vadd.f32 %v421, %v422
        %v424 = vsel %vm374, %v357, 0.0
        %v425 = vadd.f32 %v423, %v424
        %v426 = vsel %vm374, %v358, 0.0
        %v427 = vadd.f32 %v425, %v426
        %v428 = vsel %vm374, %v359, 0.0
        %v429 = vadd.f32 %v427, %v428
        %v430 = vsel %vm374, %v360, 0.0
        %v431 = vadd.f32 %v429, %v430
        %v432 = vsel %vm374, %v361, 0.0
        %v433 = vadd.f32 %v431, %v432
        %v434 = vsel %vm374, %v362, 0.0
        %v435 = vadd.f32 %v433, %v434
        %v436 = vsel %vm374, %v363, 0.0
        %v437 = vadd.f32 %v435, %v436
        %v438 = vrot.slane %v437, 4
        %v439 = vadd.f32 %v437, %v438
        %v440 = vrot.slane %v439, 2
        %v441 = vadd.f32 %v439, %v440
        %v442 = vrot.slane %v441, 1
        %v443 = vadd.f32 %v441, %v442
        %v445 = vsel %vm374, %v443, 0
        %447 = vmatprep.subr.mxu0 0.0
        %448 = vmatpush1.msra.mxu0 %v366
        %449 = vmatprep.subr.mxu0 0.0
        %450 = vmatpush1.msra.mxu0 %v367
        %451 = vmatprep.subr.mxu0 0.0
        %452 = vmatpush1.msra.mxu0 %v368
        %453 = vmatprep.subr.mxu0 0.0
        %454 = vmatpush1.msra.mxu0 %v369
        %455 = vmatprep.subr.mxu0 0.0
        %456 = vmatpush1.msra.mxu0 %v370
        %457 = vmatprep.subr.mxu0 0.0
        %458 = vmatpush1.msra.mxu0 %v371
        %459 = vmatprep.subr.mxu0 0.0
        %460 = vmatpush1.msra.mxu0 %v372
        %461 = vmatprep.subr.mxu0 0.0
        %462 = vmatpush1.msra.mxu0 %v373
        %463 = vmatprep.subr.mxu0 0.0
        %464 = vmatpush1.msra.mxu0 0.0
        %465 = vmatprep.subr.mxu0 0.0
        %466 = vmatpush1.msra.mxu0 0.0
        %467 = vmatprep.subr.mxu0 0.0
        %468 = vmatpush1.msra.mxu0 0.0
        %469 = vmatprep.subr.mxu0 0.0
        %470 = vmatpush1.msra.mxu0 0.0
        %471 = vmatprep.subr.mxu0 0.0
        %472 = vmatpush1.msra.mxu0 0.0
        %473 = vmatprep.subr.mxu0 0.0
        %474 = vmatpush1.msra.mxu0 0.0
        %475 = vmatprep.subr.mxu0 0.0
        %476 = vmatpush1.msra.mxu0 0.0
        %477 = vmatprep.subr.mxu0 0.0
        %478 = vmatpush1.msra.mxu0 0.0
        %479 = vmatprep.subr.mxu0 0.0
        %480 = vmatpush1.msra.mxu0 0.0
        %481 = vmatprep.subr.mxu0 0.0
        %482 = vmatpush1.msra.mxu0 0.0
        %483 = vmatprep.subr.mxu0 0.0
        %484 = vmatpush1.msra.mxu0 0.0
        %485 = vmatprep.subr.mxu0 0.0
        %486 = vmatpush1.msra.mxu0 0.0
        %487 = vmatprep.subr.mxu0 0.0
        %488 = vmatpush1.msra.mxu0 0.0
        %489 = vmatprep.subr.mxu0 0.0
        %490 = vmatpush1.msra.mxu0 0.0
        %491 = vmatprep.subr.mxu0 0.0
        %492 = vmatpush1.msra.mxu0 0.0
        %493 = vmatprep.subr.mxu0 0.0
        %494 = vmatpush1.msra.mxu0 0.0
        %495 = vmatprep.subr.mxu0 0.0
        %496 = vmatpush1.msra.mxu0 0.0
        %497 = vmatprep.subr.mxu0 0.0
        %498 = vmatpush1.msra.mxu0 0.0
        %499 = vmatprep.subr.mxu0 0.0
        %500 = vmatpush1.msra.mxu0 0.0
        %501 = vmatprep.subr.mxu0 0.0
        %502 = vmatpush1.msra.mxu0 0.0
        %503 = vmatprep.subr.mxu0 0.0
        %504 = vmatpush1.msra.mxu0 0.0
        %505 = vmatprep.subr.mxu0 0.0
        %506 = vmatpush1.msra.mxu0 0.0
        %507 = vmatprep.subr.mxu0 0.0
        %508 = vmatpush1.msra.mxu0 0.0
        %509 = vmatprep.subr.mxu0 0.0
        %510 = vmatpush1.msra.mxu0 0.0
        %511 = vmatprep.mubr.f32.mxu0 0.0
        %512 = vmatmul.mubr.f32.gmra.mrb[0].mxu0 %v445
        %v513 = vpop.f32.mrb[0].mxu0
        %v514 = vadd.f32 0.0, %v513
        %v515 = vpop.f32.mrb[0].mxu0
        %516 = vdwg.mxu0
        %v517 = vmul.f32 %v514, 0.001953125
        %v518 = vlaneseq
        %v519 = vshrl.u32 %v518, 7
        %v520 = vsub.s32 0, %v519
        %v521 = vrot.slane %v517, %v520
        %v522 = vsub.f32 %v332, %v521
        %v523 = vsub.f32 %v333, %v521
        %v524 = vsub.f32 %v334, %v521
        %v525 = vsub.f32 %v335, %v521
        %v526 = vsub.f32 %v336, %v521
        %v527 = vsub.f32 %v337, %v521
        %v528 = vsub.f32 %v338, %v521
        %v529 = vsub.f32 %v339, %v521
        %v530 = vsub.f32 %v340, %v521
        %v531 = vsub.f32 %v341, %v521
        %v532 = vsub.f32 %v342, %v521
        %v533 = vsub.f32 %v343, %v521
        %v534 = vsub.f32 %v344, %v521
        %v535 = vsub.f32 %v345, %v521
        %v536 = vsub.f32 %v346, %v521
        %v537 = vsub.f32 %v347, %v521
        %v538 = vsub.f32 %v348, %v521
        %v539 = vsub.f32 %v349, %v521
        %v540 = vsub.f32 %v350, %v521
        %v541 = vsub.f32 %v351, %v521
        %v542 = vsub.f32 %v352, %v521
        %v543 = vsub.f32 %v353, %v521
        %v544 = vsub.f32 %v354, %v521
        %v545 = vsub.f32 %v355, %v521
        %v546 = vsub.f32 %v356, %v521
        %v547 = vsub.f32 %v357, %v521
        %v548 = vsub.f32 %v358, %v521
        %v549 = vsub.f32 %v359, %v521
        %v550 = vsub.f32 %v360, %v521
        %v551 = vsub.f32 %v361, %v521
        %v552 = vsub.f32 %v362, %v521
        %v553 = vsub.f32 %v363, %v521
        %v554 = vmul.f32 %v522, %v522
        %v555 = vmul.f32 %v523, %v523
        %v556 = vmul.f32 %v524, %v524
        %v557 = vmul.f32 %v525, %v525
        %v558 = vmul.f32 %v526, %v526
        %v559 = vmul.f32 %v527, %v527
        %v560 = vmul.f32 %v528, %v528
        %v561 = vmul.f32 %v529, %v529
        %v562 = vmul.f32 %v530, %v530
        %v563 = vmul.f32 %v531, %v531
        %v564 = vmul.f32 %v532, %v532
        %v565 = vmul.f32 %v533, %v533
        %v566 = vmul.f32 %v534, %v534
        %v567 = vmul.f32 %v535, %v535
        %v568 = vmul.f32 %v536, %v536
        %v569 = vmul.f32 %v537, %v537
        %v570 = vmul.f32 %v538, %v538
        %v571 = vmul.f32 %v539, %v539
        %v572 = vmul.f32 %v540, %v540
        %v573 = vmul.f32 %v541, %v541
        %v574 = vmul.f32 %v542, %v542
        %v575 = vmul.f32 %v543, %v543
        %v576 = vmul.f32 %v544, %v544
        %v577 = vmul.f32 %v545, %v545
        %v578 = vmul.f32 %v546, %v546
        %v579 = vmul.f32 %v547, %v547
        %v580 = vmul.f32 %v548, %v548
        %v581 = vmul.f32 %v549, %v549
        %v582 = vmul.f32 %v550, %v550
        %v583 = vmul.f32 %v551, %v551
        %v584 = vmul.f32 %v552, %v552
        %v585 = vmul.f32 %v553, %v553
        %v586 = vsel %vm374, %v554, 0.0
        %v587 = vsel %vm374, %v555, 0.0
        %v588 = vadd.f32 %v586, %v587
        %v589 = vsel %vm374, %v556, 0.0
        %v590 = vadd.f32 %v588, %v589
        %v591 = vsel %vm374, %v557, 0.0
        %v592 = vadd.f32 %v590, %v591
        %v593 = vsel %vm374, %v558, 0.0
        %v594 = vadd.f32 %v592, %v593
        %v595 = vsel %vm374, %v559, 0.0
        %v596 = vadd.f32 %v594, %v595
        %v597 = vsel %vm374, %v560, 0.0
        %v598 = vadd.f32 %v596, %v597
        %v599 = vsel %vm374, %v561, 0.0
        %v600 = vadd.f32 %v598, %v599
        %v601 = vsel %vm374, %v562, 0.0
        %v602 = vadd.f32 %v600, %v601
        %v603 = vsel %vm374, %v563, 0.0
        %v604 = vadd.f32 %v602, %v603
        %v605 = vsel %vm374, %v564, 0.0
        %v606 = vadd.f32 %v604, %v605
        %v607 = vsel %vm374, %v565, 0.0
        %v608 = vadd.f32 %v606, %v607
        %v609 = vsel %vm374, %v566, 0.0
        %v610 = vadd.f32 %v608, %v609
        %v611 = vsel %vm374, %v567, 0.0
        %v612 = vadd.f32 %v610, %v611
        %v613 = vsel %vm374, %v568, 0.0
        %v614 = vadd.f32 %v612, %v613
        %v615 = vsel %vm374, %v569, 0.0
        %v616 = vadd.f32 %v614, %v615
        %v617 = vsel %vm374, %v570, 0.0
        %v618 = vadd.f32 %v616, %v617
        %v619 = vsel %vm374, %v571, 0.0
        %v620 = vadd.f32 %v618, %v619
        %v621 = vsel %vm374, %v572, 0.0
        %v622 = vadd.f32 %v620, %v621
        %v623 = vsel %vm374, %v573, 0.0
        %v624 = vadd.f32 %v622, %v623
        %v625 = vsel %vm374, %v574, 0.0
        %v626 = vadd.f32 %v624, %v625
        %v627 = vsel %vm374, %v575, 0.0
        %v628 = vadd.f32 %v626, %v627
        %v629 = vsel %vm374, %v576, 0.0
        %v630 = vadd.f32 %v628, %v629
        %v631 = vsel %vm374, %v577, 0.0
        %v632 = vadd.f32 %v630, %v631
        %v633 = vsel %vm374, %v578, 0.0
        %v634 = vadd.f32 %v632, %v633
        %v635 = vsel %vm374, %v579, 0.0
        %v636 = vadd.f32 %v634, %v635
        %v637 = vsel %vm374, %v580, 0.0
        %v638 = vadd.f32 %v636, %v637
        %v639 = vsel %vm374, %v581, 0.0
        %v640 = vadd.f32 %v638, %v639
        %v641 = vsel %vm374, %v582, 0.0
        %v642 = vadd.f32 %v640, %v641
        %v643 = vsel %vm374, %v583, 0.0
        %v644 = vadd.f32 %v642, %v643
        %v645 = vsel %vm374, %v584, 0.0
        %v646 = vadd.f32 %v644, %v645
        %v647 = vsel %vm374, %v585, 0.0
        %v648 = vadd.f32 %v646, %v647
        %v649 = vrot.slane %v648, 4
        %v650 = vadd.f32 %v648, %v649
        %v651 = vrot.slane %v650, 2
        %v652 = vadd.f32 %v650, %v651
        %v653 = vrot.slane %v652, 1
        %v654 = vadd.f32 %v652, %v653
        %v656 = vsel %vm374, %v654, 0
        %658 = vmatprep.subr.mxu0 0.0
        %659 = vmatpush1.msra.mxu0 %v366
        %660 = vmatprep.subr.mxu0 0.0
        %661 = vmatpush1.msra.mxu0 %v367
        %662 = vmatprep.subr.mxu0 0.0
        %663 = vmatpush1.msra.mxu0 %v368
        %664 = vmatprep.subr.mxu0 0.0
        %665 = vmatpush1.msra.mxu0 %v369
        %666 = vmatprep.subr.mxu0 0.0
        %667 = vmatpush1.msra.mxu0 %v370
        %668 = vmatprep.subr.mxu0 0.0
        %669 = vmatpush1.msra.mxu0 %v371
        %670 = vmatprep.subr.mxu0 0.0
        %671 = vmatpush1.msra.mxu0 %v372
        %672 = vmatprep.subr.mxu0 0.0
        %673 = vmatpush1.msra.mxu0 %v373
        %674 = vmatprep.subr.mxu0 0.0
        %675 = vmatpush1.msra.mxu0 0.0
        %676 = vmatprep.subr.mxu0 0.0
        %677 = vmatpush1.msra.mxu0 0.0
        %678 = vmatprep.subr.mxu0 0.0
        %679 = vmatpush1.msra.mxu0 0.0
        %680 = vmatprep.subr.mxu0 0.0
        %681 = vmatpush1.msra.mxu0 0.0
        %682 = vmatprep.subr.mxu0 0.0
        %683 = vmatpush1.msra.mxu0 0.0
        %684 = vmatprep.subr.mxu0 0.0
        %685 = vmatpush1.msra.mxu0 0.0
        %686 = vmatprep.subr.mxu0 0.0
        %687 = vmatpush1.msra.mxu0 0.0
        %688 = vmatprep.subr.mxu0 0.0
        %689 = vmatpush1.msra.mxu0 0.0
        %690 = vmatprep.subr.mxu0 0.0
        %691 = vmatpush1.msra.mxu0 0.0
        %692 = vmatprep.subr.mxu0 0.0
        %693 = vmatpush1.msra.mxu0 0.0
        %694 = vmatprep.subr.mxu0 0.0
        %695 = vmatpush1.msra.mxu0 0.0
        %696 = vmatprep.subr.mxu0 0.0
        %697 = vmatpush1.msra.mxu0 0.0
        %698 = vmatprep.subr.mxu0 0.0
        %699 = vmatpush1.msra.mxu0 0.0
        %700 = vmatprep.subr.mxu0 0.0
        %701 = vmatpush1.msra.mxu0 0.0
        %702 = vmatprep.subr.mxu0 0.0
        %703 = vmatpush1.msra.mxu0 0.0
        %704 = vmatprep.subr.mxu0 0.0
        %705 = vmatpush1.msra.mxu0 0.0
        %706 = vmatprep.subr.mxu0 0.0
        %707 = vmatpush1.msra.mxu0 0.0
        %708 = vmatprep.subr.mxu0 0.0
        %709 = vmatpush1.msra.mxu0 0.0
        %710 = vmatprep.subr.mxu0 0.0
        %711 = vmatpush1.msra.mxu0 0.0
        %712 = vmatprep.subr.mxu0 0.0
        %713 = vmatpush1.msra.mxu0 0.0
        %714 = vmatprep.subr.mxu0 0.0
        %715 = vmatpush1.msra.mxu0 0.0
        %716 = vmatprep.subr.mxu0 0.0
        %717 = vmatpush1.msra.mxu0 0.0
        %718 = vmatprep.subr.mxu0 0.0
        %719 = vmatpush1.msra.mxu0 0.0
        %720 = vmatprep.subr.mxu0 0.0
        %721 = vmatpush1.msra.mxu0 0.0
        %722 = vmatprep.mubr.f32.mxu0 0.0
        %723 = vmatmul.mubr.f32.gmra.mrb[0].mxu0 %v656
        %v724 = vpop.f32.mrb[0].mxu0
        %v725 = vadd.f32 0.0, %v724
        %v726 = vpop.f32.mrb[0].mxu0
        %727 = vdwg.mxu0
        %v728 = vmul.f32 %v725, 0.001953125
        %v729 = vadd.f32 %v728, 1e-05
        %v730 = vrsqrt.pop %v729
        %v731 = vlaneseq
        %v732 = vshrl.u32 %v731, 7
        %v733 = vsub.s32 0, %v732
        %v734 = vrot.slane %v730, %v733
        %v735 = vmul.f32 %v522, %v734
        %v736 = vmul.f32 %v523, %v734
        %v737 = vmul.f32 %v524, %v734
        %v738 = vmul.f32 %v525, %v734
        %v739 = vmul.f32 %v526, %v734
        %v740 = vmul.f32 %v527, %v734
        %v741 = vmul.f32 %v528, %v734
        %v742 = vmul.f32 %v529, %v734
        %v743 = vmul.f32 %v530, %v734
        %v744 = vmul.f32 %v531, %v734
        %v745 = vmul.f32 %v532, %v734
        %v746 = vmul.f32 %v533, %v734
        %v747 = vmul.f32 %v534, %v734
        %v748 = vmul.f32 %v535, %v734
        %v749 = vmul.f32 %v536, %v734
        %v750 = vmul.f32 %v537, %v734
        %v751 = vmul.f32 %v538, %v734
        %v752 = vmul.f32 %v539, %v734
        %v753 = vmul.f32 %v540, %v734
        %v754 = vmul.f32 %v541, %v734
        %v755 = vmul.f32 %v542, %v734
        %v756 = vmul.f32 %v543, %v734
        %v757 = vmul.f32 %v544, %v734
        %v758 = vmul.f32 %v545, %v734
        %v759 = vmul.f32 %v546, %v734
        %v760 = vmul.f32 %v547, %v734
        %v761 = vmul.f32 %v548, %v734
        %v762 = vmul.f32 %v549, %v734
        %v763 = vmul.f32 %v550, %v734
        %v764 = vmul.f32 %v551, %v734
        %v765 = vmul.f32 %v552, %v734
        %v766 = vmul.f32 %v553, %v734
        %v768 = vlaneseq
        %v769 = vshrl.u32 %v768, 7
        %v770 = vsub.s32 0, %v769
        %v771 = vrot.slane %v364, %v770
        %v773 = vmul.f32 %v735, %v771
        %v774 = vmul.f32 %v736, %v771
        %v775 = vmul.f32 %v737, %v771
        %v776 = vmul.f32 %v738, %v771
        %v777 = vmul.f32 %v739, %v771
        %v778 = vmul.f32 %v740, %v771
        %v779 = vmul.f32 %v741, %v771
        %v780 = vmul.f32 %v742, %v771
        %v781 = vmul.f32 %v743, %v771
        %v782 = vmul.f32 %v744, %v771
        %v783 = vmul.f32 %v745, %v771
        %v784 = vmul.f32 %v746, %v771
        %v785 = vmul.f32 %v747, %v771
        %v786 = vmul.f32 %v748, %v771
        %v787 = vmul.f32 %v749, %v771
        %v788 = vmul.f32 %v750, %v771
        %v789 = vmul.f32 %v751, %v771
        %v790 = vmul.f32 %v752, %v771
        %v791 = vmul.f32 %v753, %v771
        %v792 = vmul.f32 %v754, %v771
        %v793 = vmul.f32 %v755, %v771
        %v794 = vmul.f32 %v756, %v771
        %v795 = vmul.f32 %v757, %v771
        %v796 = vmul.f32 %v758, %v771
        %v797 = vmul.f32 %v759, %v771
        %v798 = vmul.f32 %v760, %v771
        %v799 = vmul.f32 %v761, %v771
        %v800 = vmul.f32 %v762, %v771
        %v801 = vmul.f32 %v763, %v771
        %v802 = vmul.f32 %v764, %v771
        %v803 = vmul.f32 %v765, %v771
        %v804 = vmul.f32 %v766, %v771
        %v806 = vlaneseq
        %v807 = vshrl.u32 %v806, 7
        %v808 = vsub.s32 0, %v807
        %v809 = vrot.slane %v365, %v808
        %v811 = vadd.f32 %v773, %v809
        %v812 = vadd.f32 %v774, %v809
        %v813 = vadd.f32 %v775, %v809
        %v814 = vadd.f32 %v776, %v809
        %v815 = vadd.f32 %v777, %v809
        %v816 = vadd.f32 %v778, %v809
        %v817 = vadd.f32 %v779, %v809
        %v818 = vadd.f32 %v780, %v809
        %v819 = vadd.f32 %v781, %v809
        %v820 = vadd.f32 %v782, %v809
        %v821 = vadd.f32 %v783, %v809
        %v822 = vadd.f32 %v784, %v809
        %v823 = vadd.f32 %v785, %v809
        %v824 = vadd.f32 %v786, %v809
        %v825 = vadd.f32 %v787, %v809
        %v826 = vadd.f32 %v788, %v809
        %v827 = vadd.f32 %v789, %v809
        %v828 = vadd.f32 %v790, %v809
        %v829 = vadd.f32 %v791, %v809
        %v830 = vadd.f32 %v792, %v809
        %v831 = vadd.f32 %v793, %v809
        %v832 = vadd.f32 %v794, %v809
        %v833 = vadd.f32 %v795, %v809
        %v834 = vadd.f32 %v796, %v809
        %v835 = vadd.f32 %v797, %v809
        %v836 = vadd.f32 %v798, %v809
        %v837 = vadd.f32 %v799, %v809
        %v838 = vadd.f32 %v800, %v809
        %v839 = vadd.f32 %v801, %v809
        %v840 = vadd.f32 %v802, %v809
        %v841 = vadd.f32 %v803, %v809
        %v842 = vadd.f32 %v804, %v809
        %v843 = vmax.f32 %v811, 0.0
        %v844 = vmax.f32 %v812, 0.0
        %v845 = vmax.f32 %v813, 0.0
        %v846 = vmax.f32 %v814, 0.0
        %v847 = vmax.f32 %v815, 0.0
        %v848 = vmax.f32 %v816, 0.0
        %v849 = vmax.f32 %v817, 0.0
        %v850 = vmax.f32 %v818, 0.0
        %v851 = vmax.f32 %v819, 0.0
        %v852 = vmax.f32 %v820, 0.0
        %v853 = vmax.f32 %v821, 0.0
        %v854 = vmax.f32 %v822, 0.0
        %v855 = vmax.f32 %v823, 0.0
        %v856 = vmax.f32 %v824, 0.0
        %v857 = vmax.f32 %v825, 0.0
        %v858 = vmax.f32 %v826, 0.0
        %v859 = vmax.f32 %v827, 0.0
        %v860 = vmax.f32 %v828, 0.0
        %v861 = vmax.f32 %v829, 0.0
        %v862 = vmax.f32 %v830, 0.0
        %v863 = vmax.f32 %v831, 0.0
        %v864 = vmax.f32 %v832, 0.0
        %v865 = vmax.f32 %v833, 0.0
        %v866 = vmax.f32 %v834, 0.0
        %v867 = vmax.f32 %v835, 0.0
        %v868 = vmax.f32 %v836, 0.0
        %v869 = vmax.f32 %v837, 0.0
        %v870 = vmax.f32 %v838, 0.0
        %v871 = vmax.f32 %v839, 0.0
        %v872 = vmax.f32 %v840, 0.0
        %v873 = vmax.f32 %v841, 0.0
        %v874 = vmax.f32 %v842, 0.0
        %875 = vst.msk [vmem:[#allocation2] sm:$0xff] %vm374, 0.0
        %876 = vst.msk [vmem:[#allocation2 + $0x8] sm:$0xff] %vm374, 0.0
        %vm877 = vcmask 517120
        %878 = vst.msk [vmem:[#allocation2 + $0x10] sm:$0x3] %vm877, 0.0
        %879 = vst.msk [vmem:[#allocation2 + $0x18] sm:$0xff] %vm374, 0.0
        %880 = vst.msk [vmem:[#allocation2 + $0x20] sm:$0xff] %vm374, 0.0
        %881 = vst.msk [vmem:[#allocation2 + $0x28] sm:$0x3] %vm877, 0.0
        %882 = vst.msk [vmem:[#allocation2 + $0x30] sm:$0xff] %vm374, 0.0
        %883 = vst.msk [vmem:[#allocation2 + $0x38] sm:$0xff] %vm374, 0.0
        %884 = vst.msk [vmem:[#allocation2 + $0x40] sm:$0x3] %vm877, 0.0
        %885 = vst.msk [vmem:[#allocation2 + $0x48] sm:$0xff] %vm374, 0.0
        %886 = vst.msk [vmem:[#allocation2 + $0x50] sm:$0xff] %vm374, 0.0
        %887 = vst.msk [vmem:[#allocation2 + $0x58] sm:$0x3] %vm877, 0.0
        %888 = vst.msk [vmem:[#allocation2 + $0x60] sm:$0xff] %vm374, 0.0
        %889 = vst.msk [vmem:[#allocation2 + $0x68] sm:$0xff] %vm374, 0.0
        %890 = vst.msk [vmem:[#allocation2 + $0x70] sm:$0x3] %vm877, 0.0
        %891 = vst.msk [vmem:[#allocation2 + $0x78] sm:$0xff] %vm374, 0.0
        %892 = vst.msk [vmem:[#allocation2 + $0x80] sm:$0xff] %vm374, 0.0
        %893 = vst.msk [vmem:[#allocation2 + $0x88] sm:$0x3] %vm877, 0.0
        %894 = vst.msk [vmem:[#allocation2 + $0x90] sm:$0xff] %vm374, 0.0
        %895 = vst.msk [vmem:[#allocation2 + $0x98] sm:$0xff] %vm374, 0.0
        %896 = vst.msk [vmem:[#allocation2 + $0xa0] sm:$0x3] %vm877, 0.0
        %897 = vst.msk [vmem:[#allocation2 + $0xa8] sm:$0xff] %vm374, 0.0
        %898 = vst.msk [vmem:[#allocation2 + $0xb0] sm:$0xff] %vm374, 0.0
        %899 = vst.msk [vmem:[#allocation2 + $0xb8] sm:$0x3] %vm877, 0.0
        %900 = vst.msk [vmem:[#allocation2 + $0xc0] sm:$0xff] %vm374, 0.0
        %901 = vst.msk [vmem:[#allocation2 + $0xc8] sm:$0xff] %vm374, 0.0
        %902 = vst.msk [vmem:[#allocation2 + $0xd0] sm:$0x3] %vm877, 0.0
        %903 = vst.msk [vmem:[#allocation2 + $0xd8] sm:$0xff] %vm374, 0.0
        %904 = vst.msk [vmem:[#allocation2 + $0xe0] sm:$0xff] %vm374, 0.0
        %905 = vst.msk [vmem:[#allocation2 + $0xe8] sm:$0x3] %vm877, 0.0
        %906 = vst.msk [vmem:[#allocation2 + $0xf0] sm:$0xff] %vm374, 0.0
        %907 = vst.msk [vmem:[#allocation2 + $0xf8] sm:$0xff] %vm374, 0.0
        %908 = vst.msk [vmem:[#allocation2 + $0x100] sm:$0x3] %vm877, 0.0
        %909 = vst.msk [vmem:[#allocation2 + $0x108] sm:$0xff] %vm374, 0.0
        %910 = vst.msk [vmem:[#allocation2 + $0x110] sm:$0xff] %vm374, 0.0
        %911 = vst.msk [vmem:[#allocation2 + $0x118] sm:$0x3] %vm877, 0.0
        %912 = vst.msk [vmem:[#allocation2 + $0x120] sm:$0xff] %vm374, 0.0
        %913 = vst.msk [vmem:[#allocation2 + $0x128] sm:$0xff] %vm374, 0.0
        %914 = vst.msk [vmem:[#allocation2 + $0x130] sm:$0x3] %vm877, 0.0
        %915 = vst.msk [vmem:[#allocation2 + $0x138] sm:$0xff] %vm374, 0.0
        %916 = vst.msk [vmem:[#allocation2 + $0x140] sm:$0xff] %vm374, 0.0
        %917 = vst.msk [vmem:[#allocation2 + $0x148] sm:$0x3] %vm877, 0.0
        %918 = vst.msk [vmem:[#allocation2 + $0x150] sm:$0xff] %vm374, 0.0
        %919 = vst.msk [vmem:[#allocation2 + $0x158] sm:$0xff] %vm374, 0.0
        %920 = vst.msk [vmem:[#allocation2 + $0x160] sm:$0x3] %vm877, 0.0
        %921 = vst.msk [vmem:[#allocation2 + $0x168] sm:$0xff] %vm374, 0.0
        %922 = vst.msk [vmem:[#allocation2 + $0x170] sm:$0xff] %vm374, 0.0
        %923 = vst.msk [vmem:[#allocation2 + $0x178] sm:$0x3] %vm877, 0.0
        %924 = vst.msk [vmem:[#allocation2 + $0x180] sm:$0xff] %vm374, 0.0
        %925 = vst.msk [vmem:[#allocation2 + $0x188] sm:$0xff] %vm374, 0.0
        %926 = vst.msk [vmem:[#allocation2 + $0x190] sm:$0x3] %vm877, 0.0
        %927 = vst.msk [vmem:[#allocation2 + $0x198] sm:$0xff] %vm374, 0.0
        %928 = vst.msk [vmem:[#allocation2 + $0x1a0] sm:$0xff] %vm374, 0.0
        %929 = vst.msk [vmem:[#allocation2 + $0x1a8] sm:$0x3] %vm877, 0.0
        %s930 = scalar_lea.vmem [#allocation2], 24
        %931 = vst.msk [vmem:[%s930 + $0x1] sm:$0xff] %vm374, %v843
        %932 = vst.msk [vmem:[%s930 + $0x9] sm:$0xff] %vm374, %v844
        %933 = vst.msk [vmem:[%s930 + $0x19] sm:$0xff] %vm374, %v845
        %934 = vst.msk [vmem:[%s930 + $0x21] sm:$0xff] %vm374, %v846
        %935 = vst.msk [vmem:[%s930 + $0x31] sm:$0xff] %vm374, %v847
        %936 = vst.msk [vmem:[%s930 + $0x39] sm:$0xff] %vm374, %v848
        %937 = vst.msk [vmem:[%s930 + $0x49] sm:$0xff] %vm374, %v849
        %938 = vst.msk [vmem:[%s930 + $0x51] sm:$0xff] %vm374, %v850
        %939 = vst.msk [vmem:[%s930 + $0x61] sm:$0xff] %vm374, %v851
        %940 = vst.msk [vmem:[%s930 + $0x69] sm:$0xff] %vm374, %v852
        %941 = vst.msk [vmem:[%s930 + $0x79] sm:$0xff] %vm374, %v853
        %942 = vst.msk [vmem:[%s930 + $0x81] sm:$0xff] %vm374, %v854
        %943 = vst.msk [vmem:[%s930 + $0x91] sm:$0xff] %vm374, %v855
        %944 = vst.msk [vmem:[%s930 + $0x99] sm:$0xff] %vm374, %v856
        %945 = vst.msk [vmem:[%s930 + $0xa9] sm:$0xff] %vm374, %v857
        %946 = vst.msk [vmem:[%s930 + $0xb1] sm:$0xff] %vm374, %v858
        %947 = vst.msk [vmem:[%s930 + $0xc1] sm:$0xff] %vm374, %v859
        %948 = vst.msk [vmem:[%s930 + $0xc9] sm:$0xff] %vm374, %v860
        %949 = vst.msk [vmem:[%s930 + $0xd9] sm:$0xff] %vm374, %v861
        %950 = vst.msk [vmem:[%s930 + $0xe1] sm:$0xff] %vm374, %v862
        %951 = vst.msk [vmem:[%s930 + $0xf1] sm:$0xff] %vm374, %v863
        %952 = vst.msk [vmem:[%s930 + $0xf9] sm:$0xff] %vm374, %v864
        %953 = vst.msk [vmem:[%s930 + $0x109] sm:$0xff] %vm374, %v865
        %954 = vst.msk [vmem:[%s930 + $0x111] sm:$0xff] %vm374, %v866
        %955 = vst.msk [vmem:[%s930 + $0x121] sm:$0xff] %vm374, %v867
        %956 = vst.msk [vmem:[%s930 + $0x129] sm:$0xff] %vm374, %v868
        %957 = vst.msk [vmem:[%s930 + $0x139] sm:$0xff] %vm374, %v869
        %958 = vst.msk [vmem:[%s930 + $0x141] sm:$0xff] %vm374, %v870
        %959 = vst.msk [vmem:[%s930 + $0x151] sm:$0xff] %vm374, %v871
        %960 = vst.msk [vmem:[%s930 + $0x159] sm:$0xff] %vm374, %v872
        %961 = vst.msk [vmem:[%s930 + $0x169] sm:$0xff] %vm374, %v873
        %962 = vst.msk [vmem:[%s930 + $0x171] sm:$0xff] %vm374, %v874
        %v963 = vld [vmem:[#allocation2] sm:$0xff]
        %v964 = vld [vmem:[#allocation2 + $0x8] sm:$0xff]
        %v965 = vld [vmem:[#allocation2 + $0x18] sm:$0xff]
        %v966 = vld [vmem:[#allocation2 + $0x20] sm:$0xff]
        %v967 = vld [vmem:[#allocation2 + $0x30] sm:$0xff]
        %v968 = vld [vmem:[#allocation2 + $0x38] sm:$0xff]
        %v969 = vld [vmem:[#allocation2 + $0x48] sm:$0xff]
        %v970 = vld [vmem:[#allocation2 + $0x50] sm:$0xff]
        %v971 = vld [vmem:[#allocation2 + $0x60] sm:$0xff]
        %v972 = vld [vmem:[#allocation2 + $0x68] sm:$0xff]
        %v973 = vld [vmem:[#allocation2 + $0x78] sm:$0xff]
        %v974 = vld [vmem:[#allocation2 + $0x80] sm:$0xff]
        %v975 = vld [vmem:[#allocation2 + $0x90] sm:$0xff]
        %v976 = vld [vmem:[#allocation2 + $0x98] sm:$0xff]
        %v977 = vld [vmem:[#allocation2 + $0xa8] sm:$0xff]
        %v978 = vld [vmem:[#allocation2 + $0xb0] sm:$0xff]
        %v979 = vld [vmem:[#allocation2 + $0xc0] sm:$0xff]
        %v980 = vld [vmem:[#allocation2 + $0xc8] sm:$0xff]
        %v981 = vld [vmem:[#allocation2 + $0xd8] sm:$0xff]
        %v982 = vld [vmem:[#allocation2 + $0xe0] sm:$0xff]
        %v983 = vld [vmem:[#allocation2 + $0xf0] sm:$0xff]
        %v984 = vld [vmem:[#allocation2 + $0xf8] sm:$0xff]
        %v985 = vld [vmem:[#allocation2 + $0x108] sm:$0xff]
        %v986 = vld [vmem:[#allocation2 + $0x110] sm:$0xff]
        %v987 = vld [vmem:[#allocation2 + $0x120] sm:$0xff]
        %v988 = vld [vmem:[#allocation2 + $0x128] sm:$0xff]
        %v989 = vld [vmem:[#allocation2 + $0x138] sm:$0xff]
        %v990 = vld [vmem:[#allocation2 + $0x140] sm:$0xff]
        %v991 = vld [vmem:[#allocation2 + $0x150] sm:$0xff]
        %v992 = vld [vmem:[#allocation2 + $0x158] sm:$0xff]
        %v993 = vld [vmem:[#allocation2 + $0x168] sm:$0xff]
        %v994 = vld [vmem:[#allocation2 + $0x170] sm:$0xff]
        %v995 = vld [vmem:[#allocation2 + $0x1] sm:$0xff]
        %v996 = vld [vmem:[#allocation2 + $0x9] sm:$0xff]
        %v997 = vld [vmem:[#allocation2 + $0x19] sm:$0xff]
        %v998 = vld [vmem:[#allocation2 + $0x21] sm:$0xff]
        %v999 = vld [vmem:[#allocation2 + $0x31] sm:$0xff]
        %v1000 = vld [vmem:[#allocation2 + $0x39] sm:$0xff]
        %v1001 = vld [vmem:[#allocation2 + $0x49] sm:$0xff]
        %v1002 = vld [vmem:[#allocation2 + $0x51] sm:$0xff]
        %v1003 = vld [vmem:[#allocation2 + $0x61] sm:$0xff]
        %v1004 = vld [vmem:[#allocation2 + $0x69] sm:$0xff]
        %v1005 = vld [vmem:[#allocation2 + $0x79] sm:$0xff]
        %v1006 = vld [vmem:[#allocation2 + $0x81] sm:$0xff]
        %v1007 = vld [vmem:[#allocation2 + $0x91] sm:$0xff]
        %v1008 = vld [vmem:[#allocation2 + $0x99] sm:$0xff]
        %v1009 = vld [vmem:[#allocation2 + $0xa9] sm:$0xff]
        %v1010 = vld [vmem:[#allocation2 + $0xb1] sm:$0xff]
        %v1011 = vld [vmem:[#allocation2 + $0xc1] sm:$0xff]
        %v1012 = vld [vmem:[#allocation2 + $0xc9] sm:$0xff]
        %v1013 = vld [vmem:[#allocation2 + $0xd9] sm:$0xff]
        %v1014 = vld [vmem:[#allocation2 + $0xe1] sm:$0xff]
        %v1015 = vld [vmem:[#allocation2 + $0xf1] sm:$0xff]
        %v1016 = vld [vmem:[#allocation2 + $0xf9] sm:$0xff]
        %v1017 = vld [vmem:[#allocation2 + $0x109] sm:$0xff]
        %v1018 = vld [vmem:[#allocation2 + $0x111] sm:$0xff]
        %v1019 = vld [vmem:[#allocation2 + $0x121] sm:$0xff]
        %v1020 = vld [vmem:[#allocation2 + $0x129] sm:$0xff]
        %v1021 = vld [vmem:[#allocation2 + $0x139] sm:$0xff]
        %v1022 = vld [vmem:[#allocation2 + $0x141] sm:$0xff]
        %v1023 = vld [vmem:[#allocation2 + $0x151] sm:$0xff]
        %v1024 = vld [vmem:[#allocation2 + $0x159] sm:$0xff]
        %v1025 = vld [vmem:[#allocation2 + $0x169] sm:$0xff]
        %v1026 = vld [vmem:[#allocation2 + $0x171] sm:$0xff]
        %v1027 = vld [vmem:[#allocation2 + $0x2] sm:$0xff]
        %v1028 = vld [vmem:[#allocation2 + $0xa] sm:$0xff]
        %v1029 = vld [vmem:[#allocation2 + $0x1a] sm:$0xff]
        %v1030 = vld [vmem:[#allocation2 + $0x22] sm:$0xff]
        %v1031 = vld [vmem:[#allocation2 + $0x32] sm:$0xff]
        %v1032 = vld [vmem:[#allocation2 + $0x3a] sm:$0xff]
        %v1033 = vld [vmem:[#allocation2 + $0x4a] sm:$0xff]
        %v1034 = vld [vmem:[#allocation2 + $0x52] sm:$0xff]
        %v1035 = vld [vmem:[#allocation2 + $0x62] sm:$0xff]
        %v1036 = vld [vmem:[#allocation2 + $0x6a] sm:$0xff]
        %v1037 = vld [vmem:[#allocation2 + $0x7a] sm:$0xff]
        %v1038 = vld [vmem:[#allocation2 + $0x82] sm:$0xff]
        %v1039 = vld [vmem:[#allocation2 + $0x92] sm:$0xff]
        %v1040 = vld [vmem:[#allocation2 + $0x9a] sm:$0xff]
        %v1041 = vld [vmem:[#allocation2 + $0xaa] sm:$0xff]
        %v1042 = vld [vmem:[#allocation2 + $0xb2] sm:$0xff]
        %v1043 = vld [vmem:[#allocation2 + $0xc2] sm:$0xff]
        %v1044 = vld [vmem:[#allocation2 + $0xca] sm:$0xff]
        %v1045 = vld [vmem:[#allocation2 + $0xda] sm:$0xff]
        %v1046 = vld [vmem:[#allocation2 + $0xe2] sm:$0xff]
        %v1047 = vld [vmem:[#allocation2 + $0xf2] sm:$0xff]
        %v1048 = vld [vmem:[#allocation2 + $0xfa] sm:$0xff]
        %v1049 = vld [vmem:[#allocation2 + $0x10a] sm:$0xff]
        %v1050 = vld [vmem:[#allocation2 + $0x112] sm:$0xff]
        %v1051 = vld [vmem:[#allocation2 + $0x122] sm:$0xff]
        %v1052 = vld [vmem:[#allocation2 + $0x12a] sm:$0xff]
        %v1053 = vld [vmem:[#allocation2 + $0x13a] sm:$0xff]
        %v1054 = vld [vmem:[#allocation2 + $0x142] sm:$0xff]
        %v1055 = vld [vmem:[#allocation2 + $0x152] sm:$0xff]
        %v1056 = vld [vmem:[#allocation2 + $0x15a] sm:$0xff]
        %v1057 = vld [vmem:[#allocation2 + $0x16a] sm:$0xff]
        %v1058 = vld [vmem:[#allocation2 + $0x172] sm:$0xff]
        %v1059 = vld [vmem:[%s930] sm:$0xff]
        %v1060 = vld [vmem:[%s930 + $0x8] sm:$0xff]
        %v1061 = vld [vmem:[%s930 + $0x18] sm:$0xff]
        %v1062 = vld [vmem:[%s930 + $0x20] sm:$0xff]
        %v1063 = vld [vmem:[%s930 + $0x30] sm:$0xff]
        %v1064 = vld [vmem:[%s930 + $0x38] sm:$0xff]
        %v1065 = vld [vmem:[%s930 + $0x48] sm:$0xff]
        %v1066 = vld [vmem:[%s930 + $0x50] sm:$0xff]
        %v1067 = vld [vmem:[%s930 + $0x60] sm:$0xff]
        %v1068 = vld [vmem:[%s930 + $0x68] sm:$0xff]
        %v1069 = vld [vmem:[%s930 + $0x78] sm:$0xff]
        %v1070 = vld [vmem:[%s930 + $0x80] sm:$0xff]
        %v1071 = vld [vmem:[%s930 + $0x90] sm:$0xff]
        %v1072 = vld [vmem:[%s930 + $0x98] sm:$0xff]
        %v1073 = vld [vmem:[%s930 + $0xa8] sm:$0xff]
        %v1074 = vld [vmem:[%s930 + $0xb0] sm:$0xff]
        %v1075 = vld [vmem:[%s930 + $0xc0] sm:$0xff]
        %v1076 = vld [vmem:[%s930 + $0xc8] sm:$0xff]
        %v1077 = vld [vmem:[%s930 + $0xd8] sm:$0xff]
        %v1078 = vld [vmem:[%s930 + $0xe0] sm:$0xff]
        %v1079 = vld [vmem:[%s930 + $0xf0] sm:$0xff]
        %v1080 = vld [vmem:[%s930 + $0xf8] sm:$0xff]
        %v1081 = vld [vmem:[%s930 + $0x108] sm:$0xff]
        %v1082 = vld [vmem:[%s930 + $0x110] sm:$0xff]
        %v1083 = vld [vmem:[%s930 + $0x120] sm:$0xff]
        %v1084 = vld [vmem:[%s930 + $0x128] sm:$0xff]
        %v1085 = vld [vmem:[%s930 + $0x138] sm:$0xff]
        %v1086 = vld [vmem:[%s930 + $0x140] sm:$0xff]
        %v1087 = vld [vmem:[%s930 + $0x150] sm:$0xff]
        %v1088 = vld [vmem:[%s930 + $0x158] sm:$0xff]
        %v1089 = vld [vmem:[%s930 + $0x168] sm:$0xff]
        %v1090 = vld [vmem:[%s930 + $0x170] sm:$0xff]
        %v1091 = vld [vmem:[%s930 + $0x1] sm:$0xff]
        %v1092 = vld [vmem:[%s930 + $0x9] sm:$0xff]
        %v1093 = vld [vmem:[%s930 + $0x19] sm:$0xff]
        %v1094 = vld [vmem:[%s930 + $0x21] sm:$0xff]
        %v1095 = vld [vmem:[%s930 + $0x31] sm:$0xff]
        %v1096 = vld [vmem:[%s930 + $0x39] sm:$0xff]
        %v1097 = vld [vmem:[%s930 + $0x49] sm:$0xff]
        %v1098 = vld [vmem:[%s930 + $0x51] sm:$0xff]
        %v1099 = vld [vmem:[%s930 + $0x61] sm:$0xff]
        %v1100 = vld [vmem:[%s930 + $0x69] sm:$0xff]
        %v1101 = vld [vmem:[%s930 + $0x79] sm:$0xff]
        %v1102 = vld [vmem:[%s930 + $0x81] sm:$0xff]
        %v1103 = vld [vmem:[%s930 + $0x91] sm:$0xff]
        %v1104 = vld [vmem:[%s930 + $0x99] sm:$0xff]
        %v1105 = vld [vmem:[%s930 + $0xa9] sm:$0xff]
        %v1106 = vld [vmem:[%s930 + $0xb1] sm:$0xff]
        %v1107 = vld [vmem:[%s930 + $0xc1] sm:$0xff]
        %v1108 = vld [vmem:[%s930 + $0xc9] sm:$0xff]
        %v1109 = vld [vmem:[%s930 + $0xd9] sm:$0xff]
        %v1110 = vld [vmem:[%s930 + $0xe1] sm:$0xff]
        %v1111 = vld [vmem:[%s930 + $0xf1] sm:$0xff]
        %v1112 = vld [vmem:[%s930 + $0xf9] sm:$0xff]
        %v1113 = vld [vmem:[%s930 + $0x109] sm:$0xff]
        %v1114 = vld [vmem:[%s930 + $0x111] sm:$0xff]
        %v1115 = vld [vmem:[%s930 + $0x121] sm:$0xff]
        %v1116 = vld [vmem:[%s930 + $0x129] sm:$0xff]
        %v1117 = vld [vmem:[%s930 + $0x139] sm:$0xff]
        %v1118 = vld [vmem:[%s930 + $0x141] sm:$0xff]
        %v1119 = vld [vmem:[%s930 + $0x151] sm:$0xff]
        %v1120 = vld [vmem:[%s930 + $0x159] sm:$0xff]
        %v1121 = vld [vmem:[%s930 + $0x169] sm:$0xff]
        %v1122 = vld [vmem:[%s930 + $0x171] sm:$0xff]
        %v1123 = vld [vmem:[%s930 + $0x2] sm:$0xff]
        %v1124 = vld [vmem:[%s930 + $0xa] sm:$0xff]
        %v1125 = vld [vmem:[%s930 + $0x1a] sm:$0xff]
        %v1126 = vld [vmem:[%s930 + $0x22] sm:$0xff]
        %v1127 = vld [vmem:[%s930 + $0x32] sm:$0xff]
        %v1128 = vld [vmem:[%s930 + $0x3a] sm:$0xff]
        %v1129 = vld [vmem:[%s930 + $0x4a] sm:$0xff]
        %v1130 = vld [vmem:[%s930 + $0x52] sm:$0xff]
        %v1131 = vld [vmem:[%s930 + $0x62] sm:$0xff]
        %v1132 = vld [vmem:[%s930 + $0x6a] sm:$0xff]
        %v1133 = vld [vmem:[%s930 + $0x7a] sm:$0xff]
        %v1134 = vld [vmem:[%s930 + $0x82] sm:$0xff]
        %v1135 = vld [vmem:[%s930 + $0x92] sm:$0xff]
        %v1136 = vld [vmem:[%s930 + $0x9a] sm:$0xff]
        %v1137 = vld [vmem:[%s930 + $0xaa] sm:$0xff]
        %v1138 = vld [vmem:[%s930 + $0xb2] sm:$0xff]
        %v1139 = vld [vmem:[%s930 + $0xc2] sm:$0xff]
        %v1140 = vld [vmem:[%s930 + $0xca] sm:$0xff]
        %v1141 = vld [vmem:[%s930 + $0xda] sm:$0xff]
        %v1142 = vld [vmem:[%s930 + $0xe2] sm:$0xff]
        %v1143 = vld [vmem:[%s930 + $0xf2] sm:$0xff]
        %v1144 = vld [vmem:[%s930 + $0xfa] sm:$0xff]
        %v1145 = vld [vmem:[%s930 + $0x10a] sm:$0xff]
        %v1146 = vld [vmem:[%s930 + $0x112] sm:$0xff]
        %v1147 = vld [vmem:[%s930 + $0x122] sm:$0xff]
        %v1148 = vld [vmem:[%s930 + $0x12a] sm:$0xff]
        %v1149 = vld [vmem:[%s930 + $0x13a] sm:$0xff]
        %v1150 = vld [vmem:[%s930 + $0x142] sm:$0xff]
        %v1151 = vld [vmem:[%s930 + $0x152] sm:$0xff]
        %v1152 = vld [vmem:[%s930 + $0x15a] sm:$0xff]
        %v1153 = vld [vmem:[%s930 + $0x16a] sm:$0xff]
        %v1154 = vld [vmem:[%s930 + $0x172] sm:$0xff]
        %s1155 = scalar_lea.vmem [#allocation2], 48
        %v1156 = vld [vmem:[%s1155] sm:$0xff]
        %v1157 = vld [vmem:[%s1155 + $0x8] sm:$0xff]
        %v1158 = vld [vmem:[%s1155 + $0x18] sm:$0xff]
        %v1159 = vld [vmem:[%s1155 + $0x20] sm:$0xff]
        %v1160 = vld [vmem:[%s1155 + $0x30] sm:$0xff]
        %v1161 = vld [vmem:[%s1155 + $0x38] sm:$0xff]
        %v1162 = vld [vmem:[%s1155 + $0x48] sm:$0xff]
        %v1163 = vld [vmem:[%s1155 + $0x50] sm:$0xff]
        %v1164 = vld [vmem:[%s1155 + $0x60] sm:$0xff]
        %v1165 = vld [vmem:[%s1155 + $0x68] sm:$0xff]
        %v1166 = vld [vmem:[%s1155 + $0x78] sm:$0xff]
        %v1167 = vld [vmem:[%s1155 + $0x80] sm:$0xff]
        %v1168 = vld [vmem:[%s1155 + $0x90] sm:$0xff]
        %v1169 = vld [vmem:[%s1155 + $0x98] sm:$0xff]
        %v1170 = vld [vmem:[%s1155 + $0xa8] sm:$0xff]
        %v1171 = vld [vmem:[%s1155 + $0xb0] sm:$0xff]
        %v1172 = vld [vmem:[%s1155 + $0xc0] sm:$0xff]
        %v1173 = vld [vmem:[%s1155 + $0xc8] sm:$0xff]
        %v1174 = vld [vmem:[%s1155 + $0xd8] sm:$0xff]
        %v1175 = vld [vmem:[%s1155 + $0xe0] sm:$0xff]
        %v1176 = vld [vmem:[%s1155 + $0xf0] sm:$0xff]
        %v1177 = vld [vmem:[%s1155 + $0xf8] sm:$0xff]
        %v1178 = vld [vmem:[%s1155 + $0x108] sm:$0xff]
        %v1179 = vld [vmem:[%s1155 + $0x110] sm:$0xff]
        %v1180 = vld [vmem:[%s1155 + $0x120] sm:$0xff]
        %v1181 = vld [vmem:[%s1155 + $0x128] sm:$0xff]
        %v1182 = vld [vmem:[%s1155 + $0x138] sm:$0xff]
        %v1183 = vld [vmem:[%s1155 + $0x140] sm:$0xff]
        %v1184 = vld [vmem:[%s1155 + $0x150] sm:$0xff]
        %v1185 = vld [vmem:[%s1155 + $0x158] sm:$0xff]
        %v1186 = vld [vmem:[%s1155 + $0x168] sm:$0xff]
        %v1187 = vld [vmem:[%s1155 + $0x170] sm:$0xff]
        %v1188 = vld [vmem:[%s1155 + $0x1] sm:$0xff]
        %v1189 = vld [vmem:[%s1155 + $0x9] sm:$0xff]
        %v1190 = vld [vmem:[%s1155 + $0x19] sm:$0xff]
        %v1191 = vld [vmem:[%s1155 + $0x21] sm:$0xff]
        %v1192 = vld [vmem:[%s1155 + $0x31] sm:$0xff]
        %v1193 = vld [vmem:[%s1155 + $0x39] sm:$0xff]
        %v1194 = vld [vmem:[%s1155 + $0x49] sm:$0xff]
        %v1195 = vld [vmem:[%s1155 + $0x51] sm:$0xff]
        %v1196 = vld [vmem:[%s1155 + $0x61] sm:$0xff]
        %v1197 = vld [vmem:[%s1155 + $0x69] sm:$0xff]
        %v1198 = vld [vmem:[%s1155 + $0x79] sm:$0xff]
        %v1199 = vld [vmem:[%s1155 + $0x81] sm:$0xff]
        %v1200 = vld [vmem:[%s1155 + $0x91] sm:$0xff]
        %v1201 = vld [vmem:[%s1155 + $0x99] sm:$0xff]
        %v1202 = vld [vmem:[%s1155 + $0xa9] sm:$0xff]
        %v1203 = vld [vmem:[%s1155 + $0xb1] sm:$0xff]
        %v1204 = vld [vmem:[%s1155 + $0xc1] sm:$0xff]
        %v1205 = vld [vmem:[%s1155 + $0xc9] sm:$0xff]
        %v1206 = vld [vmem:[%s1155 + $0xd9] sm:$0xff]
        %v1207 = vld [vmem:[%s1155 + $0xe1] sm:$0xff]
        %v1208 = vld [vmem:[%s1155 + $0xf1] sm:$0xff]
        %v1209 = vld [vmem:[%s1155 + $0xf9] sm:$0xff]
        %v1210 = vld [vmem:[%s1155 + $0x109] sm:$0xff]
        %v1211 = vld [vmem:[%s1155 + $0x111] sm:$0xff]
        %v1212 = vld [vmem:[%s1155 + $0x121] sm:$0xff]
        %v1213 = vld [vmem:[%s1155 + $0x129] sm:$0xff]
        %v1214 = vld [vmem:[%s1155 + $0x139] sm:$0xff]
        %v1215 = vld [vmem:[%s1155 + $0x141] sm:$0xff]
        %v1216 = vld [vmem:[%s1155 + $0x151] sm:$0xff]
        %v1217 = vld [vmem:[%s1155 + $0x159] sm:$0xff]
        %v1218 = vld [vmem:[%s1155 + $0x169] sm:$0xff]
        %v1219 = vld [vmem:[%s1155 + $0x171] sm:$0xff]
        %v1220 = vld [vmem:[%s1155 + $0x2] sm:$0xff]
        %v1221 = vld [vmem:[%s1155 + $0xa] sm:$0xff]
        %v1222 = vld [vmem:[%s1155 + $0x1a] sm:$0xff]
        %v1223 = vld [vmem:[%s1155 + $0x22] sm:$0xff]
        %v1224 = vld [vmem:[%s1155 + $0x32] sm:$0xff]
        %v1225 = vld [vmem:[%s1155 + $0x3a] sm:$0xff]
        %v1226 = vld [vmem:[%s1155 + $0x4a] sm:$0xff]
        %v1227 = vld [vmem:[%s1155 + $0x52] sm:$0xff]
        %v1228 = vld [vmem:[%s1155 + $0x62] sm:$0xff]
        %v1229 = vld [vmem:[%s1155 + $0x6a] sm:$0xff]
        %v1230 = vld [vmem:[%s1155 + $0x7a] sm:$0xff]
        %v1231 = vld [vmem:[%s1155 + $0x82] sm:$0xff]
        %v1232 = vld [vmem:[%s1155 + $0x92] sm:$0xff]
        %v1233 = vld [vmem:[%s1155 + $0x9a] sm:$0xff]
        %v1234 = vld [vmem:[%s1155 + $0xaa] sm:$0xff]
        %v1235 = vld [vmem:[%s1155 + $0xb2] sm:$0xff]
        %v1236 = vld [vmem:[%s1155 + $0xc2] sm:$0xff]
        %v1237 = vld [vmem:[%s1155 + $0xca] sm:$0xff]
        %v1238 = vld [vmem:[%s1155 + $0xda] sm:$0xff]
        %v1239 = vld [vmem:[%s1155 + $0xe2] sm:$0xff]
        %v1240 = vld [vmem:[%s1155 + $0xf2] sm:$0xff]
        %v1241 = vld [vmem:[%s1155 + $0xfa] sm:$0xff]
        %v1242 = vld [vmem:[%s1155 + $0x10a] sm:$0xff]
        %v1243 = vld [vmem:[%s1155 + $0x112] sm:$0xff]
        %v1244 = vld [vmem:[%s1155 + $0x122] sm:$0xff]
        %v1245 = vld [vmem:[%s1155 + $0x12a] sm:$0xff]
        %v1246 = vld [vmem:[%s1155 + $0x13a] sm:$0xff]
        %v1247 = vld [vmem:[%s1155 + $0x142] sm:$0xff]
        %v1248 = vld [vmem:[%s1155 + $0x152] sm:$0xff]
        %v1249 = vld [vmem:[%s1155 + $0x15a] sm:$0xff]
        %v1250 = vld [vmem:[%s1155 + $0x16a] sm:$0xff]
        %v1251 = vld [vmem:[%s1155 + $0x172] sm:$0xff]
        %1284 = vrot.lane.b32.xlu0 %v995, 64
        %v1285 = vpop.permute.xlu0 %1284
        %1286 = vrot.lane.b32.xlu0 %v996, 64
        %v1287 = vpop.permute.xlu0 %1286
        %1288 = vrot.lane.b32.xlu0 %v997, 64
        %v1289 = vpop.permute.xlu0 %1288
        %1290 = vrot.lane.b32.xlu0 %v998, 64
        %v1291 = vpop.permute.xlu0 %1290
        %1292 = vrot.lane.b32.xlu0 %v999, 64
        %v1293 = vpop.permute.xlu0 %1292
        %1294 = vrot.lane.b32.xlu0 %v1000, 64
        %v1295 = vpop.permute.xlu0 %1294
        %1296 = vrot.lane.b32.xlu0 %v1001, 64
        %v1297 = vpop.permute.xlu0 %1296
        %1298 = vrot.lane.b32.xlu0 %v1002, 64
        %v1299 = vpop.permute.xlu0 %1298
        %1300 = vrot.lane.b32.xlu0 %v1003, 64
        %v1301 = vpop.permute.xlu0 %1300
        %1302 = vrot.lane.b32.xlu0 %v1004, 64
        %v1303 = vpop.permute.xlu0 %1302
        %1304 = vrot.lane.b32.xlu0 %v1005, 64
        %v1305 = vpop.permute.xlu0 %1304
        %1306 = vrot.lane.b32.xlu0 %v1006, 64
        %v1307 = vpop.permute.xlu0 %1306
        %1308 = vrot.lane.b32.xlu0 %v1007, 64
        %v1309 = vpop.permute.xlu0 %1308
        %1310 = vrot.lane.b32.xlu0 %v1008, 64
        %v1311 = vpop.permute.xlu0 %1310
        %1312 = vrot.lane.b32.xlu0 %v1009, 64
        %v1313 = vpop.permute.xlu0 %1312
        %1314 = vrot.lane.b32.xlu0 %v1010, 64
        %v1315 = vpop.permute.xlu0 %1314
        %1316 = vrot.lane.b32.xlu0 %v1011, 64
        %v1317 = vpop.permute.xlu0 %1316
        %1318 = vrot.lane.b32.xlu0 %v1012, 64
        %v1319 = vpop.permute.xlu0 %1318
        %1320 = vrot.lane.b32.xlu0 %v1013, 64
        %v1321 = vpop.permute.xlu0 %1320
        %1322 = vrot.lane.b32.xlu0 %v1014, 64
        %v1323 = vpop.permute.xlu0 %1322
        %1324 = vrot.lane.b32.xlu0 %v1015, 64
        %v1325 = vpop.permute.xlu0 %1324
        %1326 = vrot.lane.b32.xlu0 %v1016, 64
        %v1327 = vpop.permute.xlu0 %1326
        %1328 = vrot.lane.b32.xlu0 %v1017, 64
        %v1329 = vpop.permute.xlu0 %1328
        %1330 = vrot.lane.b32.xlu0 %v1018, 64
        %v1331 = vpop.permute.xlu0 %1330
        %1332 = vrot.lane.b32.xlu0 %v1019, 64
        %v1333 = vpop.permute.xlu0 %1332
        %1334 = vrot.lane.b32.xlu0 %v1020, 64
        %v1335 = vpop.permute.xlu0 %1334
        %1336 = vrot.lane.b32.xlu0 %v1021, 64
        %v1337 = vpop.permute.xlu0 %1336
        %1338 = vrot.lane.b32.xlu0 %v1022, 64
        %v1339 = vpop.permute.xlu0 %1338
        %1340 = vrot.lane.b32.xlu0 %v1023, 64
        %v1341 = vpop.permute.xlu0 %1340
        %1342 = vrot.lane.b32.xlu0 %v1024, 64
        %v1343 = vpop.permute.xlu0 %1342
        %1344 = vrot.lane.b32.xlu0 %v1025, 64
        %v1345 = vpop.permute.xlu0 %1344
        %1346 = vrot.lane.b32.xlu0 %v1026, 64
        %v1347 = vpop.permute.xlu0 %1346
        %1412 = vrot.lane.b32.xlu0 %v1059, 64
        %v1413 = vpop.permute.xlu0 %1412
        %1414 = vrot.lane.b32.xlu0 %v1060, 64
        %v1415 = vpop.permute.xlu0 %1414
        %1416 = vrot.lane.b32.xlu0 %v1061, 64
        %v1417 = vpop.permute.xlu0 %1416
        %1418 = vrot.lane.b32.xlu0 %v1062, 64
        %v1419 = vpop.permute.xlu0 %1418
        %1420 = vrot.lane.b32.xlu0 %v1063, 64
        %v1421 = vpop.permute.xlu0 %1420
        %1422 = vrot.lane.b32.xlu0 %v1064, 64
        %v1423 = vpop.permute.xlu0 %1422
        %1424 = vrot.lane.b32.xlu0 %v1065, 64
        %v1425 = vpop.permute.xlu0 %1424
        %1426 = vrot.lane.b32.xlu0 %v1066, 64
        %v1427 = vpop.permute.xlu0 %1426
        %1428 = vrot.lane.b32.xlu0 %v1067, 64
        %v1429 = vpop.permute.xlu0 %1428
        %1430 = vrot.lane.b32.xlu0 %v1068, 64
        %v1431 = vpop.permute.xlu0 %1430
        %1432 = vrot.lane.b32.xlu0 %v1069, 64
        %v1433 = vpop.permute.xlu0 %1432
        %1434 = vrot.lane.b32.xlu0 %v1070, 64
        %v1435 = vpop.permute.xlu0 %1434
        %1436 = vrot.lane.b32.xlu0 %v1071, 64
        %v1437 = vpop.permute.xlu0 %1436
        %1438 = vrot.lane.b32.xlu0 %v1072, 64
        %v1439 = vpop.permute.xlu0 %1438
        %1440 = vrot.lane.b32.xlu0 %v1073, 64
        %v1441 = vpop.permute.xlu0 %1440
        %1442 = vrot.lane.b32.xlu0 %v1074, 64
        %v1443 = vpop.permute.xlu0 %1442
        %1444 = vrot.lane.b32.xlu0 %v1075, 64
        %v1445 = vpop.permute.xlu0 %1444
        %1446 = vrot.lane.b32.xlu0 %v1076, 64
        %v1447 = vpop.permute.xlu0 %1446
        %1448 = vrot.lane.b32.xlu0 %v1077, 64
        %v1449 = vpop.permute.xlu0 %1448
        %1450 = vrot.lane.b32.xlu0 %v1078, 64
        %v1451 = vpop.permute.xlu0 %1450
        %1452 = vrot.lane.b32.xlu0 %v1079, 64
        %v1453 = vpop.permute.xlu0 %1452
        %1454 = vrot.lane.b32.xlu0 %v1080, 64
        %v1455 = vpop.permute.xlu0 %1454
        %1456 = vrot.lane.b32.xlu0 %v1081, 64
        %v1457 = vpop.permute.xlu0 %1456
        %1458 = vrot.lane.b32.xlu0 %v1082, 64
        %v1459 = vpop.permute.xlu0 %1458
        %1460 = vrot.lane.b32.xlu0 %v1083, 64
        %v1461 = vpop.permute.xlu0 %1460
        %1462 = vrot.lane.b32.xlu0 %v1084, 64
        %v1463 = vpop.permute.xlu0 %1462
        %1464 = vrot.lane.b32.xlu0 %v1085, 64
        %v1465 = vpop.permute.xlu0 %1464
        %1466 = vrot.lane.b32.xlu0 %v1086, 64
        %v1467 = vpop.permute.xlu0 %1466
        %1468 = vrot.lane.b32.xlu0 %v1087, 64
        %v1469 = vpop.permute.xlu0 %1468
        %1470 = vrot.lane.b32.xlu0 %v1088, 64
        %v1471 = vpop.permute.xlu0 %1470
        %1472 = vrot.lane.b32.xlu0 %v1089, 64
        %v1473 = vpop.permute.xlu0 %1472
        %1474 = vrot.lane.b32.xlu0 %v1090, 64
        %v1475 = vpop.permute.xlu0 %1474
        %1540 = vrot.lane.b32.xlu0 %v1123, 64
        %v1541 = vpop.permute.xlu0 %1540
        %1542 = vrot.lane.b32.xlu0 %v1124, 64
        %v1543 = vpop.permute.xlu0 %1542
        %1544 = vrot.lane.b32.xlu0 %v1125, 64
        %v1545 = vpop.permute.xlu0 %1544
        %1546 = vrot.lane.b32.xlu0 %v1126, 64
        %v1547 = vpop.permute.xlu0 %1546
        %1548 = vrot.lane.b32.xlu0 %v1127, 64
        %v1549 = vpop.permute.xlu0 %1548
        %1550 = vrot.lane.b32.xlu0 %v1128, 64
        %v1551 = vpop.permute.xlu0 %1550
        %1552 = vrot.lane.b32.xlu0 %v1129, 64
        %v1553 = vpop.permute.xlu0 %1552
        %1554 = vrot.lane.b32.xlu0 %v1130, 64
        %v1555 = vpop.permute.xlu0 %1554
        %1556 = vrot.lane.b32.xlu0 %v1131, 64
        %v1557 = vpop.permute.xlu0 %1556
        %1558 = vrot.lane.b32.xlu0 %v1132, 64
        %v1559 = vpop.permute.xlu0 %1558
        %1560 = vrot.lane.b32.xlu0 %v1133, 64
        %v1561 = vpop.permute.xlu0 %1560
        %1562 = vrot.lane.b32.xlu0 %v1134, 64
        %v1563 = vpop.permute.xlu0 %1562
        %1564 = vrot.lane.b32.xlu0 %v1135, 64
        %v1565 = vpop.permute.xlu0 %1564
        %1566 = vrot.lane.b32.xlu0 %v1136, 64
        %v1567 = vpop.permute.xlu0 %1566
        %1568 = vrot.lane.b32.xlu0 %v1137, 64
        %v1569 = vpop.permute.xlu0 %1568
        %1570 = vrot.lane.b32.xlu0 %v1138, 64
        %v1571 = vpop.permute.xlu0 %1570
        %1572 = vrot.lane.b32.xlu0 %v1139, 64
        %v1573 = vpop.permute.xlu0 %1572
        %1574 = vrot.lane.b32.xlu0 %v1140, 64
        %v1575 = vpop.permute.xlu0 %1574
        %1576 = vrot.lane.b32.xlu0 %v1141, 64
        %v1577 = vpop.permute.xlu0 %1576
        %1578 = vrot.lane.b32.xlu0 %v1142, 64
        %v1579 = vpop.permute.xlu0 %1578
        %1580 = vrot.lane.b32.xlu0 %v1143, 64
        %v1581 = vpop.permute.xlu0 %1580
        %1582 = vrot.lane.b32.xlu0 %v1144, 64
        %v1583 = vpop.permute.xlu0 %1582
        %1584 = vrot.lane.b32.xlu0 %v1145, 64
        %v1585 = vpop.permute.xlu0 %1584
        %1586 = vrot.lane.b32.xlu0 %v1146, 64
        %v1587 = vpop.permute.xlu0 %1586
        %1588 = vrot.lane.b32.xlu0 %v1147, 64
        %v1589 = vpop.permute.xlu0 %1588
        %1590 = vrot.lane.b32.xlu0 %v1148, 64
        %v1591 = vpop.permute.xlu0 %1590
        %1592 = vrot.lane.b32.xlu0 %v1149, 64
        %v1593 = vpop.permute.xlu0 %1592
        %1594 = vrot.lane.b32.xlu0 %v1150, 64
        %v1595 = vpop.permute.xlu0 %1594
        %1596 = vrot.lane.b32.xlu0 %v1151, 64
        %v1597 = vpop.permute.xlu0 %1596
        %1598 = vrot.lane.b32.xlu0 %v1152, 64
        %v1599 = vpop.permute.xlu0 %1598
        %1600 = vrot.lane.b32.xlu0 %v1153, 64
        %v1601 = vpop.permute.xlu0 %1600
        %1602 = vrot.lane.b32.xlu0 %v1154, 64
        %v1603 = vpop.permute.xlu0 %1602
        %1668 = vrot.lane.b32.xlu0 %v1188, 64
        %v1669 = vpop.permute.xlu0 %1668
        %1670 = vrot.lane.b32.xlu0 %v1189, 64
        %v1671 = vpop.permute.xlu0 %1670
        %1672 = vrot.lane.b32.xlu0 %v1190, 64
        %v1673 = vpop.permute.xlu0 %1672
        %1674 = vrot.lane.b32.xlu0 %v1191, 64
        %v1675 = vpop.permute.xlu0 %1674
        %1676 = vrot.lane.b32.xlu0 %v1192, 64
        %v1677 = vpop.permute.xlu0 %1676
        %1678 = vrot.lane.b32.xlu0 %v1193, 64
        %v1679 = vpop.permute.xlu0 %1678
        %1680 = vrot.lane.b32.xlu0 %v1194, 64
        %v1681 = vpop.permute.xlu0 %1680
        %1682 = vrot.lane.b32.xlu0 %v1195, 64
        %v1683 = vpop.permute.xlu0 %1682
        %1684 = vrot.lane.b32.xlu0 %v1196, 64
        %v1685 = vpop.permute.xlu0 %1684
        %1686 = vrot.lane.b32.xlu0 %v1197, 64
        %v1687 = vpop.permute.xlu0 %1686
        %1688 = vrot.lane.b32.xlu0 %v1198, 64
        %v1689 = vpop.permute.xlu0 %1688
        %1690 = vrot.lane.b32.xlu0 %v1199, 64
        %v1691 = vpop.permute.xlu0 %1690
        %1692 = vrot.lane.b32.xlu0 %v1200, 64
        %v1693 = vpop.permute.xlu0 %1692
        %1694 = vrot.lane.b32.xlu0 %v1201, 64
        %v1695 = vpop.permute.xlu0 %1694
        %1696 = vrot.lane.b32.xlu0 %v1202, 64
        %v1697 = vpop.permute.xlu0 %1696
        %1698 = vrot.lane.b32.xlu0 %v1203, 64
        %v1699 = vpop.permute.xlu0 %1698
        %1700 = vrot.lane.b32.xlu0 %v1204, 64
        %v1701 = vpop.permute.xlu0 %1700
        %1702 = vrot.lane.b32.xlu0 %v1205, 64
        %v1703 = vpop.permute.xlu0 %1702
        %1704 = vrot.lane.b32.xlu0 %v1206, 64
        %v1705 = vpop.permute.xlu0 %1704
        %1706 = vrot.lane.b32.xlu0 %v1207, 64
        %v1707 = vpop.permute.xlu0 %1706
        %1708 = vrot.lane.b32.xlu0 %v1208, 64
        %v1709 = vpop.permute.xlu0 %1708
        %1710 = vrot.lane.b32.xlu0 %v1209, 64
        %v1711 = vpop.permute.xlu0 %1710
        %1712 = vrot.lane.b32.xlu0 %v1210, 64
        %v1713 = vpop.permute.xlu0 %1712
        %1714 = vrot.lane.b32.xlu0 %v1211, 64
        %v1715 = vpop.permute.xlu0 %1714
        %1716 = vrot.lane.b32.xlu0 %v1212, 64
        %v1717 = vpop.permute.xlu0 %1716
        %1718 = vrot.lane.b32.xlu0 %v1213, 64
        %v1719 = vpop.permute.xlu0 %1718
        %1720 = vrot.lane.b32.xlu0 %v1214, 64
        %v1721 = vpop.permute.xlu0 %1720
        %1722 = vrot.lane.b32.xlu0 %v1215, 64
        %v1723 = vpop.permute.xlu0 %1722
        %1724 = vrot.lane.b32.xlu0 %v1216, 64
        %v1725 = vpop.permute.xlu0 %1724
        %1726 = vrot.lane.b32.xlu0 %v1217, 64
        %v1727 = vpop.permute.xlu0 %1726
        %1728 = vrot.lane.b32.xlu0 %v1218, 64
        %v1729 = vpop.permute.xlu0 %1728
        %1730 = vrot.lane.b32.xlu0 %v1219, 64
        %v1731 = vpop.permute.xlu0 %1730
        %v1764 = vsel %vm374, %v963, %v1285
        %v1765 = vsel %vm374, %v964, %v1287
        %v1766 = vsel %vm374, %v965, %v1289
        %v1767 = vsel %vm374, %v966, %v1291
        %v1768 = vsel %vm374, %v967, %v1293
        %v1769 = vsel %vm374, %v968, %v1295
        %v1770 = vsel %vm374, %v969, %v1297
        %v1771 = vsel %vm374, %v970, %v1299
        %v1772 = vsel %vm374, %v971, %v1301
        %v1773 = vsel %vm374, %v972, %v1303
        %v1774 = vsel %vm374, %v973, %v1305
        %v1775 = vsel %vm374, %v974, %v1307
        %v1776 = vsel %vm374, %v975, %v1309
        %v1777 = vsel %vm374, %v976, %v1311
        %v1778 = vsel %vm374, %v977, %v1313
        %v1779 = vsel %vm374, %v978, %v1315
        %v1780 = vsel %vm374, %v979, %v1317
        %v1781 = vsel %vm374, %v980, %v1319
        %v1782 = vsel %vm374, %v981, %v1321
        %v1783 = vsel %vm374, %v982, %v1323
        %v1784 = vsel %vm374, %v983, %v1325
        %v1785 = vsel %vm374, %v984, %v1327
        %v1786 = vsel %vm374, %v985, %v1329
        %v1787 = vsel %vm374, %v986, %v1331
        %v1788 = vsel %vm374, %v987, %v1333
        %v1789 = vsel %vm374, %v988, %v1335
        %v1790 = vsel %vm374, %v989, %v1337
        %v1791 = vsel %vm374, %v990, %v1339
        %v1792 = vsel %vm374, %v991, %v1341
        %v1793 = vsel %vm374, %v992, %v1343
        %v1794 = vsel %vm374, %v993, %v1345
        %v1795 = vsel %vm374, %v994, %v1347
        %v1796 = vsel %vm374, %v1027, %v1413
        %v1797 = vsel %vm374, %v1028, %v1415
        %v1798 = vsel %vm374, %v1029, %v1417
        %v1799 = vsel %vm374, %v1030, %v1419
        %v1800 = vsel %vm374, %v1031, %v1421
        %v1801 = vsel %vm374, %v1032, %v1423
        %v1802 = vsel %vm374, %v1033, %v1425
        %v1803 = vsel %vm374, %v1034, %v1427
        %v1804 = vsel %vm374, %v1035, %v1429
        %v1805 = vsel %vm374, %v1036, %v1431
        %v1806 = vsel %vm374, %v1037, %v1433
        %v1807 = vsel %vm374, %v1038, %v1435
        %v1808 = vsel %vm374, %v1039, %v1437
        %v1809 = vsel %vm374, %v1040, %v1439
        %v1810 = vsel %vm374, %v1041, %v1441
        %v1811 = vsel %vm374, %v1042, %v1443
        %v1812 = vsel %vm374, %v1043, %v1445
        %v1813 = vsel %vm374, %v1044, %v1447
        %v1814 = vsel %vm374, %v1045, %v1449
        %v1815 = vsel %vm374, %v1046, %v1451
        %v1816 = vsel %vm374, %v1047, %v1453
        %v1817 = vsel %vm374, %v1048, %v1455
        %v1818 = vsel %vm374, %v1049, %v1457
        %v1819 = vsel %vm374, %v1050, %v1459
        %v1820 = vsel %vm374, %v1051, %v1461
        %v1821 = vsel %vm374, %v1052, %v1463
        %v1822 = vsel %vm374, %v1053, %v1465
        %v1823 = vsel %vm374, %v1054, %v1467
        %v1824 = vsel %vm374, %v1055, %v1469
        %v1825 = vsel %vm374, %v1056, %v1471
        %v1826 = vsel %vm374, %v1057, %v1473
        %v1827 = vsel %vm374, %v1058, %v1475
        %v1828 = vsel %vm374, %v1091, %v1541
        %v1829 = vsel %vm374, %v1092, %v1543
        %v1830 = vsel %vm374, %v1093, %v1545
        %v1831 = vsel %vm374, %v1094, %v1547
        %v1832 = vsel %vm374, %v1095, %v1549
        %v1833 = vsel %vm374, %v1096, %v1551
        %v1834 = vsel %vm374, %v1097, %v1553
        %v1835 = vsel %vm374, %v1098, %v1555
        %v1836 = vsel %vm374, %v1099, %v1557
        %v1837 = vsel %vm374, %v1100, %v1559
        %v1838 = vsel %vm374, %v1101, %v1561
        %v1839 = vsel %vm374, %v1102, %v1563
        %v1840 = vsel %vm374, %v1103, %v1565
        %v1841 = vsel %vm374, %v1104, %v1567
        %v1842 = vsel %vm374, %v1105, %v1569
        %v1843 = vsel %vm374, %v1106, %v1571
        %v1844 = vsel %vm374, %v1107, %v1573
        %v1845 = vsel %vm374, %v1108, %v1575
        %v1846 = vsel %vm374, %v1109, %v1577
        %v1847 = vsel %vm374, %v1110, %v1579
        %v1848 = vsel %vm374, %v1111, %v1581
        %v1849 = vsel %vm374, %v1112, %v1583
        %v1850 = vsel %vm374, %v1113, %v1585
        %v1851 = vsel %vm374, %v1114, %v1587
        %v1852 = vsel %vm374, %v1115, %v1589
        %v1853 = vsel %vm374, %v1116, %v1591
        %v1854 = vsel %vm374, %v1117, %v1593
        %v1855 = vsel %vm374, %v1118, %v1595
        %v1856 = vsel %vm374, %v1119, %v1597
        %v1857 = vsel %vm374, %v1120, %v1599
        %v1858 = vsel %vm374, %v1121, %v1601
        %v1859 = vsel %vm374, %v1122, %v1603
        %v1860 = vsel %vm374, %v1156, %v1669
        %v1861 = vsel %vm374, %v1157, %v1671
        %v1862 = vsel %vm374, %v1158, %v1673
        %v1863 = vsel %vm374, %v1159, %v1675
        %v1864 = vsel %vm374, %v1160, %v1677
        %v1865 = vsel %vm374, %v1161, %v1679
        %v1866 = vsel %vm374, %v1162, %v1681
        %v1867 = vsel %vm374, %v1163, %v1683
        %v1868 = vsel %vm374, %v1164, %v1685
        %v1869 = vsel %vm374, %v1165, %v1687
        %v1870 = vsel %vm374, %v1166, %v1689
        %v1871 = vsel %vm374, %v1167, %v1691
        %v1872 = vsel %vm374, %v1168, %v1693
        %v1873 = vsel %vm374, %v1169, %v1695
        %v1874 = vsel %vm374, %v1170, %v1697
        %v1875 = vsel %vm374, %v1171, %v1699
        %v1876 = vsel %vm374, %v1172, %v1701
        %v1877 = vsel %vm374, %v1173, %v1703
        %v1878 = vsel %vm374, %v1174, %v1705
        %v1879 = vsel %vm374, %v1175, %v1707
        %v1880 = vsel %vm374, %v1176, %v1709
        %v1881 = vsel %vm374, %v1177, %v1711
        %v1882 = vsel %vm374, %v1178, %v1713
        %v1883 = vsel %vm374, %v1179, %v1715
        %v1884 = vsel %vm374, %v1180, %v1717
        %v1885 = vsel %vm374, %v1181, %v1719
        %v1886 = vsel %vm374, %v1182, %v1721
        %v1887 = vsel %vm374, %v1183, %v1723
        %v1888 = vsel %vm374, %v1184, %v1725
        %v1889 = vsel %vm374, %v1185, %v1727
        %v1890 = vsel %vm374, %v1186, %v1729
        %v1891 = vsel %vm374, %v1187, %v1731
        %v1892 = vpack.c.bf16 %v1765, %v1764
        %v1893 = vpack.c.bf16 %v1797, %v1796
        %v1894 = vpack.c.bf16 %v1829, %v1828
        %v1895 = vpack.c.bf16 %v1861, %v1860
        %v1896 = vpack.c.bf16 %v1221, %v1220
        %v1897 = vpack.c.bf16 %v1767, %v1766
        %v1898 = vpack.c.bf16 %v1799, %v1798
        %v1899 = vpack.c.bf16 %v1831, %v1830
        %v1900 = vpack.c.bf16 %v1863, %v1862
        %v1901 = vpack.c.bf16 %v1223, %v1222
        %v1902 = vpack.c.bf16 %v1769, %v1768
        %v1903 = vpack.c.bf16 %v1801, %v1800
        %v1904 = vpack.c.bf16 %v1833, %v1832
        %v1905 = vpack.c.bf16 %v1865, %v1864
        %v1906 = vpack.c.bf16 %v1225, %v1224
        %v1907 = vpack.c.bf16 %v1771, %v1770
        %v1908 = vpack.c.bf16 %v1803, %v1802
        %v1909 = vpack.c.bf16 %v1835, %v1834
        %v1910 = vpack.c.bf16 %v1867, %v1866
        %v1911 = vpack.c.bf16 %v1227, %v1226
        %v1912 = vpack.c.bf16 %v1773, %v1772
        %v1913 = vpack.c.bf16 %v1805, %v1804
        %v1914 = vpack.c.bf16 %v1837, %v1836
        %v1915 = vpack.c.bf16 %v1869, %v1868
        %v1916 = vpack.c.bf16 %v1229, %v1228
        %v1917 = vpack.c.bf16 %v1775, %v1774
        %v1918 = vpack.c.bf16 %v1807, %v1806
        %v1919 = vpack.c.bf16 %v1839, %v1838
        %v1920 = vpack.c.bf16 %v1871, %v1870
        %v1921 = vpack.c.bf16 %v1231, %v1230
        %v1922 = vpack.c.bf16 %v1777, %v1776
        %v1923 = vpack.c.bf16 %v1809, %v1808
        %v1924 = vpack.c.bf16 %v1841, %v1840
        %v1925 = vpack.c.bf16 %v1873, %v1872
        %v1926 = vpack.c.bf16 %v1233, %v1232
        %v1927 = vpack.c.bf16 %v1779, %v1778
        %v1928 = vpack.c.bf16 %v1811, %v1810
        %v1929 = vpack.c.bf16 %v1843, %v1842
        %v1930 = vpack.c.bf16 %v1875, %v1874
        %v1931 = vpack.c.bf16 %v1235, %v1234
        %v1932 = vpack.c.bf16 %v1781, %v1780
        %v1933 = vpack.c.bf16 %v1813, %v1812
        %v1934 = vpack.c.bf16 %v1845, %v1844
        %v1935 = vpack.c.bf16 %v1877, %v1876
        %v1936 = vpack.c.bf16 %v1237, %v1236
        %v1937 = vpack.c.bf16 %v1783, %v1782
        %v1938 = vpack.c.bf16 %v1815, %v1814
        %v1939 = vpack.c.bf16 %v1847, %v1846
        %v1940 = vpack.c.bf16 %v1879, %v1878
        %v1941 = vpack.c.bf16 %v1239, %v1238
        %v1942 = vpack.c.bf16 %v1785, %v1784
        %v1943 = vpack.c.bf16 %v1817, %v1816
        %v1944 = vpack.c.bf16 %v1849, %v1848
        %v1945 = vpack.c.bf16 %v1881, %v1880
        %v1946 = vpack.c.bf16 %v1241, %v1240
        %v1947 = vpack.c.bf16 %v1787, %v1786
        %v1948 = vpack.c.bf16 %v1819, %v1818
        %v1949 = vpack.c.bf16 %v1851, %v1850
        %v1950 = vpack.c.bf16 %v1883, %v1882
        %v1951 = vpack.c.bf16 %v1243, %v1242
        %v1952 = vpack.c.bf16 %v1789, %v1788
        %v1953 = vpack.c.bf16 %v1821, %v1820
        %v1954 = vpack.c.bf16 %v1853, %v1852
        %v1955 = vpack.c.bf16 %v1885, %v1884
        %v1956 = vpack.c.bf16 %v1245, %v1244
        %v1957 = vpack.c.bf16 %v1791, %v1790
        %v1958 = vpack.c.bf16 %v1823, %v1822
        %v1959 = vpack.c.bf16 %v1855, %v1854
        %v1960 = vpack.c.bf16 %v1887, %v1886
        %v1961 = vpack.c.bf16 %v1247, %v1246
        %v1962 = vpack.c.bf16 %v1793, %v1792
        %v1963 = vpack.c.bf16 %v1825, %v1824
        %v1964 = vpack.c.bf16 %v1857, %v1856
        %v1965 = vpack.c.bf16 %v1889, %v1888
        %v1966 = vpack.c.bf16 %v1249, %v1248
        %v1967 = vpack.c.bf16 %v1795, %v1794
        %v1968 = vpack.c.bf16 %v1827, %v1826
        %v1969 = vpack.c.bf16 %v1859, %v1858
        %v1970 = vpack.c.bf16 %v1891, %v1890
        %v1971 = vpack.c.bf16 %v1251, %v1250
        %v1972 = vld [vmem:[%s4] sm:$0xf]
        %v1973 = vld [vmem:[%s4 + $0x4] sm:$0xf]
        %v1974 = vld [vmem:[%s4 + $0x8] sm:$0xf]
        %v1975 = vld [vmem:[%s4 + $0xc] sm:$0xf]
        %v1976 = vld [vmem:[%s4 + $0x10] sm:$0xf]
        %v1977 = vld [vmem:[%s4 + $0x14] sm:$0xf]
        %v1978 = vld [vmem:[%s4 + $0x18] sm:$0xf]
        %v1979 = vld [vmem:[%s4 + $0x1c] sm:$0xf]
        %v1980 = vld [vmem:[%s4 + $0x20] sm:$0xf]
        %v1981 = vld [vmem:[%s4 + $0x24] sm:$0xf]
        %v1982 = vld [vmem:[%s4 + $0x28] sm:$0xf]
        %v1983 = vld [vmem:[%s4 + $0x2c] sm:$0xf]
        %v1984 = vld [vmem:[%s4 + $0x30] sm:$0xf]
        %v1985 = vld [vmem:[%s4 + $0x34] sm:$0xf]
        %v1986 = vld [vmem:[%s4 + $0x38] sm:$0xf]
        %v1987 = vld [vmem:[%s4 + $0x3c] sm:$0xf]
        %v1988 = vld [vmem:[%s4 + $0x40] sm:$0xf]
        %v1989 = vld [vmem:[%s4 + $0x44] sm:$0xf]
        %v1990 = vld [vmem:[%s4 + $0x48] sm:$0xf]
        %v1991 = vld [vmem:[%s4 + $0x4c] sm:$0xf]
        %v1992 = vld [vmem:[%s4 + $0x50] sm:$0xf]
        %v1993 = vld [vmem:[%s4 + $0x54] sm:$0xf]
        %v1994 = vld [vmem:[%s4 + $0x58] sm:$0xf]
        %v1995 = vld [vmem:[%s4 + $0x5c] sm:$0xf]
        %v1996 = vld [vmem:[%s4 + $0x60] sm:$0xf]
        %v1997 = vld [vmem:[%s4 + $0x64] sm:$0xf]
        %v1998 = vld [vmem:[%s4 + $0x68] sm:$0xf]
        %v1999 = vld [vmem:[%s4 + $0x6c] sm:$0xf]
        %v2000 = vld [vmem:[%s4 + $0x70] sm:$0xf]
        %v2001 = vld [vmem:[%s4 + $0x74] sm:$0xf]
        %v2002 = vld [vmem:[%s4 + $0x78] sm:$0xf]
        %v2003 = vld [vmem:[%s4 + $0x7c] sm:$0xf]
        %v2004 = vld [vmem:[%s4 + $0x80] sm:$0xf]
        %v2005 = vld [vmem:[%s4 + $0x84] sm:$0xf]
        %v2006 = vld [vmem:[%s4 + $0x88] sm:$0xf]
        %v2007 = vld [vmem:[%s4 + $0x8c] sm:$0xf]
        %v2008 = vld [vmem:[%s4 + $0x90] sm:$0xf]
        %v2009 = vld [vmem:[%s4 + $0x94] sm:$0xf]
        %v2010 = vld [vmem:[%s4 + $0x98] sm:$0xf]
        %v2011 = vld [vmem:[%s4 + $0x9c] sm:$0xf]
        %v2012 = vld [vmem:[%s4 + $0xa0] sm:$0xf]
        %v2013 = vld [vmem:[%s4 + $0xa4] sm:$0xf]
        %v2014 = vld [vmem:[%s4 + $0xa8] sm:$0xf]
        %v2015 = vld [vmem:[%s4 + $0xac] sm:$0xf]
        %v2016 = vld [vmem:[%s4 + $0xb0] sm:$0xf]
        %v2017 = vld [vmem:[%s4 + $0xb4] sm:$0xf]
        %v2018 = vld [vmem:[%s4 + $0xb8] sm:$0xf]
        %v2019 = vld [vmem:[%s4 + $0xbc] sm:$0xf]
        %v2020 = vld [vmem:[%s4 + $0xc0] sm:$0xf]
        %v2021 = vld [vmem:[%s4 + $0xc4] sm:$0xf]
        %v2022 = vld [vmem:[%s4 + $0xc8] sm:$0xf]
        %v2023 = vld [vmem:[%s4 + $0xcc] sm:$0xf]
        %v2024 = vld [vmem:[%s4 + $0xd0] sm:$0xf]
        %v2025 = vld [vmem:[%s4 + $0xd4] sm:$0xf]
        %v2026 = vld [vmem:[%s4 + $0xd8] sm:$0xf]
        %v2027 = vld [vmem:[%s4 + $0xdc] sm:$0xf]
        %v2028 = vld [vmem:[%s4 + $0xe0] sm:$0xf]
        %v2029 = vld [vmem:[%s4 + $0xe4] sm:$0xf]
        %v2030 = vld [vmem:[%s4 + $0xe8] sm:$0xf]
        %v2031 = vld [vmem:[%s4 + $0xec] sm:$0xf]
        %v2032 = vld [vmem:[%s4 + $0xf0] sm:$0xf]
        %v2033 = vld [vmem:[%s4 + $0xf4] sm:$0xf]
        %v2034 = vld [vmem:[%s4 + $0xf8] sm:$0xf]
        %v2035 = vld [vmem:[%s4 + $0xfc] sm:$0xf]
        %v2036 = vld [vmem:[%s4 + $0x100] sm:$0xf]
        %v2037 = vld [vmem:[%s4 + $0x104] sm:$0xf]
        %v2038 = vld [vmem:[%s4 + $0x108] sm:$0xf]
        %v2039 = vld [vmem:[%s4 + $0x10c] sm:$0xf]
        %v2040 = vld [vmem:[%s4 + $0x110] sm:$0xf]
        %v2041 = vld [vmem:[%s4 + $0x114] sm:$0xf]
        %v2042 = vld [vmem:[%s4 + $0x118] sm:$0xf]
        %v2043 = vld [vmem:[%s4 + $0x11c] sm:$0xf]
        %v2116 = vunpack.c.l.b16 %v1972
        %v2117 = vunpack.c.l.b16 %v1973
        %v2118 = vunpack.c.l.b16 %v1974
        %v2119 = vunpack.c.l.b16 %v1975
        %v2120 = vunpack.c.l.b16 %v1976
        %v2121 = vunpack.c.l.b16 %v1977
        %v2122 = vunpack.c.l.b16 %v1978
        %v2123 = vunpack.c.l.b16 %v1979
        %v2124 = vunpack.c.l.b16 %v1980
        %v2125 = vunpack.c.l.b16 %v1981
        %v2126 = vunpack.c.l.b16 %v1982
        %v2127 = vunpack.c.l.b16 %v1983
        %v2128 = vunpack.c.l.b16 %v1984
        %v2129 = vunpack.c.l.b16 %v1985
        %v2130 = vunpack.c.l.b16 %v1986
        %v2131 = vunpack.c.l.b16 %v1987
        %v2132 = vunpack.c.l.b16 %v1988
        %v2133 = vunpack.c.l.b16 %v1989
        %v2134 = vunpack.c.l.b16 %v1990
        %v2135 = vunpack.c.l.b16 %v1991
        %v2136 = vunpack.c.l.b16 %v1992
        %v2137 = vunpack.c.l.b16 %v1993
        %v2138 = vunpack.c.l.b16 %v1994
        %v2139 = vunpack.c.l.b16 %v1995
        %v2140 = vunpack.c.l.b16 %v1996
        %v2141 = vunpack.c.l.b16 %v1997
        %v2142 = vunpack.c.l.b16 %v1998
        %v2143 = vunpack.c.l.b16 %v1999
        %v2144 = vunpack.c.l.b16 %v2000
        %v2145 = vunpack.c.l.b16 %v2001
        %v2146 = vunpack.c.l.b16 %v2002
        %v2147 = vunpack.c.l.b16 %v2003
        %v2148 = vunpack.c.l.b16 %v2004
        %v2149 = vunpack.c.l.b16 %v2005
        %v2150 = vunpack.c.l.b16 %v2006
        %v2151 = vunpack.c.l.b16 %v2007
        %v2152 = vunpack.c.l.b16 %v2008
        %v2153 = vunpack.c.l.b16 %v2009
        %v2154 = vunpack.c.l.b16 %v2010
        %v2155 = vunpack.c.l.b16 %v2011
        %v2156 = vunpack.c.l.b16 %v2012
        %v2157 = vunpack.c.l.b16 %v2013
        %v2158 = vunpack.c.l.b16 %v2014
        %v2159 = vunpack.c.l.b16 %v2015
        %v2160 = vunpack.c.l.b16 %v2016
        %v2161 = vunpack.c.l.b16 %v2017
        %v2162 = vunpack.c.l.b16 %v2018
        %v2163 = vunpack.c.l.b16 %v2019
        %v2164 = vunpack.c.l.b16 %v2020
        %v2165 = vunpack.c.l.b16 %v2021
        %v2166 = vunpack.c.l.b16 %v2022
        %v2167 = vunpack.c.l.b16 %v2023
        %v2168 = vunpack.c.l.b16 %v2024
        %v2169 = vunpack.c.l.b16 %v2025
        %v2170 = vunpack.c.l.b16 %v2026
        %v2171 = vunpack.c.l.b16 %v2027
        %v2172 = vunpack.c.l.b16 %v2028
        %v2173 = vunpack.c.l.b16 %v2029
        %v2174 = vunpack.c.l.b16 %v2030
        %v2175 = vunpack.c.l.b16 %v2031
        %v2176 = vunpack.c.l.b16 %v2032
        %v2177 = vunpack.c.l.b16 %v2033
        %v2178 = vunpack.c.l.b16 %v2034
        %v2179 = vunpack.c.l.b16 %v2035
        %v2180 = vunpack.c.l.b16 %v2036
        %v2181 = vunpack.c.l.b16 %v2037
        %v2182 = vunpack.c.l.b16 %v2038
        %v2183 = vunpack.c.l.b16 %v2039
        %v2184 = vunpack.c.l.b16 %v2040
        %v2185 = vunpack.c.l.b16 %v2041
        %v2186 = vunpack.c.l.b16 %v2042
        %v2187 = vunpack.c.l.b16 %v2043
        %v2188 = vpack.c.b16 %v2117, %v2116
        %v2189 = vpack.c.b16 %v2119, %v2118
        %v2190 = vpack.c.b16 %v2121, %v2120
        %v2191 = vpack.c.b16 %v2123, %v2122
        %v2192 = vpack.c.b16 %v2125, %v2124
        %v2193 = vpack.c.b16 %v2127, %v2126
        %v2194 = vpack.c.b16 %v2129, %v2128
        %v2195 = vpack.c.b16 %v2131, %v2130
        %v2196 = vpack.c.b16 %v2133, %v2132
        %v2197 = vpack.c.b16 %v2135, %v2134
        %v2198 = vpack.c.b16 %v2137, %v2136
        %v2199 = vpack.c.b16 %v2139, %v2138
        %v2200 = vpack.c.b16 %v2141, %v2140
        %v2201 = vpack.c.b16 %v2143, %v2142
        %v2202 = vpack.c.b16 %v2145, %v2144
        %v2203 = vpack.c.b16 %v2147, %v2146
        %v2204 = vpack.c.b16 %v2149, %v2148
        %v2205 = vpack.c.b16 %v2151, %v2150
        %v2206 = vpack.c.b16 %v2153, %v2152
        %v2207 = vpack.c.b16 %v2155, %v2154
        %v2208 = vpack.c.b16 %v2157, %v2156
        %v2209 = vpack.c.b16 %v2159, %v2158
        %v2210 = vpack.c.b16 %v2161, %v2160
        %v2211 = vpack.c.b16 %v2163, %v2162
        %v2212 = vpack.c.b16 %v2165, %v2164
        %v2213 = vpack.c.b16 %v2167, %v2166
        %v2214 = vpack.c.b16 %v2169, %v2168
        %v2215 = vpack.c.b16 %v2171, %v2170
        %v2216 = vpack.c.b16 %v2173, %v2172
        %v2217 = vpack.c.b16 %v2175, %v2174
        %v2218 = vpack.c.b16 %v2177, %v2176
        %v2219 = vpack.c.b16 %v2179, %v2178
        %v2220 = vpack.c.b16 %v2181, %v2180
        %v2221 = vpack.c.b16 %v2183, %v2182
        %v2222 = vpack.c.b16 %v2185, %v2184
        %v2223 = vpack.c.b16 %v2187, %v2186
        %v2261 = vsel %vm374, %v1896, 0
        %v2264 = vsel %vm374, %v1901, 0
        %v2267 = vsel %vm374, %v1906, 0
        %v2270 = vsel %vm374, %v1911, 0
        %v2273 = vsel %vm374, %v1916, 0
        %v2276 = vsel %vm374, %v1921, 0
        %v2279 = vsel %vm374, %v1926, 0
        %v2282 = vsel %vm374, %v1931, 0
        %v2285 = vsel %vm374, %v1936, 0
        %v2288 = vsel %vm374, %v1941, 0
        %v2291 = vsel %vm374, %v1946, 0
        %v2294 = vsel %vm374, %v1951, 0
        %v2297 = vsel %vm374, %v1956, 0
        %v2300 = vsel %vm374, %v1961, 0
        %v2303 = vsel %vm374, %v1966, 0
        %v2306 = vsel %vm374, %v1971, 0
        %2308 = vmatprep.subr.bf16.mxu0 0
        %2309 = vmatpush1.bf16.msra.mxu0 %v2188
        %2310 = vmatprep.subr.bf16.mxu0 0
        %2311 = vmatpush1.bf16.msra.mxu0 %v2189
        %2312 = vmatprep.subr.bf16.mxu0 0
        %2313 = vmatpush1.bf16.msra.mxu0 %v2190
        %2314 = vmatprep.subr.bf16.mxu0 0
        %2315 = vmatpush1.bf16.msra.mxu0 %v2191
        %2316 = vmatprep.subr.bf16.mxu0 0
        %2317 = vmatpush1.bf16.msra.mxu0 %v2192
        %2318 = vmatprep.subr.bf16.mxu0 0
        %2319 = vmatpush1.bf16.msra.mxu0 %v2193
        %2320 = vmatprep.subr.bf16.mxu0 0
        %2321 = vmatpush1.bf16.msra.mxu0 %v2194
        %2322 = vmatprep.subr.bf16.mxu0 0
        %2323 = vmatpush1.bf16.msra.mxu0 %v2195
        %2324 = vmatprep.subr.bf16.mxu0 0
        %2325 = vmatpush1.bf16.msra.mxu0 %v2196
        %2326 = vmatprep.subr.bf16.mxu0 0
        %2327 = vmatpush1.bf16.msra.mxu0 %v2197
        %2328 = vmatprep.subr.bf16.mxu0 0
        %2329 = vmatpush1.bf16.msra.mxu0 %v2198
        %2330 = vmatprep.subr.bf16.mxu0 0
        %2331 = vmatpush1.bf16.msra.mxu0 %v2199
        %2332 = vmatprep.subr.bf16.mxu0 0
        %2333 = vmatpush1.bf16.msra.mxu0 %v2200
        %2334 = vmatprep.subr.bf16.mxu0 0
        %2335 = vmatpush1.bf16.msra.mxu0 %v2201
        %2336 = vmatprep.subr.bf16.mxu0 0
        %2337 = vmatpush1.bf16.msra.mxu0 %v2202
        %2338 = vmatprep.subr.bf16.mxu0 0
        %2339 = vmatpush1.bf16.msra.mxu0 %v2203
        %2340 = vmatprep.mubr.bf16.mxu0 %v1893
        %2341 = vmatmul.mubr.bf16.gmra.mrb[0].mxu0 %v1892
        %v2342 = vpop.f32.mrb[0].mxu0
        %v2343 = vadd.f32 0.0, %v2342
        %v2344 = vpop.f32.mrb[0].mxu0
        %v2345 = vpop.f32.mrb[0].mxu0
        %v2346 = vadd.f32 0.0, %v2345
        %v2347 = vpop.f32.mrb[0].mxu0
        %2348 = vmatprep.mubr.bf16.mxu0 %v1898
        %2349 = vmatmul.mubr.bf16.gmra.mrb[0].mxu0 %v1897
        %v2350 = vpop.f32.mrb[0].mxu0
        %v2351 = vadd.f32 0.0, %v2350
        %v2352 = vpop.f32.mrb[0].mxu0
        %v2353 = vpop.f32.mrb[0].mxu0
        %v2354 = vadd.f32 0.0, %v2353
        %v2355 = vpop.f32.mrb[0].mxu0
        %2356 = vmatprep.mubr.bf16.mxu0 %v1903
        %2357 = vmatmul.mubr.bf16.gmra.mrb[0].mxu0 %v1902
        %v2358 = vpop.f32.mrb[0].mxu0
        %v2359 = vadd.f32 0.0, %v2358
        %v2360 = vpop.f32.mrb[0].mxu0
        %v2361 = vpop.f32.mrb[0].mxu0
        %v2362 = vadd.f32 0.0, %v2361
        %v2363 = vpop.f32.mrb[0].mxu0
        %2364 = vmatprep.mubr.bf16.mxu0 %v1908
        %2365 = vmatmul.mubr.bf16.gmra.mrb[0].mxu0 %v1907
        %v2366 = vpop.f32.mrb[0].mxu0
        %v2367 = vadd.f32 0.0, %v2366
        %v2368 = vpop.f32.mrb[0].mxu0
        %v2369 = vpop.f32.mrb[0].mxu0
        %v2370 = vadd.f32 0.0, %v2369
        %v2371 = vpop.f32.mrb[0].mxu0
        %2372 = vmatprep.mubr.bf16.mxu0 %v1913
        %2373 = vmatmul.mubr.bf16.gmra.mrb[0].mxu0 %v1912
        %v2374 = vpop.f32.mrb[0].mxu0
        %v2375 = vadd.f32 0.0, %v2374
        %v2376 = vpop.f32.mrb[0].mxu0
        %v2377 = vpop.f32.mrb[0].mxu0
        %v2378 = vadd.f32 0.0, %v2377
        %v2379 = vpop.f32.mrb[0].mxu0
        %2380 = vmatprep.mubr.bf16.mxu0 %v1918
        %2381 = vmatmul.mubr.bf16.gmra.mrb[0].mxu0 %v1917
        %v2382 = vpop.f32.mrb[0].mxu0
        %v2383 = vadd.f32 0.0, %v2382
        %v2384 = vpop.f32.mrb[0].mxu0
        %v2385 = vpop.f32.mrb[0].mxu0
        %v2386 = vadd.f32 0.0, %v2385
        %v2387 = vpop.f32.mrb[0].mxu0
        %2388 = vmatprep.mubr.bf16.mxu0 %v1923
        %2389 = vmatmul.mubr.bf16.gmra.mrb[0].mxu0 %v1922
        %v2390 = vpop.f32.mrb[0].mxu0
        %v2391 = vadd.f32 0.0, %v2390
        %v2392 = vpop.f32.mrb[0].mxu0
        %v2393 = vpop.f32.mrb[0].mxu0
        %v2394 = vadd.f32 0.0, %v2393
        %v2395 = vpop.f32.mrb[0].mxu0
        %2396 = vmatprep.mubr.bf16.mxu0 %v1928
        %2397 = vmatmul.mubr.bf16.gmra.mrb[0].mxu0 %v1927
        %v2398 = vpop.f32.mrb[0].mxu0
        %v2399 = vadd.f32 0.0, %v2398
        %v2400 = vpop.f32.mrb[0].mxu0
        %v2401 = vpop.f32.mrb[0].mxu0
        %v2402 = vadd.f32 0.0, %v2401
        %v2403 = vpop.f32.mrb[0].mxu0
        %2404 = vmatprep.mubr.bf16.mxu0 %v1933
        %2405 = vmatmul.mubr.bf16.gmra.mrb[0].mxu0 %v1932
        %v2406 = vpop.f32.mrb[0].mxu0
        %v2407 = vadd.f32 0.0, %v2406
        %v2408 = vpop.f32.mrb[0].mxu0
        %v2409 = vpop.f32.mrb[0].mxu0
        %v2410 = vadd.f32 0.0, %v2409
        %v2411 = vpop.f32.mrb[0].mxu0
        %2412 = vmatprep.mubr.bf16.mxu0 %v1938
        %2413 = vmatmul.mubr.bf16.gmra.mrb[0].mxu0 %v1937
        %v2414 = vpop.f32.mrb[0].mxu0
        %v2415 = vadd.f32 0.0, %v2414
        %v2416 = vpop.f32.mrb[0].mxu0
        %v2417 = vpop.f32.mrb[0].mxu0
        %v2418 = vadd.f32 0.0, %v2417
        %v2419 = vpop.f32.mrb[0].mxu0
        %2420 = vmatprep.mubr.bf16.mxu0 %v1943
        %2421 = vmatmul.mubr.bf16.gmra.mrb[0].mxu0 %v1942
        %v2422 = vpop.f32.mrb[0].mxu0
        %v2423 = vadd.f32 0.0, %v2422
        %v2424 = vpop.f32.mrb[0].mxu0
        %v2425 = vpop.f32.mrb[0].mxu0
        %v2426 = vadd.f32 0.0, %v2425
        %v2427 = vpop.f32.mrb[0].mxu0
        %2428 = vmatprep.mubr.bf16.mxu0 %v1948
        %2429 = vmatmul.mubr.bf16.gmra.mrb[0].mxu0 %v1947
        %v2430 = vpop.f32.mrb[0].mxu0
        %v2431 = vadd.f32 0.0, %v2430
        %v2432 = vpop.f32.mrb[0].mxu0
        %v2433 = vpop.f32.mrb[0].mxu0
        %v2434 = vadd.f32 0.0, %v2433
        %v2435 = vpop.f32.mrb[0].mxu0
        %2436 = vmatprep.mubr.bf16.mxu0 %v1953
        %2437 = vmatmul.mubr.bf16.gmra.mrb[0].mxu0 %v1952
        %v2438 = vpop.f32.mrb[0].mxu0
        %v2439 = vadd.f32 0.0, %v2438
        %v2440 = vpop.f32.mrb[0].mxu0
        %v2441 = vpop.f32.mrb[0].mxu0
        %v2442 = vadd.f32 0.0, %v2441
        %v2443 = vpop.f32.mrb[0].mxu0
        %2444 = vmatprep.mubr.bf16.mxu0 %v1958
        %2445 = vmatmul.mubr.bf16.gmra.mrb[0].mxu0 %v1957
        %v2446 = vpop.f32.mrb[0].mxu0
        %v2447 = vadd.f32 0.0, %v2446
        %v2448 = vpop.f32.mrb[0].mxu0
        %v2449 = vpop.f32.mrb[0].mxu0
        %v2450 = vadd.f32 0.0, %v2449
        %v2451 = vpop.f32.mrb[0].mxu0
        %2452 = vmatprep.mubr.bf16.mxu0 %v1963
        %2453 = vmatmul.mubr.bf16.gmra.mrb[0].mxu0 %v1962
        %v2454 = vpop.f32.mrb[0].mxu0
        %v2455 = vadd.f32 0.0, %v2454
        %v2456 = vpop.f32.mrb[0].mxu0
        %v2457 = vpop.f32.mrb[0].mxu0
        %v2458 = vadd.f32 0.0, %v2457
        %v2459 = vpop.f32.mrb[0].mxu0
        %2460 = vmatprep.mubr.bf16.mxu0 %v1968
        %2461 = vmatmul.mubr.bf16.gmra.mrb[0].mxu0 %v1967
        %v2462 = vpop.f32.mrb[0].mxu0
        %v2463 = vadd.f32 0.0, %v2462
        %v2464 = vpop.f32.mrb[0].mxu0
        %v2465 = vpop.f32.mrb[0].mxu0
        %v2466 = vadd.f32 0.0, %v2465
        %v2467 = vpop.f32.mrb[0].mxu0
        %2468 = vdwg.mxu0
        %2469 = vmatprep.subr.bf16.mxu0 0
        %2470 = vmatpush1.bf16.msra.mxu0 %v2204
        %2471 = vmatprep.subr.bf16.mxu0 0
        %2472 = vmatpush1.bf16.msra.mxu0 %v2205
        %2473 = vmatprep.subr.bf16.mxu0 0
        %2474 = vmatpush1.bf16.msra.mxu0 %v2206
        %2475 = vmatprep.subr.bf16.mxu0 0
        %2476 = vmatpush1.bf16.msra.mxu0 %v2207
        %2477 = vmatprep.subr.bf16.mxu0 0
        %2478 = vmatpush1.bf16.msra.mxu0 %v2208
        %2479 = vmatprep.subr.bf16.mxu0 0
        %2480 = vmatpush1.bf16.msra.mxu0 %v2209
        %2481 = vmatprep.subr.bf16.mxu0 0
        %2482 = vmatpush1.bf16.msra.mxu0 %v2210
        %2483 = vmatprep.subr.bf16.mxu0 0
        %2484 = vmatpush1.bf16.msra.mxu0 %v2211
        %2485 = vmatprep.subr.bf16.mxu0 0
        %2486 = vmatpush1.bf16.msra.mxu0 %v2212
        %2487 = vmatprep.subr.bf16.mxu0 0
        %2488 = vmatpush1.bf16.msra.mxu0 %v2213
        %2489 = vmatprep.subr.bf16.mxu0 0
        %2490 = vmatpush1.bf16.msra.mxu0 %v2214
        %2491 = vmatprep.subr.bf16.mxu0 0
        %2492 = vmatpush1.bf16.msra.mxu0 %v2215
        %2493 = vmatprep.subr.bf16.mxu0 0
        %2494 = vmatpush1.bf16.msra.mxu0 %v2216
        %2495 = vmatprep.subr.bf16.mxu0 0
        %2496 = vmatpush1.bf16.msra.mxu0 %v2217
        %2497 = vmatprep.subr.bf16.mxu0 0
        %2498 = vmatpush1.bf16.msra.mxu0 %v2218
        %2499 = vmatprep.subr.bf16.mxu0 0
        %2500 = vmatpush1.bf16.msra.mxu0 %v2219
        %2501 = vmatprep.mubr.bf16.mxu0 %v1895
        %2502 = vmatmul.mubr.bf16.gmra.mrb[0].mxu0 %v1894
        %v2503 = vpop.f32.mrb[0].mxu0
        %v2504 = vadd.f32 %v2343, %v2503
        %v2505 = vpop.f32.mrb[0].mxu0
        %v2506 = vpop.f32.mrb[0].mxu0
        %v2507 = vadd.f32 %v2346, %v2506
        %v2508 = vpop.f32.mrb[0].mxu0
        %2509 = vmatprep.mubr.bf16.mxu0 %v1900
        %2510 = vmatmul.mubr.bf16.gmra.mrb[0].mxu0 %v1899
        %v2511 = vpop.f32.mrb[0].mxu0
        %v2512 = vadd.f32 %v2351, %v2511
        %v2513 = vpop.f32.mrb[0].mxu0
        %v2514 = vpop.f32.mrb[0].mxu0
        %v2515 = vadd.f32 %v2354, %v2514
        %v2516 = vpop.f32.mrb[0].mxu0
        %2517 = vmatprep.mubr.bf16.mxu0 %v1905
        %2518 = vmatmul.mubr.bf16.gmra.mrb[0].mxu0 %v1904
        %v2519 = vpop.f32.mrb[0].mxu0
        %v2520 = vadd.f32 %v2359, %v2519
        %v2521 = vpop.f32.mrb[0].mxu0
        %v2522 = vpop.f32.mrb[0].mxu0
        %v2523 = vadd.f32 %v2362, %v2522
        %v2524 = vpop.f32.mrb[0].mxu0
        %2525 = vmatprep.mubr.bf16.mxu0 %v1910
        %2526 = vmatmul.mubr.bf16.gmra.mrb[0].mxu0 %v1909
        %v2527 = vpop.f32.mrb[0].mxu0
        %v2528 = vadd.f32 %v2367, %v2527
        %v2529 = vpop.f32.mrb[0].mxu0
        %v2530 = vpop.f32.mrb[0].mxu0
        %v2531 = vadd.f32 %v2370, %v2530
        %v2532 = vpop.f32.mrb[0].mxu0
        %2533 = vmatprep.mubr.bf16.mxu0 %v1915
        %2534 = vmatmul.mubr.bf16.gmra.mrb[0].mxu0 %v1914
        %v2535 = vpop.f32.mrb[0].mxu0
        %v2536 = vadd.f32 %v2375, %v2535
        %v2537 = vpop.f32.mrb[0].mxu0
        %v2538 = vpop.f32.mrb[0].mxu0
        %v2539 = vadd.f32 %v2378, %v2538
        %v2540 = vpop.f32.mrb[0].mxu0
        %2541 = vmatprep.mubr.bf16.mxu0 %v1920
        %2542 = vmatmul.mubr.bf16.gmra.mrb[0].mxu0 %v1919
        %v2543 = vpop.f32.mrb[0].mxu0
        %v2544 = vadd.f32 %v2383, %v2543
        %v2545 = vpop.f32.mrb[0].mxu0
        %v2546 = vpop.f32.mrb[0].mxu0
        %v2547 = vadd.f32 %v2386, %v2546
        %v2548 = vpop.f32.mrb[0].mxu0
        %2549 = vmatprep.mubr.bf16.mxu0 %v1925
        %2550 = vmatmul.mubr.bf16.gmra.mrb[0].mxu0 %v1924
        %v2551 = vpop.f32.mrb[0].mxu0
        %v2552 = vadd.f32 %v2391, %v2551
        %v2553 = vpop.f32.mrb[0].mxu0
        %v2554 = vpop.f32.mrb[0].mxu0
        %v2555 = vadd.f32 %v2394, %v2554
        %v2556 = vpop.f32.mrb[0].mxu0
        %2557 = vmatprep.mubr.bf16.mxu0 %v1930
        %2558 = vmatmul.mubr.bf16.gmra.mrb[0].mxu0 %v1929
        %v2559 = vpop.f32.mrb[0].mxu0
        %v2560 = vadd.f32 %v2399, %v2559
        %v2561 = vpop.f32.mrb[0].mxu0
        %v2562 = vpop.f32.mrb[0].mxu0
        %v2563 = vadd.f32 %v2402, %v2562
        %v2564 = vpop.f32.mrb[0].mxu0
        %2565 = vmatprep.mubr.bf16.mxu0 %v1935
        %2566 = vmatmul.mubr.bf16.gmra.mrb[0].mxu0 %v1934
        %v2567 = vpop.f32.mrb[0].mxu0
        %v2568 = vadd.f32 %v2407, %v2567
        %v2569 = vpop.f32.mrb[0].mxu0
        %v2570 = vpop.f32.mrb[0].mxu0
        %v2571 = vadd.f32 %v2410, %v2570
        %v2572 = vpop.f32.mrb[0].mxu0
        %2573 = vmatprep.mubr.bf16.mxu0 %v1940
        %2574 = vmatmul.mubr.bf16.gmra.mrb[0].mxu0 %v1939
        %v2575 = vpop.f32.mrb[0].mxu0
        %v2576 = vadd.f32 %v2415, %v2575
        %v2577 = vpop.f32.mrb[0].mxu0
        %v2578 = vpop.f32.mrb[0].mxu0
        %v2579 = vadd.f32 %v2418, %v2578
        %v2580 = vpop.f32.mrb[0].mxu0
        %2581 = vmatprep.mubr.bf16.mxu0 %v1945
        %2582 = vmatmul.mubr.bf16.gmra.mrb[0].mxu0 %v1944
        %v2583 = vpop.f32.mrb[0].mxu0
        %v2584 = vadd.f32 %v2423, %v2583
        %v2585 = vpop.f32.mrb[0].mxu0
        %v2586 = vpop.f32.mrb[0].mxu0
        %v2587 = vadd.f32 %v2426, %v2586
        %v2588 = vpop.f32.mrb[0].mxu0
        %2589 = vmatprep.mubr.bf16.mxu0 %v1950
        %2590 = vmatmul.mubr.bf16.gmra.mrb[0].mxu0 %v1949
        %v2591 = vpop.f32.mrb[0].mxu0
        %v2592 = vadd.f32 %v2431, %v2591
        %v2593 = vpop.f32.mrb[0].mxu0
        %v2594 = vpop.f32.mrb[0].mxu0
        %v2595 = vadd.f32 %v2434, %v2594
        %v2596 = vpop.f32.mrb[0].mxu0
        %2597 = vmatprep.mubr.bf16.mxu0 %v1955
        %2598 = vmatmul.mubr.bf16.gmra.mrb[0].mxu0 %v1954
        %v2599 = vpop.f32.mrb[0].mxu0
        %v2600 = vadd.f32 %v2439, %v2599
        %v2601 = vpop.f32.mrb[0].mxu0
        %v2602 = vpop.f32.mrb[0].mxu0
        %v2603 = vadd.f32 %v2442, %v2602
        %v2604 = vpop.f32.mrb[0].mxu0
        %2605 = vmatprep.mubr.bf16.mxu0 %v1960
        %2606 = vmatmul.mubr.bf16.gmra.mrb[0].mxu0 %v1959
        %v2607 = vpop.f32.mrb[0].mxu0
        %v2608 = vadd.f32 %v2447, %v2607
        %v2609 = vpop.f32.mrb[0].mxu0
        %v2610 = vpop.f32.mrb[0].mxu0
        %v2611 = vadd.f32 %v2450, %v2610
        %v2612 = vpop.f32.mrb[0].mxu0
        %2613 = vmatprep.mubr.bf16.mxu0 %v1965
        %2614 = vmatmul.mubr.bf16.gmra.mrb[0].mxu0 %v1964
        %v2615 = vpop.f32.mrb[0].mxu0
        %v2616 = vadd.f32 %v2455, %v2615
        %v2617 = vpop.f32.mrb[0].mxu0
        %v2618 = vpop.f32.mrb[0].mxu0
        %v2619 = vadd.f32 %v2458, %v2618
        %v2620 = vpop.f32.mrb[0].mxu0
        %2621 = vmatprep.mubr.bf16.mxu0 %v1970
        %2622 = vmatmul.mubr.bf16.gmra.mrb[0].mxu0 %v1969
        %v2623 = vpop.f32.mrb[0].mxu0
        %v2624 = vadd.f32 %v2463, %v2623
        %v2625 = vpop.f32.mrb[0].mxu0
        %v2626 = vpop.f32.mrb[0].mxu0
        %v2627 = vadd.f32 %v2466, %v2626
        %v2628 = vpop.f32.mrb[0].mxu0
        %2629 = vdwg.mxu0
        %2630 = vmatprep.subr.bf16.mxu0 0
        %2631 = vmatpush1.bf16.msra.mxu0 %v2220
        %2632 = vmatprep.subr.bf16.mxu0 0
        %2633 = vmatpush1.bf16.msra.mxu0 %v2221
        %2634 = vmatprep.subr.bf16.mxu0 0
        %2635 = vmatpush1.bf16.msra.mxu0 %v2222
        %2636 = vmatprep.subr.bf16.mxu0 0
        %2637 = vmatpush1.bf16.msra.mxu0 %v2223
        %2638 = vmatprep.subr.bf16.mxu0 0
        %2639 = vmatpush1.bf16.msra.mxu0 0
        %2640 = vmatprep.subr.bf16.mxu0 0
        %2641 = vmatpush1.bf16.msra.mxu0 0
        %2642 = vmatprep.subr.bf16.mxu0 0
        %2643 = vmatpush1.bf16.msra.mxu0 0
        %2644 = vmatprep.subr.bf16.mxu0 0
        %2645 = vmatpush1.bf16.msra.mxu0 0
        %2646 = vmatprep.subr.bf16.mxu0 0
        %2647 = vmatpush1.bf16.msra.mxu0 0
        %2648 = vmatprep.subr.bf16.mxu0 0
        %2649 = vmatpush1.bf16.msra.mxu0 0
        %2650 = vmatprep.subr.bf16.mxu0 0
        %2651 = vmatpush1.bf16.msra.mxu0 0
        %2652 = vmatprep.subr.bf16.mxu0 0
        %2653 = vmatpush1.bf16.msra.mxu0 0
        %2654 = vmatprep.subr.bf16.mxu0 0
        %2655 = vmatpush1.bf16.msra.mxu0 0
        %2656 = vmatprep.subr.bf16.mxu0 0
        %2657 = vmatpush1.bf16.msra.mxu0 0
        %2658 = vmatprep.subr.bf16.mxu0 0
        %2659 = vmatpush1.bf16.msra.mxu0 0
        %2660 = vmatprep.subr.bf16.mxu0 0
        %2661 = vmatpush1.bf16.msra.mxu0 0
        %2662 = vmatprep.mubr.bf16.mxu0 0
        %2663 = vmatmul.mubr.bf16.gmra.mrb[0].mxu0 %v2261
        %v2664 = vpop.f32.mrb[0].mxu0
        %v2665 = vadd.f32 %v2504, %v2664
        %v2666 = vpop.f32.mrb[0].mxu0
        %v2667 = vpop.f32.mrb[0].mxu0
        %v2668 = vadd.f32 %v2507, %v2667
        %v2669 = vpop.f32.mrb[0].mxu0
        %2670 = vmatprep.mubr.bf16.mxu0 0
        %2671 = vmatmul.mubr.bf16.gmra.mrb[0].mxu0 %v2264
        %v2672 = vpop.f32.mrb[0].mxu0
        %v2673 = vadd.f32 %v2512, %v2672
        %v2674 = vpop.f32.mrb[0].mxu0
        %v2675 = vpop.f32.mrb[0].mxu0
        %v2676 = vadd.f32 %v2515, %v2675
        %v2677 = vpop.f32.mrb[0].mxu0
        %2678 = vmatprep.mubr.bf16.mxu0 0
        %2679 = vmatmul.mubr.bf16.gmra.mrb[0].mxu0 %v2267
        %v2680 = vpop.f32.mrb[0].mxu0
        %v2681 = vadd.f32 %v2520, %v2680
        %v2682 = vpop.f32.mrb[0].mxu0
        %v2683 = vpop.f32.mrb[0].mxu0
        %v2684 = vadd.f32 %v2523, %v2683
        %v2685 = vpop.f32.mrb[0].mxu0
        %2686 = vmatprep.mubr.bf16.mxu0 0
        %2687 = vmatmul.mubr.bf16.gmra.mrb[0].mxu0 %v2270
        %v2688 = vpop.f32.mrb[0].mxu0
        %v2689 = vadd.f32 %v2528, %v2688
        %v2690 = vpop.f32.mrb[0].mxu0
        %v2691 = vpop.f32.mrb[0].mxu0
        %v2692 = vadd.f32 %v2531, %v2691
        %v2693 = vpop.f32.mrb[0].mxu0
        %2694 = vmatprep.mubr.bf16.mxu0 0
        %2695 = vmatmul.mubr.bf16.gmra.mrb[0].mxu0 %v2273
        %v2696 = vpop.f32.mrb[0].mxu0
        %v2697 = vadd.f32 %v2536, %v2696
        %v2698 = vpop.f32.mrb[0].mxu0
        %v2699 = vpop.f32.mrb[0].mxu0
        %v2700 = vadd.f32 %v2539, %v2699
        %v2701 = vpop.f32.mrb[0].mxu0
        %2702 = vmatprep.mubr.bf16.mxu0 0
        %2703 = vmatmul.mubr.bf16.gmra.mrb[0].mxu0 %v2276
        %v2704 = vpop.f32.mrb[0].mxu0
        %v2705 = vadd.f32 %v2544, %v2704
        %v2706 = vpop.f32.mrb[0].mxu0
        %v2707 = vpop.f32.mrb[0].mxu0
        %v2708 = vadd.f32 %v2547, %v2707
        %v2709 = vpop.f32.mrb[0].mxu0
        %2710 = vmatprep.mubr.bf16.mxu0 0
        %2711 = vmatmul.mubr.bf16.gmra.mrb[0].mxu0 %v2279
        %v2712 = vpop.f32.mrb[0].mxu0
        %v2713 = vadd.f32 %v2552, %v2712
        %v2714 = vpop.f32.mrb[0].mxu0
        %v2715 = vpop.f32.mrb[0].mxu0
        %v2716 = vadd.f32 %v2555, %v2715
        %v2717 = vpop.f32.mrb[0].mxu0
        %2718 = vmatprep.mubr.bf16.mxu0 0
        %2719 = vmatmul.mubr.bf16.gmra.mrb[0].mxu0 %v2282
        %v2720 = vpop.f32.mrb[0].mxu0
        %v2721 = vadd.f32 %v2560, %v2720
        %v2722 = vpop.f32.mrb[0].mxu0
        %v2723 = vpop.f32.mrb[0].mxu0
        %v2724 = vadd.f32 %v2563, %v2723
        %v2725 = vpop.f32.mrb[0].mxu0
        %2726 = vmatprep.mubr.bf16.mxu0 0
        %2727 = vmatmul.mubr.bf16.gmra.mrb[0].mxu0 %v2285
        %v2728 = vpop.f32.mrb[0].mxu0
        %v2729 = vadd.f32 %v2568, %v2728
        %v2730 = vpop.f32.mrb[0].mxu0
        %v2731 = vpop.f32.mrb[0].mxu0
        %v2732 = vadd.f32 %v2571, %v2731
        %v2733 = vpop.f32.mrb[0].mxu0
        %2734 = vmatprep.mubr.bf16.mxu0 0
        %2735 = vmatmul.mubr.bf16.gmra.mrb[0].mxu0 %v2288
        %v2736 = vpop.f32.mrb[0].mxu0
        %v2737 = vadd.f32 %v2576, %v2736
        %v2738 = vpop.f32.mrb[0].mxu0
        %v2739 = vpop.f32.mrb[0].mxu0
        %v2740 = vadd.f32 %v2579, %v2739
        %v2741 = vpop.f32.mrb[0].mxu0
        %2742 = vmatprep.mubr.bf16.mxu0 0
        %2743 = vmatmul.mubr.bf16.gmra.mrb[0].mxu0 %v2291
        %v2744 = vpop.f32.mrb[0].mxu0
        %v2745 = vadd.f32 %v2584, %v2744
        %v2746 = vpop.f32.mrb[0].mxu0
        %v2747 = vpop.f32.mrb[0].mxu0
        %v2748 = vadd.f32 %v2587, %v2747
        %v2749 = vpop.f32.mrb[0].mxu0
        %2750 = vmatprep.mubr.bf16.mxu0 0
        %2751 = vmatmul.mubr.bf16.gmra.mrb[0].mxu0 %v2294
        %v2752 = vpop.f32.mrb[0].mxu0
        %v2753 = vadd.f32 %v2592, %v2752
        %v2754 = vpop.f32.mrb[0].mxu0
        %v2755 = vpop.f32.mrb[0].mxu0
        %v2756 = vadd.f32 %v2595, %v2755
        %v2757 = vpop.f32.mrb[0].mxu0
        %2758 = vmatprep.mubr.bf16.mxu0 0
        %2759 = vmatmul.mubr.bf16.gmra.mrb[0].mxu0 %v2297
        %v2760 = vpop.f32.mrb[0].mxu0
        %v2761 = vadd.f32 %v2600, %v2760
        %v2762 = vpop.f32.mrb[0].mxu0
        %v2763 = vpop.f32.mrb[0].mxu0
        %v2764 = vadd.f32 %v2603, %v2763
        %v2765 = vpop.f32.mrb[0].mxu0
        %2766 = vmatprep.mubr.bf16.mxu0 0
        %2767 = vmatmul.mubr.bf16.gmra.mrb[0].mxu0 %v2300
        %v2768 = vpop.f32.mrb[0].mxu0
        %v2769 = vadd.f32 %v2608, %v2768
        %v2770 = vpop.f32.mrb[0].mxu0
        %v2771 = vpop.f32.mrb[0].mxu0
        %v2772 = vadd.f32 %v2611, %v2771
        %v2773 = vpop.f32.mrb[0].mxu0
        %2774 = vmatprep.mubr.bf16.mxu0 0
        %2775 = vmatmul.mubr.bf16.gmra.mrb[0].mxu0 %v2303
        %v2776 = vpop.f32.mrb[0].mxu0
        %v2777 = vadd.f32 %v2616, %v2776
        %v2778 = vpop.f32.mrb[0].mxu0
        %v2779 = vpop.f32.mrb[0].mxu0
        %v2780 = vadd.f32 %v2619, %v2779
        %v2781 = vpop.f32.mrb[0].mxu0
        %2782 = vmatprep.mubr.bf16.mxu0 0
        %2783 = vmatmul.mubr.bf16.gmra.mrb[0].mxu0 %v2306
        %v2784 = vpop.f32.mrb[0].mxu0
        %v2785 = vadd.f32 %v2624, %v2784
        %v2786 = vpop.f32.mrb[0].mxu0
        %v2787 = vpop.f32.mrb[0].mxu0
        %v2788 = vadd.f32 %v2627, %v2787
        %v2789 = vpop.f32.mrb[0].mxu0
        %2790 = vdwg.mxu0
        %v2791 = vld [vmem:[%s5] sm:$0x1]
        %v2792 = vld [vmem:[%s6] sm:$0x1]
        %v2793 = vld [vmem:[%s7] sm:$0xff]
        %v2794 = vld [vmem:[%s7 + $0x8] sm:$0xff]
        %v2795 = vld [vmem:[%s7 + $0x10] sm:$0xff]
        %v2796 = vld [vmem:[%s7 + $0x18] sm:$0xff]
        %v2797 = vld [vmem:[%s7 + $0x20] sm:$0xff]
        %v2798 = vld [vmem:[%s7 + $0x28] sm:$0xff]
        %v2799 = vld [vmem:[%s7 + $0x30] sm:$0xff]
        %v2800 = vld [vmem:[%s7 + $0x38] sm:$0xff]
        %v2801 = vsel %vm374, %v2665, 0.0
        %v2802 = vsel %vm374, %v2668, 0.0
        %v2803 = vadd.f32 %v2801, %v2802
        %v2804 = vsel %vm374, %v2673, 0.0
        %v2805 = vadd.f32 %v2803, %v2804
        %v2806 = vsel %vm374, %v2676, 0.0
        %v2807 = vadd.f32 %v2805, %v2806
        %v2808 = vsel %vm374, %v2681, 0.0
        %v2809 = vadd.f32 %v2807, %v2808
        %v2810 = vsel %vm374, %v2684, 0.0
        %v2811 = vadd.f32 %v2809, %v2810
        %v2812 = vsel %vm374, %v2689, 0.0
        %v2813 = vadd.f32 %v2811, %v2812
        %v2814 = vsel %vm374, %v2692, 0.0
        %v2815 = vadd.f32 %v2813, %v2814
        %v2816 = vsel %vm374, %v2697, 0.0
        %v2817 = vadd.f32 %v2815, %v2816
        %v2818 = vsel %vm374, %v2700, 0.0
        %v2819 = vadd.f32 %v2817, %v2818
        %v2820 = vsel %vm374, %v2705, 0.0
        %v2821 = vadd.f32 %v2819, %v2820
        %v2822 = vsel %vm374, %v2708, 0.0
        %v2823 = vadd.f32 %v2821, %v2822
        %v2824 = vsel %vm374, %v2713, 0.0
        %v2825 = vadd.f32 %v2823, %v2824
        %v2826 = vsel %vm374, %v2716, 0.0
        %v2827 = vadd.f32 %v2825, %v2826
        %v2828 = vsel %vm374, %v2721, 0.0
        %v2829 = vadd.f32 %v2827, %v2828
        %v2830 = vsel %vm374, %v2724, 0.0
        %v2831 = vadd.f32 %v2829, %v2830
        %v2832 = vsel %vm374, %v2729, 0.0
        %v2833 = vadd.f32 %v2831, %v2832
        %v2834 = vsel %vm374, %v2732, 0.0
        %v2835 = vadd.f32 %v2833, %v2834
        %v2836 = vsel %vm374, %v2737, 0.0
        %v2837 = vadd.f32 %v2835, %v2836
        %v2838 = vsel %vm374, %v2740, 0.0
        %v2839 = vadd.f32 %v2837, %v2838
        %v2840 = vsel %vm374, %v2745, 0.0
        %v2841 = vadd.f32 %v2839, %v2840
        %v2842 = vsel %vm374, %v2748, 0.0
        %v2843 = vadd.f32 %v2841, %v2842
        %v2844 = vsel %vm374, %v2753, 0.0
        %v2845 = vadd.f32 %v2843, %v2844
        %v2846 = vsel %vm374, %v2756, 0.0
        %v2847 = vadd.f32 %v2845, %v2846
        %v2848 = vsel %vm374, %v2761, 0.0
        %v2849 = vadd.f32 %v2847, %v2848
        %v2850 = vsel %vm374, %v2764, 0.0
        %v2851 = vadd.f32 %v2849, %v2850
        %v2852 = vsel %vm374, %v2769, 0.0
        %v2853 = vadd.f32 %v2851, %v2852
        %v2854 = vsel %vm374, %v2772, 0.0
        %v2855 = vadd.f32 %v2853, %v2854
        %v2856 = vsel %vm374, %v2777, 0.0
        %v2857 = vadd.f32 %v2855, %v2856
        %v2858 = vsel %vm374, %v2780, 0.0
        %v2859 = vadd.f32 %v2857, %v2858
        %v2860 = vsel %vm374, %v2785, 0.0
        %v2861 = vadd.f32 %v2859, %v2860
        %v2862 = vsel %vm374, %v2788, 0.0
        %v2863 = vadd.f32 %v2861, %v2862
        %v2864 = vrot.slane %v2863, 4
        %v2865 = vadd.f32 %v2863, %v2864
        %v2866 = vrot.slane %v2865, 2
        %v2867 = vadd.f32 %v2865, %v2866
        %v2868 = vrot.slane %v2867, 1
        %v2869 = vadd.f32 %v2867, %v2868
        %v2871 = vsel %vm374, %v2869, 0
        %2873 = vmatprep.subr.mxu0 0.0
        %2874 = vmatpush1.msra.mxu0 %v2793
        %2875 = vmatprep.subr.mxu0 0.0
        %2876 = vmatpush1.msra.mxu0 %v2794
        %2877 = vmatprep.subr.mxu0 0.0
        %2878 = vmatpush1.msra.mxu0 %v2795
        %2879 = vmatprep.subr.mxu0 0.0
        %2880 = vmatpush1.msra.mxu0 %v2796
        %2881 = vmatprep.subr.mxu0 0.0
        %2882 = vmatpush1.msra.mxu0 %v2797
        %2883 = vmatprep.subr.mxu0 0.0
        %2884 = vmatpush1.msra.mxu0 %v2798
        %2885 = vmatprep.subr.mxu0 0.0
        %2886 = vmatpush1.msra.mxu0 %v2799
        %2887 = vmatprep.subr.mxu0 0.0
        %2888 = vmatpush1.msra.mxu0 %v2800
        %2889 = vmatprep.subr.mxu0 0.0
        %2890 = vmatpush1.msra.mxu0 0.0
        %2891 = vmatprep.subr.mxu0 0.0
        %2892 = vmatpush1.msra.mxu0 0.0
        %2893 = vmatprep.subr.mxu0 0.0
        %2894 = vmatpush1.msra.mxu0 0.0
        %2895 = vmatprep.subr.mxu0 0.0
        %2896 = vmatpush1.msra.mxu0 0.0
        %2897 = vmatprep.subr.mxu0 0.0
        %2898 = vmatpush1.msra.mxu0 0.0
        %2899 = vmatprep.subr.mxu0 0.0
        %2900 = vmatpush1.msra.mxu0 0.0
        %2901 = vmatprep.subr.mxu0 0.0
        %2902 = vmatpush1.msra.mxu0 0.0
        %2903 = vmatprep.subr.mxu0 0.0
        %2904 = vmatpush1.msra.mxu0 0.0
        %2905 = vmatprep.subr.mxu0 0.0
        %2906 = vmatpush1.msra.mxu0 0.0
        %2907 = vmatprep.subr.mxu0 0.0
        %2908 = vmatpush1.msra.mxu0 0.0
        %2909 = vmatprep.subr.mxu0 0.0
        %2910 = vmatpush1.msra.mxu0 0.0
        %2911 = vmatprep.subr.mxu0 0.0
        %2912 = vmatpush1.msra.mxu0 0.0
        %2913 = vmatprep.subr.mxu0 0.0
        %2914 = vmatpush1.msra.mxu0 0.0
        %2915 = vmatprep.subr.mxu0 0.0
        %2916 = vmatpush1.msra.mxu0 0.0
        %2917 = vmatprep.subr.mxu0 0.0
        %2918 = vmatpush1.msra.mxu0 0.0
        %2919 = vmatprep.subr.mxu0 0.0
        %2920 = vmatpush1.msra.mxu0 0.0
        %2921 = vmatprep.subr.mxu0 0.0
        %2922 = vmatpush1.msra.mxu0 0.0
        %2923 = vmatprep.subr.mxu0 0.0
        %2924 = vmatpush1.msra.mxu0 0.0
        %2925 = vmatprep.subr.mxu0 0.0
        %2926 = vmatpush1.msra.mxu0 0.0
        %2927 = vmatprep.subr.mxu0 0.0
        %2928 = vmatpush1.msra.mxu0 0.0
        %2929 = vmatprep.subr.mxu0 0.0
        %2930 = vmatpush1.msra.mxu0 0.0
        %2931 = vmatprep.subr.mxu0 0.0
        %2932 = vmatpush1.msra.mxu0 0.0
        %2933 = vmatprep.subr.mxu0 0.0
        %2934 = vmatpush1.msra.mxu0 0.0
        %2935 = vmatprep.subr.mxu0 0.0
        %2936 = vmatpush1.msra.mxu0 0.0
        %2937 = vmatprep.mubr.f32.mxu0 0.0
        %2938 = vmatmul.mubr.f32.gmra.mrb[0].mxu0 %v2871
        %v2939 = vpop.f32.mrb[0].mxu0
        %v2940 = vadd.f32 0.0, %v2939
        %v2941 = vpop.f32.mrb[0].mxu0
        %2942 = vdwg.mxu0
        %v2943 = vmul.f32 %v2940, 0.001953125
        %v2944 = vlaneseq
        %v2945 = vshrl.u32 %v2944, 7
        %v2946 = vsub.s32 0, %v2945
        %v2947 = vrot.slane %v2943, %v2946
        %v2948 = vsub.f32 %v2665, %v2947
        %v2949 = vsub.f32 %v2668, %v2947
        %v2950 = vsub.f32 %v2673, %v2947
        %v2951 = vsub.f32 %v2676, %v2947
        %v2952 = vsub.f32 %v2681, %v2947
        %v2953 = vsub.f32 %v2684, %v2947
        %v2954 = vsub.f32 %v2689, %v2947
        %v2955 = vsub.f32 %v2692, %v2947
        %v2956 = vsub.f32 %v2697, %v2947
        %v2957 = vsub.f32 %v2700, %v2947
        %v2958 = vsub.f32 %v2705, %v2947
        %v2959 = vsub.f32 %v2708, %v2947
        %v2960 = vsub.f32 %v2713, %v2947
        %v2961 = vsub.f32 %v2716, %v2947
        %v2962 = vsub.f32 %v2721, %v2947
        %v2963 = vsub.f32 %v2724, %v2947
        %v2964 = vsub.f32 %v2729, %v2947
        %v2965 = vsub.f32 %v2732, %v2947
        %v2966 = vsub.f32 %v2737, %v2947
        %v2967 = vsub.f32 %v2740, %v2947
        %v2968 = vsub.f32 %v2745, %v2947
        %v2969 = vsub.f32 %v2748, %v2947
        %v2970 = vsub.f32 %v2753, %v2947
        %v2971 = vsub.f32 %v2756, %v2947
        %v2972 = vsub.f32 %v2761, %v2947
        %v2973 = vsub.f32 %v2764, %v2947
        %v2974 = vsub.f32 %v2769, %v2947
        %v2975 = vsub.f32 %v2772, %v2947
        %v2976 = vsub.f32 %v2777, %v2947
        %v2977 = vsub.f32 %v2780, %v2947
        %v2978 = vsub.f32 %v2785, %v2947
        %v2979 = vsub.f32 %v2788, %v2947
        %v2980 = vmul.f32 %v2948, %v2948
        %v2981 = vmul.f32 %v2949, %v2949
        %v2982 = vmul.f32 %v2950, %v2950
        %v2983 = vmul.f32 %v2951, %v2951
        %v2984 = vmul.f32 %v2952, %v2952
        %v2985 = vmul.f32 %v2953, %v2953
        %v2986 = vmul.f32 %v2954, %v2954
        %v2987 = vmul.f32 %v2955, %v2955
        %v2988 = vmul.f32 %v2956, %v2956
        %v2989 = vmul.f32 %v2957, %v2957
        %v2990 = vmul.f32 %v2958, %v2958
        %v2991 = vmul.f32 %v2959, %v2959
        %v2992 = vmul.f32 %v2960, %v2960
        %v2993 = vmul.f32 %v2961, %v2961
        %v2994 = vmul.f32 %v2962, %v2962
        %v2995 = vmul.f32 %v2963, %v2963
        %v2996 = vmul.f32 %v2964, %v2964
        %v2997 = vmul.f32 %v2965, %v2965
        %v2998 = vmul.f32 %v2966, %v2966
        %v2999 = vmul.f32 %v2967, %v2967
        %v3000 = vmul.f32 %v2968, %v2968
        %v3001 = vmul.f32 %v2969, %v2969
        %v3002 = vmul.f32 %v2970, %v2970
        %v3003 = vmul.f32 %v2971, %v2971
        %v3004 = vmul.f32 %v2972, %v2972
        %v3005 = vmul.f32 %v2973, %v2973
        %v3006 = vmul.f32 %v2974, %v2974
        %v3007 = vmul.f32 %v2975, %v2975
        %v3008 = vmul.f32 %v2976, %v2976
        %v3009 = vmul.f32 %v2977, %v2977
        %v3010 = vmul.f32 %v2978, %v2978
        %v3011 = vmul.f32 %v2979, %v2979
        %v3012 = vsel %vm374, %v2980, 0.0
        %v3013 = vsel %vm374, %v2981, 0.0
        %v3014 = vadd.f32 %v3012, %v3013
        %v3015 = vsel %vm374, %v2982, 0.0
        %v3016 = vadd.f32 %v3014, %v3015
        %v3017 = vsel %vm374, %v2983, 0.0
        %v3018 = vadd.f32 %v3016, %v3017
        %v3019 = vsel %vm374, %v2984, 0.0
        %v3020 = vadd.f32 %v3018, %v3019
        %v3021 = vsel %vm374, %v2985, 0.0
        %v3022 = vadd.f32 %v3020, %v3021
        %v3023 = vsel %vm374, %v2986, 0.0
        %v3024 = vadd.f32 %v3022, %v3023
        %v3025 = vsel %vm374, %v2987, 0.0
        %v3026 = vadd.f32 %v3024, %v3025
        %v3027 = vsel %vm374, %v2988, 0.0
        %v3028 = vadd.f32 %v3026, %v3027
        %v3029 = vsel %vm374, %v2989, 0.0
        %v3030 = vadd.f32 %v3028, %v3029
        %v3031 = vsel %vm374, %v2990, 0.0
        %v3032 = vadd.f32 %v3030, %v3031
        %v3033 = vsel %vm374, %v2991, 0.0
        %v3034 = vadd.f32 %v3032, %v3033
        %v3035 = vsel %vm374, %v2992, 0.0
        %v3036 = vadd.f32 %v3034, %v3035
        %v3037 = vsel %vm374, %v2993, 0.0
        %v3038 = vadd.f32 %v3036, %v3037
        %v3039 = vsel %vm374, %v2994, 0.0
        %v3040 = vadd.f32 %v3038, %v3039
        %v3041 = vsel %vm374, %v2995, 0.0
        %v3042 = vadd.f32 %v3040, %v3041
        %v3043 = vsel %vm374, %v2996, 0.0
        %v3044 = vadd.f32 %v3042, %v3043
        %v3045 = vsel %vm374, %v2997, 0.0
        %v3046 = vadd.f32 %v3044, %v3045
        %v3047 = vsel %vm374, %v2998, 0.0
        %v3048 = vadd.f32 %v3046, %v3047
        %v3049 = vsel %vm374, %v2999, 0.0
        %v3050 = vadd.f32 %v3048, %v3049
        %v3051 = vsel %vm374, %v3000, 0.0
        %v3052 = vadd.f32 %v3050, %v3051
        %v3053 = vsel %vm374, %v3001, 0.0
        %v3054 = vadd.f32 %v3052, %v3053
        %v3055 = vsel %vm374, %v3002, 0.0
        %v3056 = vadd.f32 %v3054, %v3055
        %v3057 = vsel %vm374, %v3003, 0.0
        %v3058 = vadd.f32 %v3056, %v3057
        %v3059 = vsel %vm374, %v3004, 0.0
        %v3060 = vadd.f32 %v3058, %v3059
        %v3061 = vsel %vm374, %v3005, 0.0
        %v3062 = vadd.f32 %v3060, %v3061
        %v3063 = vsel %vm374, %v3006, 0.0
        %v3064 = vadd.f32 %v3062, %v3063
        %v3065 = vsel %vm374, %v3007, 0.0
        %v3066 = vadd.f32 %v3064, %v3065
        %v3067 = vsel %vm374, %v3008, 0.0
        %v3068 = vadd.f32 %v3066, %v3067
        %v3069 = vsel %vm374, %v3009, 0.0
        %v3070 = vadd.f32 %v3068, %v3069
        %v3071 = vsel %vm374, %v3010, 0.0
        %v3072 = vadd.f32 %v3070, %v3071
        %v3073 = vsel %vm374, %v3011, 0.0
        %v3074 = vadd.f32 %v3072, %v3073
        %v3075 = vrot.slane %v3074, 4
        %v3076 = vadd.f32 %v3074, %v3075
        %v3077 = vrot.slane %v3076, 2
        %v3078 = vadd.f32 %v3076, %v3077
        %v3079 = vrot.slane %v3078, 1
        %v3080 = vadd.f32 %v3078, %v3079
        %v3082 = vsel %vm374, %v3080, 0
        %3084 = vmatprep.subr.mxu0 0.0
        %3085 = vmatpush1.msra.mxu0 %v2793
        %3086 = vmatprep.subr.mxu0 0.0
        %3087 = vmatpush1.msra.mxu0 %v2794
        %3088 = vmatprep.subr.mxu0 0.0
        %3089 = vmatpush1.msra.mxu0 %v2795
        %3090 = vmatprep.subr.mxu0 0.0
        %3091 = vmatpush1.msra.mxu0 %v2796
        %3092 = vmatprep.subr.mxu0 0.0
        %3093 = vmatpush1.msra.mxu0 %v2797
        %3094 = vmatprep.subr.mxu0 0.0
        %3095 = vmatpush1.msra.mxu0 %v2798
        %3096 = vmatprep.subr.mxu0 0.0
        %3097 = vmatpush1.msra.mxu0 %v2799
        %3098 = vmatprep.subr.mxu0 0.0
        %3099 = vmatpush1.msra.mxu0 %v2800
        %3100 = vmatprep.subr.mxu0 0.0
        %3101 = vmatpush1.msra.mxu0 0.0
        %3102 = vmatprep.subr.mxu0 0.0
        %3103 = vmatpush1.msra.mxu0 0.0
        %3104 = vmatprep.subr.mxu0 0.0
        %3105 = vmatpush1.msra.mxu0 0.0
        %3106 = vmatprep.subr.mxu0 0.0
        %3107 = vmatpush1.msra.mxu0 0.0
        %3108 = vmatprep.subr.mxu0 0.0
        %3109 = vmatpush1.msra.mxu0 0.0
        %3110 = vmatprep.subr.mxu0 0.0
        %3111 = vmatpush1.msra.mxu0 0.0
        %3112 = vmatprep.subr.mxu0 0.0
        %3113 = vmatpush1.msra.mxu0 0.0
        %3114 = vmatprep.subr.mxu0 0.0
        %3115 = vmatpush1.msra.mxu0 0.0
        %3116 = vmatprep.subr.mxu0 0.0
        %3117 = vmatpush1.msra.mxu0 0.0
        %3118 = vmatprep.subr.mxu0 0.0
        %3119 = vmatpush1.msra.mxu0 0.0
        %3120 = vmatprep.subr.mxu0 0.0
        %3121 = vmatpush1.msra.mxu0 0.0
        %3122 = vmatprep.subr.mxu0 0.0
        %3123 = vmatpush1.msra.mxu0 0.0
        %3124 = vmatprep.subr.mxu0 0.0
        %3125 = vmatpush1.msra.mxu0 0.0
        %3126 = vmatprep.subr.mxu0 0.0
        %3127 = vmatpush1.msra.mxu0 0.0
        %3128 = vmatprep.subr.mxu0 0.0
        %3129 = vmatpush1.msra.mxu0 0.0
        %3130 = vmatprep.subr.mxu0 0.0
        %3131 = vmatpush1.msra.mxu0 0.0
        %3132 = vmatprep.subr.mxu0 0.0
        %3133 = vmatpush1.msra.mxu0 0.0
        %3134 = vmatprep.subr.mxu0 0.0
        %3135 = vmatpush1.msra.mxu0 0.0
        %3136 = vmatprep.subr.mxu0 0.0
        %3137 = vmatpush1.msra.mxu0 0.0
        %3138 = vmatprep.subr.mxu0 0.0
        %3139 = vmatpush1.msra.mxu0 0.0
        %3140 = vmatprep.subr.mxu0 0.0
        %3141 = vmatpush1.msra.mxu0 0.0
        %3142 = vmatprep.subr.mxu0 0.0
        %3143 = vmatpush1.msra.mxu0 0.0
        %3144 = vmatprep.subr.mxu0 0.0
        %3145 = vmatpush1.msra.mxu0 0.0
        %3146 = vmatprep.subr.mxu0 0.0
        %3147 = vmatpush1.msra.mxu0 0.0
        %3148 = vmatprep.mubr.f32.mxu0 0.0
        %3149 = vmatmul.mubr.f32.gmra.mrb[0].mxu0 %v3082
        %v3150 = vpop.f32.mrb[0].mxu0
        %v3151 = vadd.f32 0.0, %v3150
        %v3152 = vpop.f32.mrb[0].mxu0
        %3153 = vdwg.mxu0
        %v3154 = vmul.f32 %v3151, 0.001953125
        %v3155 = vadd.f32 %v3154, 1e-05
        %v3156 = vrsqrt.pop %v3155
        %v3157 = vlaneseq
        %v3158 = vshrl.u32 %v3157, 7
        %v3159 = vsub.s32 0, %v3158
        %v3160 = vrot.slane %v3156, %v3159
        %v3161 = vmul.f32 %v2948, %v3160
        %v3162 = vmul.f32 %v2949, %v3160
        %v3163 = vmul.f32 %v2950, %v3160
        %v3164 = vmul.f32 %v2951, %v3160
        %v3165 = vmul.f32 %v2952, %v3160
        %v3166 = vmul.f32 %v2953, %v3160
        %v3167 = vmul.f32 %v2954, %v3160
        %v3168 = vmul.f32 %v2955, %v3160
        %v3169 = vmul.f32 %v2956, %v3160
        %v3170 = vmul.f32 %v2957, %v3160
        %v3171 = vmul.f32 %v2958, %v3160
        %v3172 = vmul.f32 %v2959, %v3160
        %v3173 = vmul.f32 %v2960, %v3160
        %v3174 = vmul.f32 %v2961, %v3160
        %v3175 = vmul.f32 %v2962, %v3160
        %v3176 = vmul.f32 %v2963, %v3160
        %v3177 = vmul.f32 %v2964, %v3160
        %v3178 = vmul.f32 %v2965, %v3160
        %v3179 = vmul.f32 %v2966, %v3160
        %v3180 = vmul.f32 %v2967, %v3160
        %v3181 = vmul.f32 %v2968, %v3160
        %v3182 = vmul.f32 %v2969, %v3160
        %v3183 = vmul.f32 %v2970, %v3160
        %v3184 = vmul.f32 %v2971, %v3160
        %v3185 = vmul.f32 %v2972, %v3160
        %v3186 = vmul.f32 %v2973, %v3160
        %v3187 = vmul.f32 %v2974, %v3160
        %v3188 = vmul.f32 %v2975, %v3160
        %v3189 = vmul.f32 %v2976, %v3160
        %v3190 = vmul.f32 %v2977, %v3160
        %v3191 = vmul.f32 %v2978, %v3160
        %v3192 = vmul.f32 %v2979, %v3160
        %v3194 = vlaneseq
        %v3195 = vshrl.u32 %v3194, 7
        %v3196 = vsub.s32 0, %v3195
        %v3197 = vrot.slane %v2791, %v3196
        %v3199 = vmul.f32 %v3161, %v3197
        %v3200 = vmul.f32 %v3162, %v3197
        %v3201 = vmul.f32 %v3163, %v3197
        %v3202 = vmul.f32 %v3164, %v3197
        %v3203 = vmul.f32 %v3165, %v3197
        %v3204 = vmul.f32 %v3166, %v3197
        %v3205 = vmul.f32 %v3167, %v3197
        %v3206 = vmul.f32 %v3168, %v3197
        %v3207 = vmul.f32 %v3169, %v3197
        %v3208 = vmul.f32 %v3170, %v3197
        %v3209 = vmul.f32 %v3171, %v3197
        %v3210 = vmul.f32 %v3172, %v3197
        %v3211 = vmul.f32 %v3173, %v3197
        %v3212 = vmul.f32 %v3174, %v3197
        %v3213 = vmul.f32 %v3175, %v3197
        %v3214 = vmul.f32 %v3176, %v3197
        %v3215 = vmul.f32 %v3177, %v3197
        %v3216 = vmul.f32 %v3178, %v3197
        %v3217 = vmul.f32 %v3179, %v3197
        %v3218 = vmul.f32 %v3180, %v3197
        %v3219 = vmul.f32 %v3181, %v3197
        %v3220 = vmul.f32 %v3182, %v3197
        %v3221 = vmul.f32 %v3183, %v3197
        %v3222 = vmul.f32 %v3184, %v3197
        %v3223 = vmul.f32 %v3185, %v3197
        %v3224 = vmul.f32 %v3186, %v3197
        %v3225 = vmul.f32 %v3187, %v3197
        %v3226 = vmul.f32 %v3188, %v3197
        %v3227 = vmul.f32 %v3189, %v3197
        %v3228 = vmul.f32 %v3190, %v3197
        %v3229 = vmul.f32 %v3191, %v3197
        %v3230 = vmul.f32 %v3192, %v3197
        %v3232 = vlaneseq
        %v3233 = vshrl.u32 %v3232, 7
        %v3234 = vsub.s32 0, %v3233
        %v3235 = vrot.slane %v2792, %v3234
        %v3237 = vadd.f32 %v3199, %v3235
        %v3238 = vadd.f32 %v3200, %v3235
        %v3239 = vadd.f32 %v3201, %v3235
        %v3240 = vadd.f32 %v3202, %v3235
        %v3241 = vadd.f32 %v3203, %v3235
        %v3242 = vadd.f32 %v3204, %v3235
        %v3243 = vadd.f32 %v3205, %v3235
        %v3244 = vadd.f32 %v3206, %v3235
        %v3245 = vadd.f32 %v3207, %v3235
        %v3246 = vadd.f32 %v3208, %v3235
        %v3247 = vadd.f32 %v3209, %v3235
        %v3248 = vadd.f32 %v3210, %v3235
        %v3249 = vadd.f32 %v3211, %v3235
        %v3250 = vadd.f32 %v3212, %v3235
        %v3251 = vadd.f32 %v3213, %v3235
        %v3252 = vadd.f32 %v3214, %v3235
        %v3253 = vadd.f32 %v3215, %v3235
        %v3254 = vadd.f32 %v3216, %v3235
        %v3255 = vadd.f32 %v3217, %v3235
        %v3256 = vadd.f32 %v3218, %v3235
        %v3257 = vadd.f32 %v3219, %v3235
        %v3258 = vadd.f32 %v3220, %v3235
        %v3259 = vadd.f32 %v3221, %v3235
        %v3260 = vadd.f32 %v3222, %v3235
        %v3261 = vadd.f32 %v3223, %v3235
        %v3262 = vadd.f32 %v3224, %v3235
        %v3263 = vadd.f32 %v3225, %v3235
        %v3264 = vadd.f32 %v3226, %v3235
        %v3265 = vadd.f32 %v3227, %v3235
        %v3266 = vadd.f32 %v3228, %v3235
        %v3267 = vadd.f32 %v3229, %v3235
        %v3268 = vadd.f32 %v3230, %v3235
        %v3269 = vmax.f32 %v3237, 0.0
        %v3270 = vmax.f32 %v3238, 0.0
        %v3271 = vmax.f32 %v3239, 0.0
        %v3272 = vmax.f32 %v3240, 0.0
        %v3273 = vmax.f32 %v3241, 0.0
        %v3274 = vmax.f32 %v3242, 0.0
        %v3275 = vmax.f32 %v3243, 0.0
        %v3276 = vmax.f32 %v3244, 0.0
        %v3277 = vmax.f32 %v3245, 0.0
        %v3278 = vmax.f32 %v3246, 0.0
        %v3279 = vmax.f32 %v3247, 0.0
        %v3280 = vmax.f32 %v3248, 0.0
        %v3281 = vmax.f32 %v3249, 0.0
        %v3282 = vmax.f32 %v3250, 0.0
        %v3283 = vmax.f32 %v3251, 0.0
        %v3284 = vmax.f32 %v3252, 0.0
        %v3285 = vmax.f32 %v3253, 0.0
        %v3286 = vmax.f32 %v3254, 0.0
        %v3287 = vmax.f32 %v3255, 0.0
        %v3288 = vmax.f32 %v3256, 0.0
        %v3289 = vmax.f32 %v3257, 0.0
        %v3290 = vmax.f32 %v3258, 0.0
        %v3291 = vmax.f32 %v3259, 0.0
        %v3292 = vmax.f32 %v3260, 0.0
        %v3293 = vmax.f32 %v3261, 0.0
        %v3294 = vmax.f32 %v3262, 0.0
        %v3295 = vmax.f32 %v3263, 0.0
        %v3296 = vmax.f32 %v3264, 0.0
        %v3297 = vmax.f32 %v3265, 0.0
        %v3298 = vmax.f32 %v3266, 0.0
        %v3299 = vmax.f32 %v3267, 0.0
        %v3300 = vmax.f32 %v3268, 0.0
        %3301 = vst.msk [vmem:[#allocation3] sm:$0xff] %vm374, 0.0
        %3302 = vst.msk [vmem:[#allocation3 + $0x8] sm:$0xff] %vm374, 0.0
        %3303 = vst.msk [vmem:[#allocation3 + $0x10] sm:$0x3] %vm877, 0.0
        %3304 = vst.msk [vmem:[#allocation3 + $0x18] sm:$0xff] %vm374, 0.0
        %3305 = vst.msk [vmem:[#allocation3 + $0x20] sm:$0xff] %vm374, 0.0
        %3306 = vst.msk [vmem:[#allocation3 + $0x28] sm:$0x3] %vm877, 0.0
        %3307 = vst.msk [vmem:[#allocation3 + $0x30] sm:$0xff] %vm374, 0.0
        %3308 = vst.msk [vmem:[#allocation3 + $0x38] sm:$0xff] %vm374, 0.0
        %3309 = vst.msk [vmem:[#allocation3 + $0x40] sm:$0x3] %vm877, 0.0
        %3310 = vst.msk [vmem:[#allocation3 + $0x48] sm:$0xff] %vm374, 0.0
        %3311 = vst.msk [vmem:[#allocation3 + $0x50] sm:$0xff] %vm374, 0.0
        %3312 = vst.msk [vmem:[#allocation3 + $0x58] sm:$0x3] %vm877, 0.0
        %3313 = vst.msk [vmem:[#allocation3 + $0x60] sm:$0xff] %vm374, 0.0
        %3314 = vst.msk [vmem:[#allocation3 + $0x68] sm:$0xff] %vm374, 0.0
        %3315 = vst.msk [vmem:[#allocation3 + $0x70] sm:$0x3] %vm877, 0.0
        %3316 = vst.msk [vmem:[#allocation3 + $0x78] sm:$0xff] %vm374, 0.0
        %3317 = vst.msk [vmem:[#allocation3 + $0x80] sm:$0xff] %vm374, 0.0
        %3318 = vst.msk [vmem:[#allocation3 + $0x88] sm:$0x3] %vm877, 0.0
        %3319 = vst.msk [vmem:[#allocation3 + $0x90] sm:$0xff] %vm374, 0.0
        %3320 = vst.msk [vmem:[#allocation3 + $0x98] sm:$0xff] %vm374, 0.0
        %3321 = vst.msk [vmem:[#allocation3 + $0xa0] sm:$0x3] %vm877, 0.0
        %3322 = vst.msk [vmem:[#allocation3 + $0xa8] sm:$0xff] %vm374, 0.0
        %3323 = vst.msk [vmem:[#allocation3 + $0xb0] sm:$0xff] %vm374, 0.0
        %3324 = vst.msk [vmem:[#allocation3 + $0xb8] sm:$0x3] %vm877, 0.0
        %3325 = vst.msk [vmem:[#allocation3 + $0xc0] sm:$0xff] %vm374, 0.0
        %3326 = vst.msk [vmem:[#allocation3 + $0xc8] sm:$0xff] %vm374, 0.0
        %3327 = vst.msk [vmem:[#allocation3 + $0xd0] sm:$0x3] %vm877, 0.0
        %3328 = vst.msk [vmem:[#allocation3 + $0xd8] sm:$0xff] %vm374, 0.0
        %3329 = vst.msk [vmem:[#allocation3 + $0xe0] sm:$0xff] %vm374, 0.0
        %3330 = vst.msk [vmem:[#allocation3 + $0xe8] sm:$0x3] %vm877, 0.0
        %3331 = vst.msk [vmem:[#allocation3 + $0xf0] sm:$0xff] %vm374, 0.0
        %3332 = vst.msk [vmem:[#allocation3 + $0xf8] sm:$0xff] %vm374, 0.0
        %3333 = vst.msk [vmem:[#allocation3 + $0x100] sm:$0x3] %vm877, 0.0
        %3334 = vst.msk [vmem:[#allocation3 + $0x108] sm:$0xff] %vm374, 0.0
        %3335 = vst.msk [vmem:[#allocation3 + $0x110] sm:$0xff] %vm374, 0.0
        %3336 = vst.msk [vmem:[#allocation3 + $0x118] sm:$0x3] %vm877, 0.0
        %3337 = vst.msk [vmem:[#allocation3 + $0x120] sm:$0xff] %vm374, 0.0
        %3338 = vst.msk [vmem:[#allocation3 + $0x128] sm:$0xff] %vm374, 0.0
        %3339 = vst.msk [vmem:[#allocation3 + $0x130] sm:$0x3] %vm877, 0.0
        %3340 = vst.msk [vmem:[#allocation3 + $0x138] sm:$0xff] %vm374, 0.0
        %3341 = vst.msk [vmem:[#allocation3 + $0x140] sm:$0xff] %vm374, 0.0
        %3342 = vst.msk [vmem:[#allocation3 + $0x148] sm:$0x3] %vm877, 0.0
        %3343 = vst.msk [vmem:[#allocation3 + $0x150] sm:$0xff] %vm374, 0.0
        %3344 = vst.msk [vmem:[#allocation3 + $0x158] sm:$0xff] %vm374, 0.0
        %3345 = vst.msk [vmem:[#allocation3 + $0x160] sm:$0x3] %vm877, 0.0
        %3346 = vst.msk [vmem:[#allocation3 + $0x168] sm:$0xff] %vm374, 0.0
        %3347 = vst.msk [vmem:[#allocation3 + $0x170] sm:$0xff] %vm374, 0.0
        %3348 = vst.msk [vmem:[#allocation3 + $0x178] sm:$0x3] %vm877, 0.0
        %3349 = vst.msk [vmem:[#allocation3 + $0x180] sm:$0xff] %vm374, 0.0
        %3350 = vst.msk [vmem:[#allocation3 + $0x188] sm:$0xff] %vm374, 0.0
        %3351 = vst.msk [vmem:[#allocation3 + $0x190] sm:$0x3] %vm877, 0.0
        %3352 = vst.msk [vmem:[#allocation3 + $0x198] sm:$0xff] %vm374, 0.0
        %3353 = vst.msk [vmem:[#allocation3 + $0x1a0] sm:$0xff] %vm374, 0.0
        %3354 = vst.msk [vmem:[#allocation3 + $0x1a8] sm:$0x3] %vm877, 0.0
        %s3355 = scalar_lea.vmem [#allocation3], 24
        %3356 = vst.msk [vmem:[%s3355 + $0x1] sm:$0xff] %vm374, %v3269
        %3357 = vst.msk [vmem:[%s3355 + $0x9] sm:$0xff] %vm374, %v3270
        %3358 = vst.msk [vmem:[%s3355 + $0x19] sm:$0xff] %vm374, %v3271
        %3359 = vst.msk [vmem:[%s3355 + $0x21] sm:$0xff] %vm374, %v3272
        %3360 = vst.msk [vmem:[%s3355 + $0x31] sm:$0xff] %vm374, %v3273
        %3361 = vst.msk [vmem:[%s3355 + $0x39] sm:$0xff] %vm374, %v3274
        %3362 = vst.msk [vmem:[%s3355 + $0x49] sm:$0xff] %vm374, %v3275
        %3363 = vst.msk [vmem:[%s3355 + $0x51] sm:$0xff] %vm374, %v3276
        %3364 = vst.msk [vmem:[%s3355 + $0x61] sm:$0xff] %vm374, %v3277
        %3365 = vst.msk [vmem:[%s3355 + $0x69] sm:$0xff] %vm374, %v3278
        %3366 = vst.msk [vmem:[%s3355 + $0x79] sm:$0xff] %vm374, %v3279
        %3367 = vst.msk [vmem:[%s3355 + $0x81] sm:$0xff] %vm374, %v3280
        %3368 = vst.msk [vmem:[%s3355 + $0x91] sm:$0xff] %vm374, %v3281
        %3369 = vst.msk [vmem:[%s3355 + $0x99] sm:$0xff] %vm374, %v3282
        %3370 = vst.msk [vmem:[%s3355 + $0xa9] sm:$0xff] %vm374, %v3283
        %3371 = vst.msk [vmem:[%s3355 + $0xb1] sm:$0xff] %vm374, %v3284
        %3372 = vst.msk [vmem:[%s3355 + $0xc1] sm:$0xff] %vm374, %v3285
        %3373 = vst.msk [vmem:[%s3355 + $0xc9] sm:$0xff] %vm374, %v3286
        %3374 = vst.msk [vmem:[%s3355 + $0xd9] sm:$0xff] %vm374, %v3287
        %3375 = vst.msk [vmem:[%s3355 + $0xe1] sm:$0xff] %vm374, %v3288
        %3376 = vst.msk [vmem:[%s3355 + $0xf1] sm:$0xff] %vm374, %v3289
        %3377 = vst.msk [vmem:[%s3355 + $0xf9] sm:$0xff] %vm374, %v3290
        %3378 = vst.msk [vmem:[%s3355 + $0x109] sm:$0xff] %vm374, %v3291
        %3379 = vst.msk [vmem:[%s3355 + $0x111] sm:$0xff] %vm374, %v3292
        %3380 = vst.msk [vmem:[%s3355 + $0x121] sm:$0xff] %vm374, %v3293
        %3381 = vst.msk [vmem:[%s3355 + $0x129] sm:$0xff] %vm374, %v3294
        %3382 = vst.msk [vmem:[%s3355 + $0x139] sm:$0xff] %vm374, %v3295
        %3383 = vst.msk [vmem:[%s3355 + $0x141] sm:$0xff] %vm374, %v3296
        %3384 = vst.msk [vmem:[%s3355 + $0x151] sm:$0xff] %vm374, %v3297
        %3385 = vst.msk [vmem:[%s3355 + $0x159] sm:$0xff] %vm374, %v3298
        %3386 = vst.msk [vmem:[%s3355 + $0x169] sm:$0xff] %vm374, %v3299
        %3387 = vst.msk [vmem:[%s3355 + $0x171] sm:$0xff] %vm374, %v3300
        %v3388 = vld [vmem:[#allocation3] sm:$0xff]
        %v3389 = vld [vmem:[#allocation3 + $0x8] sm:$0xff]
        %v3390 = vld [vmem:[#allocation3 + $0x18] sm:$0xff]
        %v3391 = vld [vmem:[#allocation3 + $0x20] sm:$0xff]
        %v3392 = vld [vmem:[#allocation3 + $0x30] sm:$0xff]
        %v3393 = vld [vmem:[#allocation3 + $0x38] sm:$0xff]
        %v3394 = vld [vmem:[#allocation3 + $0x48] sm:$0xff]
        %v3395 = vld [vmem:[#allocation3 + $0x50] sm:$0xff]
        %v3396 = vld [vmem:[#allocation3 + $0x60] sm:$0xff]
        %v3397 = vld [vmem:[#allocation3 + $0x68] sm:$0xff]
        %v3398 = vld [vmem:[#allocation3 + $0x78] sm:$0xff]
        %v3399 = vld [vmem:[#allocation3 + $0x80] sm:$0xff]
        %v3400 = vld [vmem:[#allocation3 + $0x90] sm:$0xff]
        %v3401 = vld [vmem:[#allocation3 + $0x98] sm:$0xff]
        %v3402 = vld [vmem:[#allocation3 + $0xa8] sm:$0xff]
        %v3403 = vld [vmem:[#allocation3 + $0xb0] sm:$0xff]
        %v3404 = vld [vmem:[#allocation3 + $0xc0] sm:$0xff]
        %v3405 = vld [vmem:[#allocation3 + $0xc8] sm:$0xff]
        %v3406 = vld [vmem:[#allocation3 + $0xd8] sm:$0xff]
        %v3407 = vld [vmem:[#allocation3 + $0xe0] sm:$0xff]
        %v3408 = vld [vmem:[#allocation3 + $0xf0] sm:$0xff]
        %v3409 = vld [vmem:[#allocation3 + $0xf8] sm:$0xff]
        %v3410 = vld [vmem:[#allocation3 + $0x108] sm:$0xff]
        %v3411 = vld [vmem:[#allocation3 + $0x110] sm:$0xff]
        %v3412 = vld [vmem:[#allocation3 + $0x120] sm:$0xff]
        %v3413 = vld [vmem:[#allocation3 + $0x128] sm:$0xff]
        %v3414 = vld [vmem:[#allocation3 + $0x138] sm:$0xff]
        %v3415 = vld [vmem:[#allocation3 + $0x140] sm:$0xff]
        %v3416 = vld [vmem:[#allocation3 + $0x150] sm:$0xff]
        %v3417 = vld [vmem:[#allocation3 + $0x158] sm:$0xff]
        %v3418 = vld [vmem:[#allocation3 + $0x168] sm:$0xff]
        %v3419 = vld [vmem:[#allocation3 + $0x170] sm:$0xff]
        %v3420 = vld [vmem:[#allocation3 + $0x1] sm:$0xff]
        %v3421 = vld [vmem:[#allocation3 + $0x9] sm:$0xff]
        %v3422 = vld [vmem:[#allocation3 + $0x19] sm:$0xff]
        %v3423 = vld [vmem:[#allocation3 + $0x21] sm:$0xff]
        %v3424 = vld [vmem:[#allocation3 + $0x31] sm:$0xff]
        %v3425 = vld [vmem:[#allocation3 + $0x39] sm:$0xff]
        %v3426 = vld [vmem:[#allocation3 + $0x49] sm:$0xff]
        %v3427 = vld [vmem:[#allocation3 + $0x51] sm:$0xff]
        %v3428 = vld [vmem:[#allocation3 + $0x61] sm:$0xff]
        %v3429 = vld [vmem:[#allocation3 + $0x69] sm:$0xff]
        %v3430 = vld [vmem:[#allocation3 + $0x79] sm:$0xff]
        %v3431 = vld [vmem:[#allocation3 + $0x81] sm:$0xff]
        %v3432 = vld [vmem:[#allocation3 + $0x91] sm:$0xff]
        %v3433 = vld [vmem:[#allocation3 + $0x99] sm:$0xff]
        %v3434 = vld [vmem:[#allocation3 + $0xa9] sm:$0xff]
        %v3435 = vld [vmem:[#allocation3 + $0xb1] sm:$0xff]
        %v3436 = vld [vmem:[#allocation3 + $0xc1] sm:$0xff]
        %v3437 = vld [vmem:[#allocation3 + $0xc9] sm:$0xff]
        %v3438 = vld [vmem:[#allocation3 + $0xd9] sm:$0xff]
        %v3439 = vld [vmem:[#allocation3 + $0xe1] sm:$0xff]
        %v3440 = vld [vmem:[#allocation3 + $0xf1] sm:$0xff]
        %v3441 = vld [vmem:[#allocation3 + $0xf9] sm:$0xff]
        %v3442 = vld [vmem:[#allocation3 + $0x109] sm:$0xff]
        %v3443 = vld [vmem:[#allocation3 + $0x111] sm:$0xff]
        %v3444 = vld [vmem:[#allocation3 + $0x121] sm:$0xff]
        %v3445 = vld [vmem:[#allocation3 + $0x129] sm:$0xff]
        %v3446 = vld [vmem:[#allocation3 + $0x139] sm:$0xff]
        %v3447 = vld [vmem:[#allocation3 + $0x141] sm:$0xff]
        %v3448 = vld [vmem:[#allocation3 + $0x151] sm:$0xff]
        %v3449 = vld [vmem:[#allocation3 + $0x159] sm:$0xff]
        %v3450 = vld [vmem:[#allocation3 + $0x169] sm:$0xff]
        %v3451 = vld [vmem:[#allocation3 + $0x171] sm:$0xff]
        %v3452 = vld [vmem:[#allocation3 + $0x2] sm:$0xff]
        %v3453 = vld [vmem:[#allocation3 + $0xa] sm:$0xff]
        %v3454 = vld [vmem:[#allocation3 + $0x1a] sm:$0xff]
        %v3455 = vld [vmem:[#allocation3 + $0x22] sm:$0xff]
        %v3456 = vld [vmem:[#allocation3 + $0x32] sm:$0xff]
        %v3457 = vld [vmem:[#allocation3 + $0x3a] sm:$0xff]
        %v3458 = vld [vmem:[#allocation3 + $0x4a] sm:$0xff]
        %v3459 = vld [vmem:[#allocation3 + $0x52] sm:$0xff]
        %v3460 = vld [vmem:[#allocation3 + $0x62] sm:$0xff]
        %v3461 = vld [vmem:[#allocation3 + $0x6a] sm:$0xff]
        %v3462 = vld [vmem:[#allocation3 + $0x7a] sm:$0xff]
        %v3463 = vld [vmem:[#allocation3 + $0x82] sm:$0xff]
        %v3464 = vld [vmem:[#allocation3 + $0x92] sm:$0xff]
        %v3465 = vld [vmem:[#allocation3 + $0x9a] sm:$0xff]
        %v3466 = vld [vmem:[#allocation3 + $0xaa] sm:$0xff]
        %v3467 = vld [vmem:[#allocation3 + $0xb2] sm:$0xff]
        %v3468 = vld [vmem:[#allocation3 + $0xc2] sm:$0xff]
        %v3469 = vld [vmem:[#allocation3 + $0xca] sm:$0xff]
        %v3470 = vld [vmem:[#allocation3 + $0xda] sm:$0xff]
        %v3471 = vld [vmem:[#allocation3 + $0xe2] sm:$0xff]
        %v3472 = vld [vmem:[#allocation3 + $0xf2] sm:$0xff]
        %v3473 = vld [vmem:[#allocation3 + $0xfa] sm:$0xff]
        %v3474 = vld [vmem:[#allocation3 + $0x10a] sm:$0xff]
        %v3475 = vld [vmem:[#allocation3 + $0x112] sm:$0xff]
        %v3476 = vld [vmem:[#allocation3 + $0x122] sm:$0xff]
        %v3477 = vld [vmem:[#allocation3 + $0x12a] sm:$0xff]
        %v3478 = vld [vmem:[#allocation3 + $0x13a] sm:$0xff]
        %v3479 = vld [vmem:[#allocation3 + $0x142] sm:$0xff]
        %v3480 = vld [vmem:[#allocation3 + $0x152] sm:$0xff]
        %v3481 = vld [vmem:[#allocation3 + $0x15a] sm:$0xff]
        %v3482 = vld [vmem:[#allocation3 + $0x16a] sm:$0xff]
        %v3483 = vld [vmem:[#allocation3 + $0x172] sm:$0xff]
        %v3484 = vld [vmem:[%s3355] sm:$0xff]
        %v3485 = vld [vmem:[%s3355 + $0x8] sm:$0xff]
        %v3486 = vld [vmem:[%s3355 + $0x18] sm:$0xff]
        %v3487 = vld [vmem:[%s3355 + $0x20] sm:$0xff]
        %v3488 = vld [vmem:[%s3355 + $0x30] sm:$0xff]
        %v3489 = vld [vmem:[%s3355 + $0x38] sm:$0xff]
        %v3490 = vld [vmem:[%s3355 + $0x48] sm:$0xff]
        %v3491 = vld [vmem:[%s3355 + $0x50] sm:$0xff]
        %v3492 = vld [vmem:[%s3355 + $0x60] sm:$0xff]
        %v3493 = vld [vmem:[%s3355 + $0x68] sm:$0xff]
        %v3494 = vld [vmem:[%s3355 + $0x78] sm:$0xff]
        %v3495 = vld [vmem:[%s3355 + $0x80] sm:$0xff]
        %v3496 = vld [vmem:[%s3355 + $0x90] sm:$0xff]
        %v3497 = vld [vmem:[%s3355 + $0x98] sm:$0xff]
        %v3498 = vld [vmem:[%s3355 + $0xa8] sm:$0xff]
        %v3499 = vld [vmem:[%s3355 + $0xb0] sm:$0xff]
        %v3500 = vld [vmem:[%s3355 + $0xc0] sm:$0xff]
        %v3501 = vld [vmem:[%s3355 + $0xc8] sm:$0xff]
        %v3502 = vld [vmem:[%s3355 + $0xd8] sm:$0xff]
        %v3503 = vld [vmem:[%s3355 + $0xe0] sm:$0xff]
        %v3504 = vld [vmem:[%s3355 + $0xf0] sm:$0xff]
        %v3505 = vld [vmem:[%s3355 + $0xf8] sm:$0xff]
        %v3506 = vld [vmem:[%s3355 + $0x108] sm:$0xff]
        %v3507 = vld [vmem:[%s3355 + $0x110] sm:$0xff]
        %v3508 = vld [vmem:[%s3355 + $0x120] sm:$0xff]
        %v3509 = vld [vmem:[%s3355 + $0x128] sm:$0xff]
        %v3510 = vld [vmem:[%s3355 + $0x138] sm:$0xff]
        %v3511 = vld [vmem:[%s3355 + $0x140] sm:$0xff]
        %v3512 = vld [vmem:[%s3355 + $0x150] sm:$0xff]
        %v3513 = vld [vmem:[%s3355 + $0x158] sm:$0xff]
        %v3514 = vld [vmem:[%s3355 + $0x168] sm:$0xff]
        %v3515 = vld [vmem:[%s3355 + $0x170] sm:$0xff]
        %v3516 = vld [vmem:[%s3355 + $0x1] sm:$0xff]
        %v3517 = vld [vmem:[%s3355 + $0x9] sm:$0xff]
        %v3518 = vld [vmem:[%s3355 + $0x19] sm:$0xff]
        %v3519 = vld [vmem:[%s3355 + $0x21] sm:$0xff]
        %v3520 = vld [vmem:[%s3355 + $0x31] sm:$0xff]
        %v3521 = vld [vmem:[%s3355 + $0x39] sm:$0xff]
        %v3522 = vld [vmem:[%s3355 + $0x49] sm:$0xff]
        %v3523 = vld [vmem:[%s3355 + $0x51] sm:$0xff]
        %v3524 = vld [vmem:[%s3355 + $0x61] sm:$0xff]
        %v3525 = vld [vmem:[%s3355 + $0x69] sm:$0xff]
        %v3526 = vld [vmem:[%s3355 + $0x79] sm:$0xff]
        %v3527 = vld [vmem:[%s3355 + $0x81] sm:$0xff]
        %v3528 = vld [vmem:[%s3355 + $0x91] sm:$0xff]
        %v3529 = vld [vmem:[%s3355 + $0x99] sm:$0xff]
        %v3530 = vld [vmem:[%s3355 + $0xa9] sm:$0xff]
        %v3531 = vld [vmem:[%s3355 + $0xb1] sm:$0xff]
        %v3532 = vld [vmem:[%s3355 + $0xc1] sm:$0xff]
        %v3533 = vld [vmem:[%s3355 + $0xc9] sm:$0xff]
        %v3534 = vld [vmem:[%s3355 + $0xd9] sm:$0xff]
        %v3535 = vld [vmem:[%s3355 + $0xe1] sm:$0xff]
        %v3536 = vld [vmem:[%s3355 + $0xf1] sm:$0xff]
        %v3537 = vld [vmem:[%s3355 + $0xf9] sm:$0xff]
        %v3538 = vld [vmem:[%s3355 + $0x109] sm:$0xff]
        %v3539 = vld [vmem:[%s3355 + $0x111] sm:$0xff]
        %v3540 = vld [vmem:[%s3355 + $0x121] sm:$0xff]
        %v3541 = vld [vmem:[%s3355 + $0x129] sm:$0xff]
        %v3542 = vld [vmem:[%s3355 + $0x139] sm:$0xff]
        %v3543 = vld [vmem:[%s3355 + $0x141] sm:$0xff]
        %v3544 = vld [vmem:[%s3355 + $0x151] sm:$0xff]
        %v3545 = vld [vmem:[%s3355 + $0x159] sm:$0xff]
        %v3546 = vld [vmem:[%s3355 + $0x169] sm:$0xff]
        %v3547 = vld [vmem:[%s3355 + $0x171] sm:$0xff]
        %v3548 = vld [vmem:[%s3355 + $0x2] sm:$0xff]
        %v3549 = vld [vmem:[%s3355 + $0xa] sm:$0xff]
        %v3550 = vld [vmem:[%s3355 + $0x1a] sm:$0xff]
        %v3551 = vld [vmem:[%s3355 + $0x22] sm:$0xff]
        %v3552 = vld [vmem:[%s3355 + $0x32] sm:$0xff]
        %v3553 = vld [vmem:[%s3355 + $0x3a] sm:$0xff]
        %v3554 = vld [vmem:[%s3355 + $0x4a] sm:$0xff]
        %v3555 = vld [vmem:[%s3355 + $0x52] sm:$0xff]
        %v3556 = vld [vmem:[%s3355 + $0x62] sm:$0xff]
        %v3557 = vld [vmem:[%s3355 + $0x6a] sm:$0xff]
        %v3558 = vld [vmem:[%s3355 + $0x7a] sm:$0xff]
        %v3559 = vld [vmem:[%s3355 + $0x82] sm:$0xff]
        %v3560 = vld [vmem:[%s3355 + $0x92] sm:$0xff]
        %v3561 = vld [vmem:[%s3355 + $0x9a] sm:$0xff]
        %v3562 = vld [vmem:[%s3355 + $0xaa] sm:$0xff]
        %v3563 = vld [vmem:[%s3355 + $0xb2] sm:$0xff]
        %v3564 = vld [vmem:[%s3355 + $0xc2] sm:$0xff]
        %v3565 = vld [vmem:[%s3355 + $0xca] sm:$0xff]
        %v3566 = vld [vmem:[%s3355 + $0xda] sm:$0xff]
        %v3567 = vld [vmem:[%s3355 + $0xe2] sm:$0xff]
        %v3568 = vld [vmem:[%s3355 + $0xf2] sm:$0xff]
        %v3569 = vld [vmem:[%s3355 + $0xfa] sm:$0xff]
        %v3570 = vld [vmem:[%s3355 + $0x10a] sm:$0xff]
        %v3571 = vld [vmem:[%s3355 + $0x112] sm:$0xff]
        %v3572 = vld [vmem:[%s3355 + $0x122] sm:$0xff]
        %v3573 = vld [vmem:[%s3355 + $0x12a] sm:$0xff]
        %v3574 = vld [vmem:[%s3355 + $0x13a] sm:$0xff]
        %v3575 = vld [vmem:[%s3355 + $0x142] sm:$0xff]
        %v3576 = vld [vmem:[%s3355 + $0x152] sm:$0xff]
        %v3577 = vld [vmem:[%s3355 + $0x15a] sm:$0xff]
        %v3578 = vld [vmem:[%s3355 + $0x16a] sm:$0xff]
        %v3579 = vld [vmem:[%s3355 + $0x172] sm:$0xff]
        %s3580 = scalar_lea.vmem [#allocation3], 48
        %v3581 = vld [vmem:[%s3580] sm:$0xff]
        %v3582 = vld [vmem:[%s3580 + $0x8] sm:$0xff]
        %v3583 = vld [vmem:[%s3580 + $0x18] sm:$0xff]
        %v3584 = vld [vmem:[%s3580 + $0x20] sm:$0xff]
        %v3585 = vld [vmem:[%s3580 + $0x30] sm:$0xff]
        %v3586 = vld [vmem:[%s3580 + $0x38] sm:$0xff]
        %v3587 = vld [vmem:[%s3580 + $0x48] sm:$0xff]
        %v3588 = vld [vmem:[%s3580 + $0x50] sm:$0xff]
        %v3589 = vld [vmem:[%s3580 + $0x60] sm:$0xff]
        %v3590 = vld [vmem:[%s3580 + $0x68] sm:$0xff]
        %v3591 = vld [vmem:[%s3580 + $0x78] sm:$0xff]
        %v3592 = vld [vmem:[%s3580 + $0x80] sm:$0xff]
        %v3593 = vld [vmem:[%s3580 + $0x90] sm:$0xff]
        %v3594 = vld [vmem:[%s3580 + $0x98] sm:$0xff]
        %v3595 = vld [vmem:[%s3580 + $0xa8] sm:$0xff]
        %v3596 = vld [vmem:[%s3580 + $0xb0] sm:$0xff]
        %v3597 = vld [vmem:[%s3580 + $0xc0] sm:$0xff]
        %v3598 = vld [vmem:[%s3580 + $0xc8] sm:$0xff]
        %v3599 = vld [vmem:[%s3580 + $0xd8] sm:$0xff]
        %v3600 = vld [vmem:[%s3580 + $0xe0] sm:$0xff]
        %v3601 = vld [vmem:[%s3580 + $0xf0] sm:$0xff]
        %v3602 = vld [vmem:[%s3580 + $0xf8] sm:$0xff]
        %v3603 = vld [vmem:[%s3580 + $0x108] sm:$0xff]
        %v3604 = vld [vmem:[%s3580 + $0x110] sm:$0xff]
        %v3605 = vld [vmem:[%s3580 + $0x120] sm:$0xff]
        %v3606 = vld [vmem:[%s3580 + $0x128] sm:$0xff]
        %v3607 = vld [vmem:[%s3580 + $0x138] sm:$0xff]
        %v3608 = vld [vmem:[%s3580 + $0x140] sm:$0xff]
        %v3609 = vld [vmem:[%s3580 + $0x150] sm:$0xff]
        %v3610 = vld [vmem:[%s3580 + $0x158] sm:$0xff]
        %v3611 = vld [vmem:[%s3580 + $0x168] sm:$0xff]
        %v3612 = vld [vmem:[%s3580 + $0x170] sm:$0xff]
        %v3613 = vld [vmem:[%s3580 + $0x1] sm:$0xff]
        %v3614 = vld [vmem:[%s3580 + $0x9] sm:$0xff]
        %v3615 = vld [vmem:[%s3580 + $0x19] sm:$0xff]
        %v3616 = vld [vmem:[%s3580 + $0x21] sm:$0xff]
        %v3617 = vld [vmem:[%s3580 + $0x31] sm:$0xff]
        %v3618 = vld [vmem:[%s3580 + $0x39] sm:$0xff]
        %v3619 = vld [vmem:[%s3580 + $0x49] sm:$0xff]
        %v3620 = vld [vmem:[%s3580 + $0x51] sm:$0xff]
        %v3621 = vld [vmem:[%s3580 + $0x61] sm:$0xff]
        %v3622 = vld [vmem:[%s3580 + $0x69] sm:$0xff]
        %v3623 = vld [vmem:[%s3580 + $0x79] sm:$0xff]
        %v3624 = vld [vmem:[%s3580 + $0x81] sm:$0xff]
        %v3625 = vld [vmem:[%s3580 + $0x91] sm:$0xff]
        %v3626 = vld [vmem:[%s3580 + $0x99] sm:$0xff]
        %v3627 = vld [vmem:[%s3580 + $0xa9] sm:$0xff]
        %v3628 = vld [vmem:[%s3580 + $0xb1] sm:$0xff]
        %v3629 = vld [vmem:[%s3580 + $0xc1] sm:$0xff]
        %v3630 = vld [vmem:[%s3580 + $0xc9] sm:$0xff]
        %v3631 = vld [vmem:[%s3580 + $0xd9] sm:$0xff]
        %v3632 = vld [vmem:[%s3580 + $0xe1] sm:$0xff]
        %v3633 = vld [vmem:[%s3580 + $0xf1] sm:$0xff]
        %v3634 = vld [vmem:[%s3580 + $0xf9] sm:$0xff]
        %v3635 = vld [vmem:[%s3580 + $0x109] sm:$0xff]
        %v3636 = vld [vmem:[%s3580 + $0x111] sm:$0xff]
        %v3637 = vld [vmem:[%s3580 + $0x121] sm:$0xff]
        %v3638 = vld [vmem:[%s3580 + $0x129] sm:$0xff]
        %v3639 = vld [vmem:[%s3580 + $0x139] sm:$0xff]
        %v3640 = vld [vmem:[%s3580 + $0x141] sm:$0xff]
        %v3641 = vld [vmem:[%s3580 + $0x151] sm:$0xff]
        %v3642 = vld [vmem:[%s3580 + $0x159] sm:$0xff]
        %v3643 = vld [vmem:[%s3580 + $0x169] sm:$0xff]
        %v3644 = vld [vmem:[%s3580 + $0x171] sm:$0xff]
        %v3645 = vld [vmem:[%s3580 + $0x2] sm:$0xff]
        %v3646 = vld [vmem:[%s3580 + $0xa] sm:$0xff]
        %v3647 = vld [vmem:[%s3580 + $0x1a] sm:$0xff]
        %v3648 = vld [vmem:[%s3580 + $0x22] sm:$0xff]
        %v3649 = vld [vmem:[%s3580 + $0x32] sm:$0xff]
        %v3650 = vld [vmem:[%s3580 + $0x3a] sm:$0xff]
        %v3651 = vld [vmem:[%s3580 + $0x4a] sm:$0xff]
        %v3652 = vld [vmem:[%s3580 + $0x52] sm:$0xff]
        %v3653 = vld [vmem:[%s3580 + $0x62] sm:$0xff]
        %v3654 = vld [vmem:[%s3580 + $0x6a] sm:$0xff]
        %v3655 = vld [vmem:[%s3580 + $0x7a] sm:$0xff]
        %v3656 = vld [vmem:[%s3580 + $0x82] sm:$0xff]
        %v3657 = vld [vmem:[%s3580 + $0x92] sm:$0xff]
        %v3658 = vld [vmem:[%s3580 + $0x9a] sm:$0xff]
        %v3659 = vld [vmem:[%s3580 + $0xaa] sm:$0xff]
        %v3660 = vld [vmem:[%s3580 + $0xb2] sm:$0xff]
        %v3661 = vld [vmem:[%s3580 + $0xc2] sm:$0xff]
        %v3662 = vld [vmem:[%s3580 + $0xca] sm:$0xff]
        %v3663 = vld [vmem:[%s3580 + $0xda] sm:$0xff]
        %v3664 = vld [vmem:[%s3580 + $0xe2] sm:$0xff]
        %v3665 = vld [vmem:[%s3580 + $0xf2] sm:$0xff]
        %v3666 = vld [vmem:[%s3580 + $0xfa] sm:$0xff]
        %v3667 = vld [vmem:[%s3580 + $0x10a] sm:$0xff]
        %v3668 = vld [vmem:[%s3580 + $0x112] sm:$0xff]
        %v3669 = vld [vmem:[%s3580 + $0x122] sm:$0xff]
        %v3670 = vld [vmem:[%s3580 + $0x12a] sm:$0xff]
        %v3671 = vld [vmem:[%s3580 + $0x13a] sm:$0xff]
        %v3672 = vld [vmem:[%s3580 + $0x142] sm:$0xff]
        %v3673 = vld [vmem:[%s3580 + $0x152] sm:$0xff]
        %v3674 = vld [vmem:[%s3580 + $0x15a] sm:$0xff]
        %v3675 = vld [vmem:[%s3580 + $0x16a] sm:$0xff]
        %v3676 = vld [vmem:[%s3580 + $0x172] sm:$0xff]
        %3709 = vrot.lane.b32.xlu0 %v3420, 64
        %v3710 = vpop.permute.xlu0 %3709
        %3711 = vrot.lane.b32.xlu0 %v3421, 64
        %v3712 = vpop.permute.xlu0 %3711
        %3713 = vrot.lane.b32.xlu0 %v3422, 64
        %v3714 = vpop.permute.xlu0 %3713
        %3715 = vrot.lane.b32.xlu0 %v3423, 64
        %v3716 = vpop.permute.xlu0 %3715
        %3717 = vrot.lane.b32.xlu0 %v3424, 64
        %v3718 = vpop.permute.xlu0 %3717
        %3719 = vrot.lane.b32.xlu0 %v3425, 64
        %v3720 = vpop.permute.xlu0 %3719
        %3721 = vrot.lane.b32.xlu0 %v3426, 64
        %v3722 = vpop.permute.xlu0 %3721
        %3723 = vrot.lane.b32.xlu0 %v3427, 64
        %v3724 = vpop.permute.xlu0 %3723
        %3725 = vrot.lane.b32.xlu0 %v3428, 64
        %v3726 = vpop.permute.xlu0 %3725
        %3727 = vrot.lane.b32.xlu0 %v3429, 64
        %v3728 = vpop.permute.xlu0 %3727
        %3729 = vrot.lane.b32.xlu0 %v3430, 64
        %v3730 = vpop.permute.xlu0 %3729
        %3731 = vrot.lane.b32.xlu0 %v3431, 64
        %v3732 = vpop.permute.xlu0 %3731
        %3733 = vrot.lane.b32.xlu0 %v3432, 64
        %v3734 = vpop.permute.xlu0 %3733
        %3735 = vrot.lane.b32.xlu0 %v3433, 64
        %v3736 = vpop.permute.xlu0 %3735
        %3737 = vrot.lane.b32.xlu0 %v3434, 64
        %v3738 = vpop.permute.xlu0 %3737
        %3739 = vrot.lane.b32.xlu0 %v3435, 64
        %v3740 = vpop.permute.xlu0 %3739
        %3741 = vrot.lane.b32.xlu0 %v3436, 64
        %v3742 = vpop.permute.xlu0 %3741
        %3743 = vrot.lane.b32.xlu0 %v3437, 64
        %v3744 = vpop.permute.xlu0 %3743
        %3745 = vrot.lane.b32.xlu0 %v3438, 64
        %v3746 = vpop.permute.xlu0 %3745
        %3747 = vrot.lane.b32.xlu0 %v3439, 64
        %v3748 = vpop.permute.xlu0 %3747
        %3749 = vrot.lane.b32.xlu0 %v3440, 64
        %v3750 = vpop.permute.xlu0 %3749
        %3751 = vrot.lane.b32.xlu0 %v3441, 64
        %v3752 = vpop.permute.xlu0 %3751
        %3753 = vrot.lane.b32.xlu0 %v3442, 64
        %v3754 = vpop.permute.xlu0 %3753
        %3755 = vrot.lane.b32.xlu0 %v3443, 64
        %v3756 = vpop.permute.xlu0 %3755
        %3757 = vrot.lane.b32.xlu0 %v3444, 64
        %v3758 = vpop.permute.xlu0 %3757
        %3759 = vrot.lane.b32.xlu0 %v3445, 64
        %v3760 = vpop.permute.xlu0 %3759
        %3761 = vrot.lane.b32.xlu0 %v3446, 64
        %v3762 = vpop.permute.xlu0 %3761
        %3763 = vrot.lane.b32.xlu0 %v3447, 64
        %v3764 = vpop.permute.xlu0 %3763
        %3765 = vrot.lane.b32.xlu0 %v3448, 64
        %v3766 = vpop.permute.xlu0 %3765
        %3767 = vrot.lane.b32.xlu0 %v3449, 64
        %v3768 = vpop.permute.xlu0 %3767
        %3769 = vrot.lane.b32.xlu0 %v3450, 64
        %v3770 = vpop.permute.xlu0 %3769
        %3771 = vrot.lane.b32.xlu0 %v3451, 64
        %v3772 = vpop.permute.xlu0 %3771
        %3837 = vrot.lane.b32.xlu0 %v3484, 64
        %v3838 = vpop.permute.xlu0 %3837
        %3839 = vrot.lane.b32.xlu0 %v3485, 64
        %v3840 = vpop.permute.xlu0 %3839
        %3841 = vrot.lane.b32.xlu0 %v3486, 64
        %v3842 = vpop.permute.xlu0 %3841
        %3843 = vrot.lane.b32.xlu0 %v3487, 64
        %v3844 = vpop.permute.xlu0 %3843
        %3845 = vrot.lane.b32.xlu0 %v3488, 64
        %v3846 = vpop.permute.xlu0 %3845
        %3847 = vrot.lane.b32.xlu0 %v3489, 64
        %v3848 = vpop.permute.xlu0 %3847
        %3849 = vrot.lane.b32.xlu0 %v3490, 64
        %v3850 = vpop.permute.xlu0 %3849
        %3851 = vrot.lane.b32.xlu0 %v3491, 64
        %v3852 = vpop.permute.xlu0 %3851
        %3853 = vrot.lane.b32.xlu0 %v3492, 64
        %v3854 = vpop.permute.xlu0 %3853
        %3855 = vrot.lane.b32.xlu0 %v3493, 64
        %v3856 = vpop.permute.xlu0 %3855
        %3857 = vrot.lane.b32.xlu0 %v3494, 64
        %v3858 = vpop.permute.xlu0 %3857
        %3859 = vrot.lane.b32.xlu0 %v3495, 64
        %v3860 = vpop.permute.xlu0 %3859
        %3861 = vrot.lane.b32.xlu0 %v3496, 64
        %v3862 = vpop.permute.xlu0 %3861
        %3863 = vrot.lane.b32.xlu0 %v3497, 64
        %v3864 = vpop.permute.xlu0 %3863
        %3865 = vrot.lane.b32.xlu0 %v3498, 64
        %v3866 = vpop.permute.xlu0 %3865
        %3867 = vrot.lane.b32.xlu0 %v3499, 64
        %v3868 = vpop.permute.xlu0 %3867
        %3869 = vrot.lane.b32.xlu0 %v3500, 64
        %v3870 = vpop.permute.xlu0 %3869
        %3871 = vrot.lane.b32.xlu0 %v3501, 64
        %v3872 = vpop.permute.xlu0 %3871
        %3873 = vrot.lane.b32.xlu0 %v3502, 64
        %v3874 = vpop.permute.xlu0 %3873
        %3875 = vrot.lane.b32.xlu0 %v3503, 64
        %v3876 = vpop.permute.xlu0 %3875
        %3877 = vrot.lane.b32.xlu0 %v3504, 64
        %v3878 = vpop.permute.xlu0 %3877
        %3879 = vrot.lane.b32.xlu0 %v3505, 64
        %v3880 = vpop.permute.xlu0 %3879
        %3881 = vrot.lane.b32.xlu0 %v3506, 64
        %v3882 = vpop.permute.xlu0 %3881
        %3883 = vrot.lane.b32.xlu0 %v3507, 64
        %v3884 = vpop.permute.xlu0 %3883
        %3885 = vrot.lane.b32.xlu0 %v3508, 64
        %v3886 = vpop.permute.xlu0 %3885
        %3887 = vrot.lane.b32.xlu0 %v3509, 64
        %v3888 = vpop.permute.xlu0 %3887
        %3889 = vrot.lane.b32.xlu0 %v3510, 64
        %v3890 = vpop.permute.xlu0 %3889
        %3891 = vrot.lane.b32.xlu0 %v3511, 64
        %v3892 = vpop.permute.xlu0 %3891
        %3893 = vrot.lane.b32.xlu0 %v3512, 64
        %v3894 = vpop.permute.xlu0 %3893
        %3895 = vrot.lane.b32.xlu0 %v3513, 64
        %v3896 = vpop.permute.xlu0 %3895
        %3897 = vrot.lane.b32.xlu0 %v3514, 64
        %v3898 = vpop.permute.xlu0 %3897
        %3899 = vrot.lane.b32.xlu0 %v3515, 64
        %v3900 = vpop.permute.xlu0 %3899
        %3965 = vrot.lane.b32.xlu0 %v3548, 64
        %v3966 = vpop.permute.xlu0 %3965
        %3967 = vrot.lane.b32.xlu0 %v3549, 64
        %v3968 = vpop.permute.xlu0 %3967
        %3969 = vrot.lane.b32.xlu0 %v3550, 64
        %v3970 = vpop.permute.xlu0 %3969
        %3971 = vrot.lane.b32.xlu0 %v3551, 64
        %v3972 = vpop.permute.xlu0 %3971
        %3973 = vrot.lane.b32.xlu0 %v3552, 64
        %v3974 = vpop.permute.xlu0 %3973
        %3975 = vrot.lane.b32.xlu0 %v3553, 64
        %v3976 = vpop.permute.xlu0 %3975
        %3977 = vrot.lane.b32.xlu0 %v3554, 64
        %v3978 = vpop.permute.xlu0 %3977
        %3979 = vrot.lane.b32.xlu0 %v3555, 64
        %v3980 = vpop.permute.xlu0 %3979
        %3981 = vrot.lane.b32.xlu0 %v3556, 64
        %v3982 = vpop.permute.xlu0 %3981
        %3983 = vrot.lane.b32.xlu0 %v3557, 64
        %v3984 = vpop.permute.xlu0 %3983
        %3985 = vrot.lane.b32.xlu0 %v3558, 64
        %v3986 = vpop.permute.xlu0 %3985
        %3987 = vrot.lane.b32.xlu0 %v3559, 64
        %v3988 = vpop.permute.xlu0 %3987
        %3989 = vrot.lane.b32.xlu0 %v3560, 64
        %v3990 = vpop.permute.xlu0 %3989
        %3991 = vrot.lane.b32.xlu0 %v3561, 64
        %v3992 = vpop.permute.xlu0 %3991
        %3993 = vrot.lane.b32.xlu0 %v3562, 64
        %v3994 = vpop.permute.xlu0 %3993
        %3995 = vrot.lane.b32.xlu0 %v3563, 64
        %v3996 = vpop.permute.xlu0 %3995
        %3997 = vrot.lane.b32.xlu0 %v3564, 64
        %v3998 = vpop.permute.xlu0 %3997
        %3999 = vrot.lane.b32.xlu0 %v3565, 64
        %v4000 = vpop.permute.xlu0 %3999
        %4001 = vrot.lane.b32.xlu0 %v3566, 64
        %v4002 = vpop.permute.xlu0 %4001
        %4003 = vrot.lane.b32.xlu0 %v3567, 64
        %v4004 = vpop.permute.xlu0 %4003
        %4005 = vrot.lane.b32.xlu0 %v3568, 64
        %v4006 = vpop.permute.xlu0 %4005
        %4007 = vrot.lane.b32.xlu0 %v3569, 64
        %v4008 = vpop.permute.xlu0 %4007
        %4009 = vrot.lane.b32.xlu0 %v3570, 64
        %v4010 = vpop.permute.xlu0 %4009
        %4011 = vrot.lane.b32.xlu0 %v3571, 64
        %v4012 = vpop.permute.xlu0 %4011
        %4013 = vrot.lane.b32.xlu0 %v3572, 64
        %v4014 = vpop.permute.xlu0 %4013
        %4015 = vrot.lane.b32.xlu0 %v3573, 64
        %v4016 = vpop.permute.xlu0 %4015
        %4017 = vrot.lane.b32.xlu0 %v3574, 64
        %v4018 = vpop.permute.xlu0 %4017
        %4019 = vrot.lane.b32.xlu0 %v3575, 64
        %v4020 = vpop.permute.xlu0 %4019
        %4021 = vrot.lane.b32.xlu0 %v3576, 64
        %v4022 = vpop.permute.xlu0 %4021
        %4023 = vrot.lane.b32.xlu0 %v3577, 64
        %v4024 = vpop.permute.xlu0 %4023
        %4025 = vrot.lane.b32.xlu0 %v3578, 64
        %v4026 = vpop.permute.xlu0 %4025
        %4027 = vrot.lane.b32.xlu0 %v3579, 64
        %v4028 = vpop.permute.xlu0 %4027
        %4093 = vrot.lane.b32.xlu0 %v3613, 64
        %v4094 = vpop.permute.xlu0 %4093
        %4095 = vrot.lane.b32.xlu0 %v3614, 64
        %v4096 = vpop.permute.xlu0 %4095
        %4097 = vrot.lane.b32.xlu0 %v3615, 64
        %v4098 = vpop.permute.xlu0 %4097
        %4099 = vrot.lane.b32.xlu0 %v3616, 64
        %v4100 = vpop.permute.xlu0 %4099
        %4101 = vrot.lane.b32.xlu0 %v3617, 64
        %v4102 = vpop.permute.xlu0 %4101
        %4103 = vrot.lane.b32.xlu0 %v3618, 64
        %v4104 = vpop.permute.xlu0 %4103
        %4105 = vrot.lane.b32.xlu0 %v3619, 64
        %v4106 = vpop.permute.xlu0 %4105
        %4107 = vrot.lane.b32.xlu0 %v3620, 64
        %v4108 = vpop.permute.xlu0 %4107
        %4109 = vrot.lane.b32.xlu0 %v3621, 64
        %v4110 = vpop.permute.xlu0 %4109
        %4111 = vrot.lane.b32.xlu0 %v3622, 64
        %v4112 = vpop.permute.xlu0 %4111
        %4113 = vrot.lane.b32.xlu0 %v3623, 64
        %v4114 = vpop.permute.xlu0 %4113
        %4115 = vrot.lane.b32.xlu0 %v3624, 64
        %v4116 = vpop.permute.xlu0 %4115
        %4117 = vrot.lane.b32.xlu0 %v3625, 64
        %v4118 = vpop.permute.xlu0 %4117
        %4119 = vrot.lane.b32.xlu0 %v3626, 64
        %v4120 = vpop.permute.xlu0 %4119
        %4121 = vrot.lane.b32.xlu0 %v3627, 64
        %v4122 = vpop.permute.xlu0 %4121
        %4123 = vrot.lane.b32.xlu0 %v3628, 64
        %v4124 = vpop.permute.xlu0 %4123
        %4125 = vrot.lane.b32.xlu0 %v3629, 64
        %v4126 = vpop.permute.xlu0 %4125
        %4127 = vrot.lane.b32.xlu0 %v3630, 64
        %v4128 = vpop.permute.xlu0 %4127
        %4129 = vrot.lane.b32.xlu0 %v3631, 64
        %v4130 = vpop.permute.xlu0 %4129
        %4131 = vrot.lane.b32.xlu0 %v3632, 64
        %v4132 = vpop.permute.xlu0 %4131
        %4133 = vrot.lane.b32.xlu0 %v3633, 64
        %v4134 = vpop.permute.xlu0 %4133
        %4135 = vrot.lane.b32.xlu0 %v3634, 64
        %v4136 = vpop.permute.xlu0 %4135
        %4137 = vrot.lane.b32.xlu0 %v3635, 64
        %v4138 = vpop.permute.xlu0 %4137
        %4139 = vrot.lane.b32.xlu0 %v3636, 64
        %v4140 = vpop.permute.xlu0 %4139
        %4141 = vrot.lane.b32.xlu0 %v3637, 64
        %v4142 = vpop.permute.xlu0 %4141
        %4143 = vrot.lane.b32.xlu0 %v3638, 64
        %v4144 = vpop.permute.xlu0 %4143
        %4145 = vrot.lane.b32.xlu0 %v3639, 64
        %v4146 = vpop.permute.xlu0 %4145
        %4147 = vrot.lane.b32.xlu0 %v3640, 64
        %v4148 = vpop.permute.xlu0 %4147
        %4149 = vrot.lane.b32.xlu0 %v3641, 64
        %v4150 = vpop.permute.xlu0 %4149
        %4151 = vrot.lane.b32.xlu0 %v3642, 64
        %v4152 = vpop.permute.xlu0 %4151
        %4153 = vrot.lane.b32.xlu0 %v3643, 64
        %v4154 = vpop.permute.xlu0 %4153
        %4155 = vrot.lane.b32.xlu0 %v3644, 64
        %v4156 = vpop.permute.xlu0 %4155
        %v4189 = vsel %vm374, %v3388, %v3710
        %v4190 = vsel %vm374, %v3389, %v3712
        %v4191 = vsel %vm374, %v3390, %v3714
        %v4192 = vsel %vm374, %v3391, %v3716
        %v4193 = vsel %vm374, %v3392, %v3718
        %v4194 = vsel %vm374, %v3393, %v3720
        %v4195 = vsel %vm374, %v3394, %v3722
        %v4196 = vsel %vm374, %v3395, %v3724
        %v4197 = vsel %vm374, %v3396, %v3726
        %v4198 = vsel %vm374, %v3397, %v3728
        %v4199 = vsel %vm374, %v3398, %v3730
        %v4200 = vsel %vm374, %v3399, %v3732
        %v4201 = vsel %vm374, %v3400, %v3734
        %v4202 = vsel %vm374, %v3401, %v3736
        %v4203 = vsel %vm374, %v3402, %v3738
        %v4204 = vsel %vm374, %v3403, %v3740
        %v4205 = vsel %vm374, %v3404, %v3742
        %v4206 = vsel %vm374, %v3405, %v3744
        %v4207 = vsel %vm374, %v3406, %v3746
        %v4208 = vsel %vm374, %v3407, %v3748
        %v4209 = vsel %vm374, %v3408, %v3750
        %v4210 = vsel %vm374, %v3409, %v3752
        %v4211 = vsel %vm374, %v3410, %v3754
        %v4212 = vsel %vm374, %v3411, %v3756
        %v4213 = vsel %vm374, %v3412, %v3758
        %v4214 = vsel %vm374, %v3413, %v3760
        %v4215 = vsel %vm374, %v3414, %v3762
        %v4216 = vsel %vm374, %v3415, %v3764
        %v4217 = vsel %vm374, %v3416, %v3766
        %v4218 = vsel %vm374, %v3417, %v3768
        %v4219 = vsel %vm374, %v3418, %v3770
        %v4220 = vsel %vm374, %v3419, %v3772
        %v4221 = vsel %vm374, %v3452, %v3838
        %v4222 = vsel %vm374, %v3453, %v3840
        %v4223 = vsel %vm374, %v3454, %v3842
        %v4224 = vsel %vm374, %v3455, %v3844
        %v4225 = vsel %vm374, %v3456, %v3846
        %v4226 = vsel %vm374, %v3457, %v3848
        %v4227 = vsel %vm374, %v3458, %v3850
        %v4228 = vsel %vm374, %v3459, %v3852
        %v4229 = vsel %vm374, %v3460, %v3854
        %v4230 = vsel %vm374, %v3461, %v3856
        %v4231 = vsel %vm374, %v3462, %v3858
        %v4232 = vsel %vm374, %v3463, %v3860
        %v4233 = vsel %vm374, %v3464, %v3862
        %v4234 = vsel %vm374, %v3465, %v3864
        %v4235 = vsel %vm374, %v3466, %v3866
        %v4236 = vsel %vm374, %v3467, %v3868
        %v4237 = vsel %vm374, %v3468, %v3870
        %v4238 = vsel %vm374, %v3469, %v3872
        %v4239 = vsel %vm374, %v3470, %v3874
        %v4240 = vsel %vm374, %v3471, %v3876
        %v4241 = vsel %vm374, %v3472, %v3878
        %v4242 = vsel %vm374, %v3473, %v3880
        %v4243 = vsel %vm374, %v3474, %v3882
        %v4244 = vsel %vm374, %v3475, %v3884
        %v4245 = vsel %vm374, %v3476, %v3886
        %v4246 = vsel %vm374, %v3477, %v3888
        %v4247 = vsel %vm374, %v3478, %v3890
        %v4248 = vsel %vm374, %v3479, %v3892
        %v4249 = vsel %vm374, %v3480, %v3894
        %v4250 = vsel %vm374, %v3481, %v3896
        %v4251 = vsel %vm374, %v3482, %v3898
        %v4252 = vsel %vm374, %v3483, %v3900
        %v4253 = vsel %vm374, %v3516, %v3966
        %v4254 = vsel %vm374, %v3517, %v3968
        %v4255 = vsel %vm374, %v3518, %v3970
        %v4256 = vsel %vm374, %v3519, %v3972
        %v4257 = vsel %vm374, %v3520, %v3974
        %v4258 = vsel %vm374, %v3521, %v3976
        %v4259 = vsel %vm374, %v3522, %v3978
        %v4260 = vsel %vm374, %v3523, %v3980
        %v4261 = vsel %vm374, %v3524, %v3982
        %v4262 = vsel %vm374, %v3525, %v3984
        %v4263 = vsel %vm374, %v3526, %v3986
        %v4264 = vsel %vm374, %v3527, %v3988
        %v4265 = vsel %vm374, %v3528, %v3990
        %v4266 = vsel %vm374, %v3529, %v3992
        %v4267 = vsel %vm374, %v3530, %v3994
        %v4268 = vsel %vm374, %v3531, %v3996
        %v4269 = vsel %vm374, %v3532, %v3998
        %v4270 = vsel %vm374, %v3533, %v4000
        %v4271 = vsel %vm374, %v3534, %v4002
        %v4272 = vsel %vm374, %v3535, %v4004
        %v4273 = vsel %vm374, %v3536, %v4006
        %v4274 = vsel %vm374, %v3537, %v4008
        %v4275 = vsel %vm374, %v3538, %v4010
        %v4276 = vsel %vm374, %v3539, %v4012
        %v4277 = vsel %vm374, %v3540, %v4014
        %v4278 = vsel %vm374, %v3541, %v4016
        %v4279 = vsel %vm374, %v3542, %v4018
        %v4280 = vsel %vm374, %v3543, %v4020
        %v4281 = vsel %vm374, %v3544, %v4022
        %v4282 = vsel %vm374, %v3545, %v4024
        %v4283 = vsel %vm374, %v3546, %v4026
        %v4284 = vsel %vm374, %v3547, %v4028
        %v4285 = vsel %vm374, %v3581, %v4094
        %v4286 = vsel %vm374, %v3582, %v4096
        %v4287 = vsel %vm374, %v3583, %v4098
        %v4288 = vsel %vm374, %v3584, %v4100
        %v4289 = vsel %vm374, %v3585, %v4102
        %v4290 = vsel %vm374, %v3586, %v4104
        %v4291 = vsel %vm374, %v3587, %v4106
        %v4292 = vsel %vm374, %v3588, %v4108
        %v4293 = vsel %vm374, %v3589, %v4110
        %v4294 = vsel %vm374, %v3590, %v4112
        %v4295 = vsel %vm374, %v3591, %v4114
        %v4296 = vsel %vm374, %v3592, %v4116
        %v4297 = vsel %vm374, %v3593, %v4118
        %v4298 = vsel %vm374, %v3594, %v4120
        %v4299 = vsel %vm374, %v3595, %v4122
        %v4300 = vsel %vm374, %v3596, %v4124
        %v4301 = vsel %vm374, %v3597, %v4126
        %v4302 = vsel %vm374, %v3598, %v4128
        %v4303 = vsel %vm374, %v3599, %v4130
        %v4304 = vsel %vm374, %v3600, %v4132
        %v4305 = vsel %vm374, %v3601, %v4134
        %v4306 = vsel %vm374, %v3602, %v4136
        %v4307 = vsel %vm374, %v3603, %v4138
        %v4308 = vsel %vm374, %v3604, %v4140
        %v4309 = vsel %vm374, %v3605, %v4142
        %v4310 = vsel %vm374, %v3606, %v4144
        %v4311 = vsel %vm374, %v3607, %v4146
        %v4312 = vsel %vm374, %v3608, %v4148
        %v4313 = vsel %vm374, %v3609, %v4150
        %v4314 = vsel %vm374, %v3610, %v4152
        %v4315 = vsel %vm374, %v3611, %v4154
        %v4316 = vsel %vm374, %v3612, %v4156
        %v4317 = vpack.c.bf16 %v4190, %v4189
        %v4318 = vpack.c.bf16 %v4222, %v4221
        %v4319 = vpack.c.bf16 %v4254, %v4253
        %v4320 = vpack.c.bf16 %v4286, %v4285
        %v4321 = vpack.c.bf16 %v3646, %v3645
        %v4322 = vpack.c.bf16 %v4192, %v4191
        %v4323 = vpack.c.bf16 %v4224, %v4223
        %v4324 = vpack.c.bf16 %v4256, %v4255
        %v4325 = vpack.c.bf16 %v4288, %v4287
        %v4326 = vpack.c.bf16 %v3648, %v3647
        %v4327 = vpack.c.bf16 %v4194, %v4193
        %v4328 = vpack.c.bf16 %v4226, %v4225
        %v4329 = vpack.c.bf16 %v4258, %v4257
        %v4330 = vpack.c.bf16 %v4290, %v4289
        %v4331 = vpack.c.bf16 %v3650, %v3649
        %v4332 = vpack.c.bf16 %v4196, %v4195
        %v4333 = vpack.c.bf16 %v4228, %v4227
        %v4334 = vpack.c.bf16 %v4260, %v4259
        %v4335 = vpack.c.bf16 %v4292, %v4291
        %v4336 = vpack.c.bf16 %v3652, %v3651
        %v4337 = vpack.c.bf16 %v4198, %v4197
        %v4338 = vpack.c.bf16 %v4230, %v4229
        %v4339 = vpack.c.bf16 %v4262, %v4261
        %v4340 = vpack.c.bf16 %v4294, %v4293
        %v4341 = vpack.c.bf16 %v3654, %v3653
        %v4342 = vpack.c.bf16 %v4200, %v4199
        %v4343 = vpack.c.bf16 %v4232, %v4231
        %v4344 = vpack.c.bf16 %v4264, %v4263
        %v4345 = vpack.c.bf16 %v4296, %v4295
        %v4346 = vpack.c.bf16 %v3656, %v3655
        %v4347 = vpack.c.bf16 %v4202, %v4201
        %v4348 = vpack.c.bf16 %v4234, %v4233
        %v4349 = vpack.c.bf16 %v4266, %v4265
        %v4350 = vpack.c.bf16 %v4298, %v4297
        %v4351 = vpack.c.bf16 %v3658, %v3657
        %v4352 = vpack.c.bf16 %v4204, %v4203
        %v4353 = vpack.c.bf16 %v4236, %v4235
        %v4354 = vpack.c.bf16 %v4268, %v4267
        %v4355 = vpack.c.bf16 %v4300, %v4299
        %v4356 = vpack.c.bf16 %v3660, %v3659
        %v4357 = vpack.c.bf16 %v4206, %v4205
        %v4358 = vpack.c.bf16 %v4238, %v4237
        %v4359 = vpack.c.bf16 %v4270, %v4269
        %v4360 = vpack.c.bf16 %v4302, %v4301
        %v4361 = vpack.c.bf16 %v3662, %v3661
        %v4362 = vpack.c.bf16 %v4208, %v4207
        %v4363 = vpack.c.bf16 %v4240, %v4239
        %v4364 = vpack.c.bf16 %v4272, %v4271
        %v4365 = vpack.c.bf16 %v4304, %v4303
        %v4366 = vpack.c.bf16 %v3664, %v3663
        %v4367 = vpack.c.bf16 %v4210, %v4209
        %v4368 = vpack.c.bf16 %v4242, %v4241
        %v4369 = vpack.c.bf16 %v4274, %v4273
        %v4370 = vpack.c.bf16 %v4306, %v4305
        %v4371 = vpack.c.bf16 %v3666, %v3665
        %v4372 = vpack.c.bf16 %v4212, %v4211
        %v4373 = vpack.c.bf16 %v4244, %v4243
        %v4374 = vpack.c.bf16 %v4276, %v4275
        %v4375 = vpack.c.bf16 %v4308, %v4307
        %v4376 = vpack.c.bf16 %v3668, %v3667
        %v4377 = vpack.c.bf16 %v4214, %v4213
        %v4378 = vpack.c.bf16 %v4246, %v4245
        %v4379 = vpack.c.bf16 %v4278, %v4277
        %v4380 = vpack.c.bf16 %v4310, %v4309
        %v4381 = vpack.c.bf16 %v3670, %v3669
        %v4382 = vpack.c.bf16 %v4216, %v4215
        %v4383 = vpack.c.bf16 %v4248, %v4247
        %v4384 = vpack.c.bf16 %v4280, %v4279
        %v4385 = vpack.c.bf16 %v4312, %v4311
        %v4386 = vpack.c.bf16 %v3672, %v3671
        %v4387 = vpack.c.bf16 %v4218, %v4217
        %v4388 = vpack.c.bf16 %v4250, %v4249
        %v4389 = vpack.c.bf16 %v4282, %v4281
        %v4390 = vpack.c.bf16 %v4314, %v4313
        %v4391 = vpack.c.bf16 %v3674, %v3673
        %v4392 = vpack.c.bf16 %v4220, %v4219
        %v4393 = vpack.c.bf16 %v4252, %v4251
        %v4394 = vpack.c.bf16 %v4284, %v4283
        %v4395 = vpack.c.bf16 %v4316, %v4315
        %v4396 = vpack.c.bf16 %v3676, %v3675
        %v4397 = vld [vmem:[%s8] sm:$0xf]
        %v4398 = vld [vmem:[%s8 + $0x4] sm:$0xf]
        %v4399 = vld [vmem:[%s8 + $0x8] sm:$0xf]
        %v4400 = vld [vmem:[%s8 + $0xc] sm:$0xf]
        %v4401 = vld [vmem:[%s8 + $0x10] sm:$0xf]
        %v4402 = vld [vmem:[%s8 + $0x14] sm:$0xf]
        %v4403 = vld [vmem:[%s8 + $0x18] sm:$0xf]
        %v4404 = vld [vmem:[%s8 + $0x1c] sm:$0xf]
        %v4405 = vld [vmem:[%s8 + $0x20] sm:$0xf]
        %v4406 = vld [vmem:[%s8 + $0x24] sm:$0xf]
        %v4407 = vld [vmem:[%s8 + $0x28] sm:$0xf]
        %v4408 = vld [vmem:[%s8 + $0x2c] sm:$0xf]
        %v4409 = vld [vmem:[%s8 + $0x30] sm:$0xf]
        %v4410 = vld [vmem:[%s8 + $0x34] sm:$0xf]
        %v4411 = vld [vmem:[%s8 + $0x38] sm:$0xf]
        %v4412 = vld [vmem:[%s8 + $0x3c] sm:$0xf]
        %v4413 = vld [vmem:[%s8 + $0x40] sm:$0xf]
        %v4414 = vld [vmem:[%s8 + $0x44] sm:$0xf]
        %v4415 = vld [vmem:[%s8 + $0x48] sm:$0xf]
        %v4416 = vld [vmem:[%s8 + $0x4c] sm:$0xf]
        %v4417 = vld [vmem:[%s8 + $0x50] sm:$0xf]
        %v4418 = vld [vmem:[%s8 + $0x54] sm:$0xf]
        %v4419 = vld [vmem:[%s8 + $0x58] sm:$0xf]
        %v4420 = vld [vmem:[%s8 + $0x5c] sm:$0xf]
        %v4421 = vld [vmem:[%s8 + $0x60] sm:$0xf]
        %v4422 = vld [vmem:[%s8 + $0x64] sm:$0xf]
        %v4423 = vld [vmem:[%s8 + $0x68] sm:$0xf]
        %v4424 = vld [vmem:[%s8 + $0x6c] sm:$0xf]
        %v4425 = vld [vmem:[%s8 + $0x70] sm:$0xf]
        %v4426 = vld [vmem:[%s8 + $0x74] sm:$0xf]
        %v4427 = vld [vmem:[%s8 + $0x78] sm:$0xf]
        %v4428 = vld [vmem:[%s8 + $0x7c] sm:$0xf]
        %v4429 = vld [vmem:[%s8 + $0x80] sm:$0xf]
        %v4430 = vld [vmem:[%s8 + $0x84] sm:$0xf]
        %v4431 = vld [vmem:[%s8 + $0x88] sm:$0xf]
        %v4432 = vld [vmem:[%s8 + $0x8c] sm:$0xf]
        %v4433 = vld [vmem:[%s8 + $0x90] sm:$0xf]
        %v4434 = vld [vmem:[%s8 + $0x94] sm:$0xf]
        %v4435 = vld [vmem:[%s8 + $0x98] sm:$0xf]
        %v4436 = vld [vmem:[%s8 + $0x9c] sm:$0xf]
        %v4437 = vld [vmem:[%s8 + $0xa0] sm:$0xf]
        %v4438 = vld [vmem:[%s8 + $0xa4] sm:$0xf]
        %v4439 = vld [vmem:[%s8 + $0xa8] sm:$0xf]
        %v4440 = vld [vmem:[%s8 + $0xac] sm:$0xf]
        %v4441 = vld [vmem:[%s8 + $0xb0] sm:$0xf]
        %v4442 = vld [vmem:[%s8 + $0xb4] sm:$0xf]
        %v4443 = vld [vmem:[%s8 + $0xb8] sm:$0xf]
        %v4444 = vld [vmem:[%s8 + $0xbc] sm:$0xf]
        %v4445 = vld [vmem:[%s8 + $0xc0] sm:$0xf]
        %v4446 = vld [vmem:[%s8 + $0xc4] sm:$0xf]
        %v4447 = vld [vmem:[%s8 + $0xc8] sm:$0xf]
        %v4448 = vld [vmem:[%s8 + $0xcc] sm:$0xf]
        %v4449 = vld [vmem:[%s8 + $0xd0] sm:$0xf]
        %v4450 = vld [vmem:[%s8 + $0xd4] sm:$0xf]
        %v4451 = vld [vmem:[%s8 + $0xd8] sm:$0xf]
        %v4452 = vld [vmem:[%s8 + $0xdc] sm:$0xf]
        %v4453 = vld [vmem:[%s8 + $0xe0] sm:$0xf]
        %v4454 = vld [vmem:[%s8 + $0xe4] sm:$0xf]
        %v4455 = vld [vmem:[%s8 + $0xe8] sm:$0xf]
        %v4456 = vld [vmem:[%s8 + $0xec] sm:$0xf]
        %v4457 = vld [vmem:[%s8 + $0xf0] sm:$0xf]
        %v4458 = vld [vmem:[%s8 + $0xf4] sm:$0xf]
        %v4459 = vld [vmem:[%s8 + $0xf8] sm:$0xf]
        %v4460 = vld [vmem:[%s8 + $0xfc] sm:$0xf]
        %v4461 = vld [vmem:[%s8 + $0x100] sm:$0xf]
        %v4462 = vld [vmem:[%s8 + $0x104] sm:$0xf]
        %v4463 = vld [vmem:[%s8 + $0x108] sm:$0xf]
        %v4464 = vld [vmem:[%s8 + $0x10c] sm:$0xf]
        %v4465 = vld [vmem:[%s8 + $0x110] sm:$0xf]
        %v4466 = vld [vmem:[%s8 + $0x114] sm:$0xf]
        %v4467 = vld [vmem:[%s8 + $0x118] sm:$0xf]
        %v4468 = vld [vmem:[%s8 + $0x11c] sm:$0xf]
        %v4541 = vunpack.c.l.b16 %v4397
        %v4542 = vunpack.c.l.b16 %v4398
        %v4543 = vunpack.c.l.b16 %v4399
        %v4544 = vunpack.c.l.b16 %v4400
        %v4545 = vunpack.c.l.b16 %v4401
        %v4546 = vunpack.c.l.b16 %v4402
        %v4547 = vunpack.c.l.b16 %v4403
        %v4548 = vunpack.c.l.b16 %v4404
        %v4549 = vunpack.c.l.b16 %v4405
        %v4550 = vunpack.c.l.b16 %v4406
        %v4551 = vunpack.c.l.b16 %v4407
        %v4552 = vunpack.c.l.b16 %v4408
        %v4553 = vunpack.c.l.b16 %v4409
        %v4554 = vunpack.c.l.b16 %v4410
        %v4555 = vunpack.c.l.b16 %v4411
        %v4556 = vunpack.c.l.b16 %v4412
        %v4557 = vunpack.c.l.b16 %v4413
        %v4558 = vunpack.c.l.b16 %v4414
        %v4559 = vunpack.c.l.b16 %v4415
        %v4560 = vunpack.c.l.b16 %v4416
        %v4561 = vunpack.c.l.b16 %v4417
        %v4562 = vunpack.c.l.b16 %v4418
        %v4563 = vunpack.c.l.b16 %v4419
        %v4564 = vunpack.c.l.b16 %v4420
        %v4565 = vunpack.c.l.b16 %v4421
        %v4566 = vunpack.c.l.b16 %v4422
        %v4567 = vunpack.c.l.b16 %v4423
        %v4568 = vunpack.c.l.b16 %v4424
        %v4569 = vunpack.c.l.b16 %v4425
        %v4570 = vunpack.c.l.b16 %v4426
        %v4571 = vunpack.c.l.b16 %v4427
        %v4572 = vunpack.c.l.b16 %v4428
        %v4573 = vunpack.c.l.b16 %v4429
        %v4574 = vunpack.c.l.b16 %v4430
        %v4575 = vunpack.c.l.b16 %v4431
        %v4576 = vunpack.c.l.b16 %v4432
        %v4577 = vunpack.c.l.b16 %v4433
        %v4578 = vunpack.c.l.b16 %v4434
        %v4579 = vunpack.c.l.b16 %v4435
        %v4580 = vunpack.c.l.b16 %v4436
        %v4581 = vunpack.c.l.b16 %v4437
        %v4582 = vunpack.c.l.b16 %v4438
        %v4583 = vunpack.c.l.b16 %v4439
        %v4584 = vunpack.c.l.b16 %v4440
        %v4585 = vunpack.c.l.b16 %v4441
        %v4586 = vunpack.c.l.b16 %v4442
        %v4587 = vunpack.c.l.b16 %v4443
        %v4588 = vunpack.c.l.b16 %v4444
        %v4589 = vunpack.c.l.b16 %v4445
        %v4590 = vunpack.c.l.b16 %v4446
        %v4591 = vunpack.c.l.b16 %v4447
        %v4592 = vunpack.c.l.b16 %v4448
        %v4593 = vunpack.c.l.b16 %v4449
        %v4594 = vunpack.c.l.b16 %v4450
        %v4595 = vunpack.c.l.b16 %v4451
        %v4596 = vunpack.c.l.b16 %v4452
        %v4597 = vunpack.c.l.b16 %v4453
        %v4598 = vunpack.c.l.b16 %v4454
        %v4599 = vunpack.c.l.b16 %v4455
        %v4600 = vunpack.c.l.b16 %v4456
        %v4601 = vunpack.c.l.b16 %v4457
        %v4602 = vunpack.c.l.b16 %v4458
        %v4603 = vunpack.c.l.b16 %v4459
        %v4604 = vunpack.c.l.b16 %v4460
        %v4605 = vunpack.c.l.b16 %v4461
        %v4606 = vunpack.c.l.b16 %v4462
        %v4607 = vunpack.c.l.b16 %v4463
        %v4608 = vunpack.c.l.b16 %v4464
        %v4609 = vunpack.c.l.b16 %v4465
        %v4610 = vunpack.c.l.b16 %v4466
        %v4611 = vunpack.c.l.b16 %v4467
        %v4612 = vunpack.c.l.b16 %v4468
        %v4613 = vpack.c.b16 %v4542, %v4541
        %v4614 = vpack.c.b16 %v4544, %v4543
        %v4615 = vpack.c.b16 %v4546, %v4545
        %v4616 = vpack.c.b16 %v4548, %v4547
        %v4617 = vpack.c.b16 %v4550, %v4549
        %v4618 = vpack.c.b16 %v4552, %v4551
        %v4619 = vpack.c.b16 %v4554, %v4553
        %v4620 = vpack.c.b16 %v4556, %v4555
        %v4621 = vpack.c.b16 %v4558, %v4557
        %v4622 = vpack.c.b16 %v4560, %v4559
        %v4623 = vpack.c.b16 %v4562, %v4561
        %v4624 = vpack.c.b16 %v4564, %v4563
        %v4625 = vpack.c.b16 %v4566, %v4565
        %v4626 = vpack.c.b16 %v4568, %v4567
        %v4627 = vpack.c.b16 %v4570, %v4569
        %v4628 = vpack.c.b16 %v4572, %v4571
        %v4629 = vpack.c.b16 %v4574, %v4573
        %v4630 = vpack.c.b16 %v4576, %v4575
        %v4631 = vpack.c.b16 %v4578, %v4577
        %v4632 = vpack.c.b16 %v4580, %v4579
        %v4633 = vpack.c.b16 %v4582, %v4581
        %v4634 = vpack.c.b16 %v4584, %v4583
        %v4635 = vpack.c.b16 %v4586, %v4585
        %v4636 = vpack.c.b16 %v4588, %v4587
        %v4637 = vpack.c.b16 %v4590, %v4589
        %v4638 = vpack.c.b16 %v4592, %v4591
        %v4639 = vpack.c.b16 %v4594, %v4593
        %v4640 = vpack.c.b16 %v4596, %v4595
        %v4641 = vpack.c.b16 %v4598, %v4597
        %v4642 = vpack.c.b16 %v4600, %v4599
        %v4643 = vpack.c.b16 %v4602, %v4601
        %v4644 = vpack.c.b16 %v4604, %v4603
        %v4645 = vpack.c.b16 %v4606, %v4605
        %v4646 = vpack.c.b16 %v4608, %v4607
        %v4647 = vpack.c.b16 %v4610, %v4609
        %v4648 = vpack.c.b16 %v4612, %v4611
        %v4686 = vsel %vm374, %v4321, 0
        %v4689 = vsel %vm374, %v4326, 0
        %v4692 = vsel %vm374, %v4331, 0
        %v4695 = vsel %vm374, %v4336, 0
        %v4698 = vsel %vm374, %v4341, 0
        %v4701 = vsel %vm374, %v4346, 0
        %v4704 = vsel %vm374, %v4351, 0
        %v4707 = vsel %vm374, %v4356, 0
        %v4710 = vsel %vm374, %v4361, 0
        %v4713 = vsel %vm374, %v4366, 0
        %v4716 = vsel %vm374, %v4371, 0
        %v4719 = vsel %vm374, %v4376, 0
        %v4722 = vsel %vm374, %v4381, 0
        %v4725 = vsel %vm374, %v4386, 0
        %v4728 = vsel %vm374, %v4391, 0
        %v4731 = vsel %vm374, %v4396, 0
        %4733 = vmatprep.subr.bf16.mxu0 0
        %4734 = vmatpush1.bf16.msra.mxu0 %v4613
        %4735 = vmatprep.subr.bf16.mxu0 0
        %4736 = vmatpush1.bf16.msra.mxu0 %v4614
        %4737 = vmatprep.subr.bf16.mxu0 0
        %4738 = vmatpush1.bf16.msra.mxu0 %v4615
        %4739 = vmatprep.subr.bf16.mxu0 0
        %4740 = vmatpush1.bf16.msra.mxu0 %v4616
        %4741 = vmatprep.subr.bf16.mxu0 0
        %4742 = vmatpush1.bf16.msra.mxu0 %v4617
        %4743 = vmatprep.subr.bf16.mxu0 0
        %4744 = vmatpush1.bf16.msra.mxu0 %v4618
        %4745 = vmatprep.subr.bf16.mxu0 0
        %4746 = vmatpush1.bf16.msra.mxu0 %v4619
        %4747 = vmatprep.subr.bf16.mxu0 0
        %4748 = vmatpush1.bf16.msra.mxu0 %v4620
        %4749 = vmatprep.subr.bf16.mxu0 0
        %4750 = vmatpush1.bf16.msra.mxu0 %v4621
        %4751 = vmatprep.subr.bf16.mxu0 0
        %4752 = vmatpush1.bf16.msra.mxu0 %v4622
        %4753 = vmatprep.subr.bf16.mxu0 0
        %4754 = vmatpush1.bf16.msra.mxu0 %v4623
        %4755 = vmatprep.subr.bf16.mxu0 0
        %4756 = vmatpush1.bf16.msra.mxu0 %v4624
        %4757 = vmatprep.subr.bf16.mxu0 0
        %4758 = vmatpush1.bf16.msra.mxu0 %v4625
        %4759 = vmatprep.subr.bf16.mxu0 0
        %4760 = vmatpush1.bf16.msra.mxu0 %v4626
        %4761 = vmatprep.subr.bf16.mxu0 0
        %4762 = vmatpush1.bf16.msra.mxu0 %v4627
        %4763 = vmatprep.subr.bf16.mxu0 0
        %4764 = vmatpush1.bf16.msra.mxu0 %v4628
        %4765 = vmatprep.mubr.bf16.mxu0 %v4318
        %4766 = vmatmul.mubr.bf16.gmra.mrb[0].mxu0 %v4317
        %v4767 = vpop.f32.mrb[0].mxu0
        %v4768 = vadd.f32 %v332, %v4767
        %v4769 = vpop.f32.mrb[0].mxu0
        %v4770 = vpop.f32.mrb[0].mxu0
        %v4771 = vadd.f32 %v333, %v4770
        %v4772 = vpop.f32.mrb[0].mxu0
        %4773 = vmatprep.mubr.bf16.mxu0 %v4323
        %4774 = vmatmul.mubr.bf16.gmra.mrb[0].mxu0 %v4322
        %v4775 = vpop.f32.mrb[0].mxu0
        %v4776 = vadd.f32 %v334, %v4775
        %v4777 = vpop.f32.mrb[0].mxu0
        %v4778 = vpop.f32.mrb[0].mxu0
        %v4779 = vadd.f32 %v335, %v4778
        %v4780 = vpop.f32.mrb[0].mxu0
        %4781 = vmatprep.mubr.bf16.mxu0 %v4328
        %4782 = vmatmul.mubr.bf16.gmra.mrb[0].mxu0 %v4327
        %v4783 = vpop.f32.mrb[0].mxu0
        %v4784 = vadd.f32 %v336, %v4783
        %v4785 = vpop.f32.mrb[0].mxu0
        %v4786 = vpop.f32.mrb[0].mxu0
        %v4787 = vadd.f32 %v337, %v4786
        %v4788 = vpop.f32.mrb[0].mxu0
        %4789 = vmatprep.mubr.bf16.mxu0 %v4333
        %4790 = vmatmul.mubr.bf16.gmra.mrb[0].mxu0 %v4332
        %v4791 = vpop.f32.mrb[0].mxu0
        %v4792 = vadd.f32 %v338, %v4791
        %v4793 = vpop.f32.mrb[0].mxu0
        %v4794 = vpop.f32.mrb[0].mxu0
        %v4795 = vadd.f32 %v339, %v4794
        %v4796 = vpop.f32.mrb[0].mxu0
        %4797 = vmatprep.mubr.bf16.mxu0 %v4338
        %4798 = vmatmul.mubr.bf16.gmra.mrb[0].mxu0 %v4337
        %v4799 = vpop.f32.mrb[0].mxu0
        %v4800 = vadd.f32 %v340, %v4799
        %v4801 = vpop.f32.mrb[0].mxu0
        %v4802 = vpop.f32.mrb[0].mxu0
        %v4803 = vadd.f32 %v341, %v4802
        %v4804 = vpop.f32.mrb[0].mxu0
        %4805 = vmatprep.mubr.bf16.mxu0 %v4343
        %4806 = vmatmul.mubr.bf16.gmra.mrb[0].mxu0 %v4342
        %v4807 = vpop.f32.mrb[0].mxu0
        %v4808 = vadd.f32 %v342, %v4807
        %v4809 = vpop.f32.mrb[0].mxu0
        %v4810 = vpop.f32.mrb[0].mxu0
        %v4811 = vadd.f32 %v343, %v4810
        %v4812 = vpop.f32.mrb[0].mxu0
        %4813 = vmatprep.mubr.bf16.mxu0 %v4348
        %4814 = vmatmul.mubr.bf16.gmra.mrb[0].mxu0 %v4347
        %v4815 = vpop.f32.mrb[0].mxu0
        %v4816 = vadd.f32 %v344, %v4815
        %v4817 = vpop.f32.mrb[0].mxu0
        %v4818 = vpop.f32.mrb[0].mxu0
        %v4819 = vadd.f32 %v345, %v4818
        %v4820 = vpop.f32.mrb[0].mxu0
        %4821 = vmatprep.mubr.bf16.mxu0 %v4353
        %4822 = vmatmul.mubr.bf16.gmra.mrb[0].mxu0 %v4352
        %v4823 = vpop.f32.mrb[0].mxu0
        %v4824 = vadd.f32 %v346, %v4823
        %v4825 = vpop.f32.mrb[0].mxu0
        %v4826 = vpop.f32.mrb[0].mxu0
        %v4827 = vadd.f32 %v347, %v4826
        %v4828 = vpop.f32.mrb[0].mxu0
        %4829 = vmatprep.mubr.bf16.mxu0 %v4358
        %4830 = vmatmul.mubr.bf16.gmra.mrb[0].mxu0 %v4357
        %v4831 = vpop.f32.mrb[0].mxu0
        %v4832 = vadd.f32 %v348, %v4831
        %v4833 = vpop.f32.mrb[0].mxu0
        %v4834 = vpop.f32.mrb[0].mxu0
        %v4835 = vadd.f32 %v349, %v4834
        %v4836 = vpop.f32.mrb[0].mxu0
        %4837 = vmatprep.mubr.bf16.mxu0 %v4363
        %4838 = vmatmul.mubr.bf16.gmra.mrb[0].mxu0 %v4362
        %v4839 = vpop.f32.mrb[0].mxu0
        %v4840 = vadd.f32 %v350, %v4839
        %v4841 = vpop.f32.mrb[0].mxu0
        %v4842 = vpop.f32.mrb[0].mxu0
        %v4843 = vadd.f32 %v351, %v4842
        %v4844 = vpop.f32.mrb[0].mxu0
        %4845 = vmatprep.mubr.bf16.mxu0 %v4368
        %4846 = vmatmul.mubr.bf16.gmra.mrb[0].mxu0 %v4367
        %v4847 = vpop.f32.mrb[0].mxu0
        %v4848 = vadd.f32 %v352, %v4847
        %v4849 = vpop.f32.mrb[0].mxu0
        %v4850 = vpop.f32.mrb[0].mxu0
        %v4851 = vadd.f32 %v353, %v4850
        %v4852 = vpop.f32.mrb[0].mxu0
        %4853 = vmatprep.mubr.bf16.mxu0 %v4373
        %4854 = vmatmul.mubr.bf16.gmra.mrb[0].mxu0 %v4372
        %v4855 = vpop.f32.mrb[0].mxu0
        %v4856 = vadd.f32 %v354, %v4855
        %v4857 = vpop.f32.mrb[0].mxu0
        %v4858 = vpop.f32.mrb[0].mxu0
        %v4859 = vadd.f32 %v355, %v4858
        %v4860 = vpop.f32.mrb[0].mxu0
        %4861 = vmatprep.mubr.bf16.mxu0 %v4378
        %4862 = vmatmul.mubr.bf16.gmra.mrb[0].mxu0 %v4377
        %v4863 = vpop.f32.mrb[0].mxu0
        %v4864 = vadd.f32 %v356, %v4863
        %v4865 = vpop.f32.mrb[0].mxu0
        %v4866 = vpop.f32.mrb[0].mxu0
        %v4867 = vadd.f32 %v357, %v4866
        %v4868 = vpop.f32.mrb[0].mxu0
        %4869 = vmatprep.mubr.bf16.mxu0 %v4383
        %4870 = vmatmul.mubr.bf16.gmra.mrb[0].mxu0 %v4382
        %v4871 = vpop.f32.mrb[0].mxu0
        %v4872 = vadd.f32 %v358, %v4871
        %v4873 = vpop.f32.mrb[0].mxu0
        %v4874 = vpop.f32.mrb[0].mxu0
        %v4875 = vadd.f32 %v359, %v4874
        %v4876 = vpop.f32.mrb[0].mxu0
        %4877 = vmatprep.mubr.bf16.mxu0 %v4388
        %4878 = vmatmul.mubr.bf16.gmra.mrb[0].mxu0 %v4387
        %v4879 = vpop.f32.mrb[0].mxu0
        %v4880 = vadd.f32 %v360, %v4879
        %v4881 = vpop.f32.mrb[0].mxu0
        %v4882 = vpop.f32.mrb[0].mxu0
        %v4883 = vadd.f32 %v361, %v4882
        %v4884 = vpop.f32.mrb[0].mxu0
        %4885 = vmatprep.mubr.bf16.mxu0 %v4393
        %4886 = vmatmul.mubr.bf16.gmra.mrb[0].mxu0 %v4392
        %v4887 = vpop.f32.mrb[0].mxu0
        %v4888 = vadd.f32 %v362, %v4887
        %v4889 = vpop.f32.mrb[0].mxu0
        %v4890 = vpop.f32.mrb[0].mxu0
        %v4891 = vadd.f32 %v363, %v4890
        %v4892 = vpop.f32.mrb[0].mxu0
        %4893 = vdwg.mxu0
        %4894 = vmatprep.subr.bf16.mxu0 0
        %4895 = vmatpush1.bf16.msra.mxu0 %v4629
        %4896 = vmatprep.subr.bf16.mxu0 0
        %4897 = vmatpush1.bf16.msra.mxu0 %v4630
        %4898 = vmatprep.subr.bf16.mxu0 0
        %4899 = vmatpush1.bf16.msra.mxu0 %v4631
        %4900 = vmatprep.subr.bf16.mxu0 0
        %4901 = vmatpush1.bf16.msra.mxu0 %v4632
        %4902 = vmatprep.subr.bf16.mxu0 0
        %4903 = vmatpush1.bf16.msra.mxu0 %v4633
        %4904 = vmatprep.subr.bf16.mxu0 0
        %4905 = vmatpush1.bf16.msra.mxu0 %v4634
        %4906 = vmatprep.subr.bf16.mxu0 0
        %4907 = vmatpush1.bf16.msra.mxu0 %v4635
        %4908 = vmatprep.subr.bf16.mxu0 0
        %4909 = vmatpush1.bf16.msra.mxu0 %v4636
        %4910 = vmatprep.subr.bf16.mxu0 0
        %4911 = vmatpush1.bf16.msra.mxu0 %v4637
        %4912 = vmatprep.subr.bf16.mxu0 0
        %4913 = vmatpush1.bf16.msra.mxu0 %v4638
        %4914 = vmatprep.subr.bf16.mxu0 0
        %4915 = vmatpush1.bf16.msra.mxu0 %v4639
        %4916 = vmatprep.subr.bf16.mxu0 0
        %4917 = vmatpush1.bf16.msra.mxu0 %v4640
        %4918 = vmatprep.subr.bf16.mxu0 0
        %4919 = vmatpush1.bf16.msra.mxu0 %v4641
        %4920 = vmatprep.subr.bf16.mxu0 0
        %4921 = vmatpush1.bf16.msra.mxu0 %v4642
        %4922 = vmatprep.subr.bf16.mxu0 0
        %4923 = vmatpush1.bf16.msra.mxu0 %v4643
        %4924 = vmatprep.subr.bf16.mxu0 0
        %4925 = vmatpush1.bf16.msra.mxu0 %v4644
        %4926 = vmatprep.mubr.bf16.mxu0 %v4320
        %4927 = vmatmul.mubr.bf16.gmra.mrb[0].mxu0 %v4319
        %v4928 = vpop.f32.mrb[0].mxu0
        %v4929 = vadd.f32 %v4768, %v4928
        %v4930 = vpop.f32.mrb[0].mxu0
        %v4931 = vpop.f32.mrb[0].mxu0
        %v4932 = vadd.f32 %v4771, %v4931
        %v4933 = vpop.f32.mrb[0].mxu0
        %4934 = vmatprep.mubr.bf16.mxu0 %v4325
        %4935 = vmatmul.mubr.bf16.gmra.mrb[0].mxu0 %v4324
        %v4936 = vpop.f32.mrb[0].mxu0
        %v4937 = vadd.f32 %v4776, %v4936
        %v4938 = vpop.f32.mrb[0].mxu0
        %v4939 = vpop.f32.mrb[0].mxu0
        %v4940 = vadd.f32 %v4779, %v4939
        %v4941 = vpop.f32.mrb[0].mxu0
        %4942 = vmatprep.mubr.bf16.mxu0 %v4330
        %4943 = vmatmul.mubr.bf16.gmra.mrb[0].mxu0 %v4329
        %v4944 = vpop.f32.mrb[0].mxu0
        %v4945 = vadd.f32 %v4784, %v4944
        %v4946 = vpop.f32.mrb[0].mxu0
        %v4947 = vpop.f32.mrb[0].mxu0
        %v4948 = vadd.f32 %v4787, %v4947
        %v4949 = vpop.f32.mrb[0].mxu0
        %4950 = vmatprep.mubr.bf16.mxu0 %v4335
        %4951 = vmatmul.mubr.bf16.gmra.mrb[0].mxu0 %v4334
        %v4952 = vpop.f32.mrb[0].mxu0
        %v4953 = vadd.f32 %v4792, %v4952
        %v4954 = vpop.f32.mrb[0].mxu0
        %v4955 = vpop.f32.mrb[0].mxu0
        %v4956 = vadd.f32 %v4795, %v4955
        %v4957 = vpop.f32.mrb[0].mxu0
        %4958 = vmatprep.mubr.bf16.mxu0 %v4340
        %4959 = vmatmul.mubr.bf16.gmra.mrb[0].mxu0 %v4339
        %v4960 = vpop.f32.mrb[0].mxu0
        %v4961 = vadd.f32 %v4800, %v4960
        %v4962 = vpop.f32.mrb[0].mxu0
        %v4963 = vpop.f32.mrb[0].mxu0
        %v4964 = vadd.f32 %v4803, %v4963
        %v4965 = vpop.f32.mrb[0].mxu0
        %4966 = vmatprep.mubr.bf16.mxu0 %v4345
        %4967 = vmatmul.mubr.bf16.gmra.mrb[0].mxu0 %v4344
        %v4968 = vpop.f32.mrb[0].mxu0
        %v4969 = vadd.f32 %v4808, %v4968
        %v4970 = vpop.f32.mrb[0].mxu0
        %v4971 = vpop.f32.mrb[0].mxu0
        %v4972 = vadd.f32 %v4811, %v4971
        %v4973 = vpop.f32.mrb[0].mxu0
        %4974 = vmatprep.mubr.bf16.mxu0 %v4350
        %4975 = vmatmul.mubr.bf16.gmra.mrb[0].mxu0 %v4349
        %v4976 = vpop.f32.mrb[0].mxu0
        %v4977 = vadd.f32 %v4816, %v4976
        %v4978 = vpop.f32.mrb[0].mxu0
        %v4979 = vpop.f32.mrb[0].mxu0
        %v4980 = vadd.f32 %v4819, %v4979
        %v4981 = vpop.f32.mrb[0].mxu0
        %4982 = vmatprep.mubr.bf16.mxu0 %v4355
        %4983 = vmatmul.mubr.bf16.gmra.mrb[0].mxu0 %v4354
        %v4984 = vpop.f32.mrb[0].mxu0
        %v4985 = vadd.f32 %v4824, %v4984
        %v4986 = vpop.f32.mrb[0].mxu0
        %v4987 = vpop.f32.mrb[0].mxu0
        %v4988 = vadd.f32 %v4827, %v4987
        %v4989 = vpop.f32.mrb[0].mxu0
        %4990 = vmatprep.mubr.bf16.mxu0 %v4360
        %4991 = vmatmul.mubr.bf16.gmra.mrb[0].mxu0 %v4359
        %v4992 = vpop.f32.mrb[0].mxu0
        %v4993 = vadd.f32 %v4832, %v4992
        %v4994 = vpop.f32.mrb[0].mxu0
        %v4995 = vpop.f32.mrb[0].mxu0
        %v4996 = vadd.f32 %v4835, %v4995
        %v4997 = vpop.f32.mrb[0].mxu0
        %4998 = vmatprep.mubr.bf16.mxu0 %v4365
        %4999 = vmatmul.mubr.bf16.gmra.mrb[0].mxu0 %v4364
        %v5000 = vpop.f32.mrb[0].mxu0
        %v5001 = vadd.f32 %v4840, %v5000
        %v5002 = vpop.f32.mrb[0].mxu0
        %v5003 = vpop.f32.mrb[0].mxu0
        %v5004 = vadd.f32 %v4843, %v5003
        %v5005 = vpop.f32.mrb[0].mxu0
        %5006 = vmatprep.mubr.bf16.mxu0 %v4370
        %5007 = vmatmul.mubr.bf16.gmra.mrb[0].mxu0 %v4369
        %v5008 = vpop.f32.mrb[0].mxu0
        %v5009 = vadd.f32 %v4848, %v5008
        %v5010 = vpop.f32.mrb[0].mxu0
        %v5011 = vpop.f32.mrb[0].mxu0
        %v5012 = vadd.f32 %v4851, %v5011
        %v5013 = vpop.f32.mrb[0].mxu0
        %5014 = vmatprep.mubr.bf16.mxu0 %v4375
        %5015 = vmatmul.mubr.bf16.gmra.mrb[0].mxu0 %v4374
        %v5016 = vpop.f32.mrb[0].mxu0
        %v5017 = vadd.f32 %v4856, %v5016
        %v5018 = vpop.f32.mrb[0].mxu0
        %v5019 = vpop.f32.mrb[0].mxu0
        %v5020 = vadd.f32 %v4859, %v5019
        %v5021 = vpop.f32.mrb[0].mxu0
        %5022 = vmatprep.mubr.bf16.mxu0 %v4380
        %5023 = vmatmul.mubr.bf16.gmra.mrb[0].mxu0 %v4379
        %v5024 = vpop.f32.mrb[0].mxu0
        %v5025 = vadd.f32 %v4864, %v5024
        %v5026 = vpop.f32.mrb[0].mxu0
        %v5027 = vpop.f32.mrb[0].mxu0
        %v5028 = vadd.f32 %v4867, %v5027
        %v5029 = vpop.f32.mrb[0].mxu0
        %5030 = vmatprep.mubr.bf16.mxu0 %v4385
        %5031 = vmatmul.mubr.bf16.gmra.mrb[0].mxu0 %v4384
        %v5032 = vpop.f32.mrb[0].mxu0
        %v5033 = vadd.f32 %v4872, %v5032
        %v5034 = vpop.f32.mrb[0].mxu0
        %v5035 = vpop.f32.mrb[0].mxu0
        %v5036 = vadd.f32 %v4875, %v5035
        %v5037 = vpop.f32.mrb[0].mxu0
        %5038 = vmatprep.mubr.bf16.mxu0 %v4390
        %5039 = vmatmul.mubr.bf16.gmra.mrb[0].mxu0 %v4389
        %v5040 = vpop.f32.mrb[0].mxu0
        %v5041 = vadd.f32 %v4880, %v5040
        %v5042 = vpop.f32.mrb[0].mxu0
        %v5043 = vpop.f32.mrb[0].mxu0
        %v5044 = vadd.f32 %v4883, %v5043
        %v5045 = vpop.f32.mrb[0].mxu0
        %5046 = vmatprep.mubr.bf16.mxu0 %v4395
        %5047 = vmatmul.mubr.bf16.gmra.mrb[0].mxu0 %v4394
        %v5048 = vpop.f32.mrb[0].mxu0
        %v5049 = vadd.f32 %v4888, %v5048
        %v5050 = vpop.f32.mrb[0].mxu0
        %v5051 = vpop.f32.mrb[0].mxu0
        %v5052 = vadd.f32 %v4891, %v5051
        %v5053 = vpop.f32.mrb[0].mxu0
        %5054 = vdwg.mxu0
        %5055 = vmatprep.subr.bf16.mxu0 0
        %5056 = vmatpush1.bf16.msra.mxu0 %v4645
        %5057 = vmatprep.subr.bf16.mxu0 0
        %5058 = vmatpush1.bf16.msra.mxu0 %v4646
        %5059 = vmatprep.subr.bf16.mxu0 0
        %5060 = vmatpush1.bf16.msra.mxu0 %v4647
        %5061 = vmatprep.subr.bf16.mxu0 0
        %5062 = vmatpush1.bf16.msra.mxu0 %v4648
        %5063 = vmatprep.subr.bf16.mxu0 0
        %5064 = vmatpush1.bf16.msra.mxu0 0
        %5065 = vmatprep.subr.bf16.mxu0 0
        %5066 = vmatpush1.bf16.msra.mxu0 0
        %5067 = vmatprep.subr.bf16.mxu0 0
        %5068 = vmatpush1.bf16.msra.mxu0 0
        %5069 = vmatprep.subr.bf16.mxu0 0
        %5070 = vmatpush1.bf16.msra.mxu0 0
        %5071 = vmatprep.subr.bf16.mxu0 0
        %5072 = vmatpush1.bf16.msra.mxu0 0
        %5073 = vmatprep.subr.bf16.mxu0 0
        %5074 = vmatpush1.bf16.msra.mxu0 0
        %5075 = vmatprep.subr.bf16.mxu0 0
        %5076 = vmatpush1.bf16.msra.mxu0 0
        %5077 = vmatprep.subr.bf16.mxu0 0
        %5078 = vmatpush1.bf16.msra.mxu0 0
        %5079 = vmatprep.subr.bf16.mxu0 0
        %5080 = vmatpush1.bf16.msra.mxu0 0
        %5081 = vmatprep.subr.bf16.mxu0 0
        %5082 = vmatpush1.bf16.msra.mxu0 0
        %5083 = vmatprep.subr.bf16.mxu0 0
        %5084 = vmatpush1.bf16.msra.mxu0 0
        %5085 = vmatprep.subr.bf16.mxu0 0
        %5086 = vmatpush1.bf16.msra.mxu0 0
        %5087 = vmatprep.mubr.bf16.mxu0 0
        %5088 = vmatmul.mubr.bf16.gmra.mrb[0].mxu0 %v4686
        %v5089 = vpop.f32.mrb[0].mxu0
        %v5090 = vadd.f32 %v4929, %v5089
        %v5091 = vpop.f32.mrb[0].mxu0
        %v5092 = vpop.f32.mrb[0].mxu0
        %v5093 = vadd.f32 %v4932, %v5092
        %v5094 = vpop.f32.mrb[0].mxu0
        %5095 = vmatprep.mubr.bf16.mxu0 0
        %5096 = vmatmul.mubr.bf16.gmra.mrb[0].mxu0 %v4689
        %v5097 = vpop.f32.mrb[0].mxu0
        %v5098 = vadd.f32 %v4937, %v5097
        %v5099 = vpop.f32.mrb[0].mxu0
        %v5100 = vpop.f32.mrb[0].mxu0
        %v5101 = vadd.f32 %v4940, %v5100
        %v5102 = vpop.f32.mrb[0].mxu0
        %5103 = vmatprep.mubr.bf16.mxu0 0
        %5104 = vmatmul.mubr.bf16.gmra.mrb[0].mxu0 %v4692
        %v5105 = vpop.f32.mrb[0].mxu0
        %v5106 = vadd.f32 %v4945, %v5105
        %v5107 = vpop.f32.mrb[0].mxu0
        %v5108 = vpop.f32.mrb[0].mxu0
        %v5109 = vadd.f32 %v4948, %v5108
        %v5110 = vpop.f32.mrb[0].mxu0
        %5111 = vmatprep.mubr.bf16.mxu0 0
        %5112 = vmatmul.mubr.bf16.gmra.mrb[0].mxu0 %v4695
        %v5113 = vpop.f32.mrb[0].mxu0
        %v5114 = vadd.f32 %v4953, %v5113
        %v5115 = vpop.f32.mrb[0].mxu0
        %v5116 = vpop.f32.mrb[0].mxu0
        %v5117 = vadd.f32 %v4956, %v5116
        %v5118 = vpop.f32.mrb[0].mxu0
        %5119 = vmatprep.mubr.bf16.mxu0 0
        %5120 = vmatmul.mubr.bf16.gmra.mrb[0].mxu0 %v4698
        %v5121 = vpop.f32.mrb[0].mxu0
        %v5122 = vadd.f32 %v4961, %v5121
        %v5123 = vpop.f32.mrb[0].mxu0
        %v5124 = vpop.f32.mrb[0].mxu0
        %v5125 = vadd.f32 %v4964, %v5124
        %v5126 = vpop.f32.mrb[0].mxu0
        %5127 = vmatprep.mubr.bf16.mxu0 0
        %5128 = vmatmul.mubr.bf16.gmra.mrb[0].mxu0 %v4701
        %v5129 = vpop.f32.mrb[0].mxu0
        %v5130 = vadd.f32 %v4969, %v5129
        %v5131 = vpop.f32.mrb[0].mxu0
        %v5132 = vpop.f32.mrb[0].mxu0
        %v5133 = vadd.f32 %v4972, %v5132
        %v5134 = vpop.f32.mrb[0].mxu0
        %5135 = vmatprep.mubr.bf16.mxu0 0
        %5136 = vmatmul.mubr.bf16.gmra.mrb[0].mxu0 %v4704
        %v5137 = vpop.f32.mrb[0].mxu0
        %v5138 = vadd.f32 %v4977, %v5137
        %v5139 = vpop.f32.mrb[0].mxu0
        %v5140 = vpop.f32.mrb[0].mxu0
        %v5141 = vadd.f32 %v4980, %v5140
        %v5142 = vpop.f32.mrb[0].mxu0
        %5143 = vmatprep.mubr.bf16.mxu0 0
        %5144 = vmatmul.mubr.bf16.gmra.mrb[0].mxu0 %v4707
        %v5145 = vpop.f32.mrb[0].mxu0
        %v5146 = vadd.f32 %v4985, %v5145
        %v5147 = vpop.f32.mrb[0].mxu0
        %v5148 = vpop.f32.mrb[0].mxu0
        %v5149 = vadd.f32 %v4988, %v5148
        %v5150 = vpop.f32.mrb[0].mxu0
        %5151 = vmatprep.mubr.bf16.mxu0 0
        %5152 = vmatmul.mubr.bf16.gmra.mrb[0].mxu0 %v4710
        %v5153 = vpop.f32.mrb[0].mxu0
        %v5154 = vadd.f32 %v4993, %v5153
        %v5155 = vpop.f32.mrb[0].mxu0
        %v5156 = vpop.f32.mrb[0].mxu0
        %v5157 = vadd.f32 %v4996, %v5156
        %v5158 = vpop.f32.mrb[0].mxu0
        %5159 = vmatprep.mubr.bf16.mxu0 0
        %5160 = vmatmul.mubr.bf16.gmra.mrb[0].mxu0 %v4713
        %v5161 = vpop.f32.mrb[0].mxu0
        %v5162 = vadd.f32 %v5001, %v5161
        %v5163 = vpop.f32.mrb[0].mxu0
        %v5164 = vpop.f32.mrb[0].mxu0
        %v5165 = vadd.f32 %v5004, %v5164
        %v5166 = vpop.f32.mrb[0].mxu0
        %5167 = vmatprep.mubr.bf16.mxu0 0
        %5168 = vmatmul.mubr.bf16.gmra.mrb[0].mxu0 %v4716
        %v5169 = vpop.f32.mrb[0].mxu0
        %v5170 = vadd.f32 %v5009, %v5169
        %v5171 = vpop.f32.mrb[0].mxu0
        %v5172 = vpop.f32.mrb[0].mxu0
        %v5173 = vadd.f32 %v5012, %v5172
        %v5174 = vpop.f32.mrb[0].mxu0
        %5175 = vmatprep.mubr.bf16.mxu0 0
        %5176 = vmatmul.mubr.bf16.gmra.mrb[0].mxu0 %v4719
        %v5177 = vpop.f32.mrb[0].mxu0
        %v5178 = vadd.f32 %v5017, %v5177
        %v5179 = vpop.f32.mrb[0].mxu0
        %v5180 = vpop.f32.mrb[0].mxu0
        %v5181 = vadd.f32 %v5020, %v5180
        %v5182 = vpop.f32.mrb[0].mxu0
        %5183 = vmatprep.mubr.bf16.mxu0 0
        %5184 = vmatmul.mubr.bf16.gmra.mrb[0].mxu0 %v4722
        %v5185 = vpop.f32.mrb[0].mxu0
        %v5186 = vadd.f32 %v5025, %v5185
        %v5187 = vpop.f32.mrb[0].mxu0
        %v5188 = vpop.f32.mrb[0].mxu0
        %v5189 = vadd.f32 %v5028, %v5188
        %v5190 = vpop.f32.mrb[0].mxu0
        %5191 = vmatprep.mubr.bf16.mxu0 0
        %5192 = vmatmul.mubr.bf16.gmra.mrb[0].mxu0 %v4725
        %v5193 = vpop.f32.mrb[0].mxu0
        %v5194 = vadd.f32 %v5033, %v5193
        %v5195 = vpop.f32.mrb[0].mxu0
        %v5196 = vpop.f32.mrb[0].mxu0
        %v5197 = vadd.f32 %v5036, %v5196
        %v5198 = vpop.f32.mrb[0].mxu0
        %5199 = vmatprep.mubr.bf16.mxu0 0
        %5200 = vmatmul.mubr.bf16.gmra.mrb[0].mxu0 %v4728
        %v5201 = vpop.f32.mrb[0].mxu0
        %v5202 = vadd.f32 %v5041, %v5201
        %v5203 = vpop.f32.mrb[0].mxu0
        %v5204 = vpop.f32.mrb[0].mxu0
        %v5205 = vadd.f32 %v5044, %v5204
        %v5206 = vpop.f32.mrb[0].mxu0
        %5207 = vmatprep.mubr.bf16.mxu0 0
        %5208 = vmatmul.mubr.bf16.gmra.mrb[0].mxu0 %v4731
        %v5209 = vpop.f32.mrb[0].mxu0
        %v5210 = vadd.f32 %v5049, %v5209
        %v5211 = vpop.f32.mrb[0].mxu0
        %v5212 = vpop.f32.mrb[0].mxu0
        %v5213 = vadd.f32 %v5052, %v5212
        %v5214 = vpop.f32.mrb[0].mxu0
        %5215 = vdwg.mxu0
        %5216 = vst.msk [vmem:[%s325] sm:$0xff] %vm374, %v5090
        %5217 = vst.msk [vmem:[%s325 + $0x8] sm:$0xff] %vm374, %v5093
        %5218 = vst.msk [vmem:[%s325 + $0x10] sm:$0xff] %vm374, %v5098
        %5219 = vst.msk [vmem:[%s325 + $0x18] sm:$0xff] %vm374, %v5101
        %5220 = vst.msk [vmem:[%s325 + $0x20] sm:$0xff] %vm374, %v5106
        %5221 = vst.msk [vmem:[%s325 + $0x28] sm:$0xff] %vm374, %v5109
        %5222 = vst.msk [vmem:[%s325 + $0x30] sm:$0xff] %vm374, %v5114
        %5223 = vst.msk [vmem:[%s325 + $0x38] sm:$0xff] %vm374, %v5117
        %5224 = vst.msk [vmem:[%s325 + $0x40] sm:$0xff] %vm374, %v5122
        %5225 = vst.msk [vmem:[%s325 + $0x48] sm:$0xff] %vm374, %v5125
        %5226 = vst.msk [vmem:[%s325 + $0x50] sm:$0xff] %vm374, %v5130
        %5227 = vst.msk [vmem:[%s325 + $0x58] sm:$0xff] %vm374, %v5133
        %5228 = vst.msk [vmem:[%s325 + $0x60] sm:$0xff] %vm374, %v5138
        %5229 = vst.msk [vmem:[%s325 + $0x68] sm:$0xff] %vm374, %v5141
        %5230 = vst.msk [vmem:[%s325 + $0x70] sm:$0xff] %vm374, %v5146
        %5231 = vst.msk [vmem:[%s325 + $0x78] sm:$0xff] %vm374, %v5149
        %5232 = vst.msk [vmem:[%s325 + $0x80] sm:$0xff] %vm374, %v5154
        %5233 = vst.msk [vmem:[%s325 + $0x88] sm:$0xff] %vm374, %v5157
        %5234 = vst.msk [vmem:[%s325 + $0x90] sm:$0xff] %vm374, %v5162
        %5235 = vst.msk [vmem:[%s325 + $0x98] sm:$0xff] %vm374, %v5165
        %5236 = vst.msk [vmem:[%s325 + $0xa0] sm:$0xff] %vm374, %v5170
        %5237 = vst.msk [vmem:[%s325 + $0xa8] sm:$0xff] %vm374, %v5173
        %5238 = vst.msk [vmem:[%s325 + $0xb0] sm:$0xff] %vm374, %v5178
        %5239 = vst.msk [vmem:[%s325 + $0xb8] sm:$0xff] %vm374, %v5181
        %5240 = vst.msk [vmem:[%s325 + $0xc0] sm:$0xff] %vm374, %v5186
        %5241 = vst.msk [vmem:[%s325 + $0xc8] sm:$0xff] %vm374, %v5189
        %5242 = vst.msk [vmem:[%s325 + $0xd0] sm:$0xff] %vm374, %v5194
        %5243 = vst.msk [vmem:[%s325 + $0xd8] sm:$0xff] %vm374, %v5197
        %5244 = vst.msk [vmem:[%s325 + $0xe0] sm:$0xff] %vm374, %v5202
        %5245 = vst.msk [vmem:[%s325 + $0xe8] sm:$0xff] %vm374, %v5205
        %5246 = vst.msk [vmem:[%s325 + $0xf0] sm:$0xff] %vm374, %v5210
        %5247 = vst.msk [vmem:[%s325 + $0xf8] sm:$0xff] %vm374, %v5213
        %s5248 = sand.u32 %s225, 1
        %s5249 = scalar_lea.sflag [#allocation5], %s5248
        %s5250 = sand.u32 %s225, 1
        %s5251 = smul.addr %s5250, 256
        %s5252 = scalar_lea.vmem [#allocation4], %s5251
        // Predicated region
        $region57: #{resblock_forward.1} parent=55 // pred_check
          %p5253 = pneg %p235
        $region58: #{resblock_forward.1} parent=55 // pred_check_branch
          %5255 = sbr.rel (%p5253) target = $region60
        $region59: #{resblock_forward.1} parent=55 // pred_region
          %s5257 = ssub.s32 4096, 4096
          %5258 = vsyncadd %s5249, %s5257
          %s5259 = smul.addr %s23, 32
          %s5260 = smul.addr %s5259, 128
          %s5261 = scalar_lea.hbm %s9, %s5260
          %s5262 = sshll.u32 %s5252, 4
          %s5263 = int_to_ptr.vmem [resolvable:$true] %s5262
          %5268 = dma.vmem_to_hbm [thread:$0]  %s5263, 4096, %s5261, %s5249, 128, 128, 8
        $region60: #{resblock_forward.1} parent=55 // pred_fallthru
          _
      $region56: #{resblock_forward.1} parent=5 // pred_fallthru
        _
      %p5269 = scmp.le.s32.totalorder 2, %s18
      // Predicated region
      $region61: #{resblock_forward.1} parent=5 // pred_check
        %p5270 = pneg %p5269
      $region62: #{resblock_forward.1} parent=5 // pred_check_branch
        %5272 = sbr.rel (%p5270) target = $region64
      $region63: #{resblock_forward.1} parent=5 // pred_region
        %s5273 = ssub.s32 %s18, 2
        // Predicated region
        $region65: #{resblock_forward.1} parent=63 // pred_check
          %p5274 = pneg %p241
        $region66: #{resblock_forward.1} parent=63 // pred_check_branch
          %5276 = sbr.rel (%p5274) target = $region68
        $region67: #{resblock_forward.1} parent=63 // pred_region
          %s5277 = sand.u32 %s226, 1
          %s5278 = scalar_lea.sflag [#allocation5], %s5277
          %s5279 = sand.u32 %s226, 1
          %s5280 = smul.addr %s5279, 256
          %s5281 = scalar_lea.vmem [#allocation4], %s5280
          %5282 = dma.done %s5278, 4096
        $region68: #{resblock_forward.1} parent=63 // pred_fallthru
          _
      $region64: #{resblock_forward.1} parent=5 // pred_fallthru
        _
    $region6: #{resblock_forward.1} parent=1 // loop_footer
      %s22 = sadd.s32 1, %s18
    $region7: #{resblock_forward.1} parent=1 // loop_footer_branch
      %17 = sbr.rel target = $region3
    $region8: #{resblock_forward.1} parent=1 // loop_exit
      _
    %5283 = vsyncpa [#allocation5], 1
    %s5284 = scalar_lea.sflag [#allocation5], 1
    %5285 = vsyncpa %s5284, 1

</llo_original>
